<compile_context>
chip_gen: v5e
topology: v5e:2x2
jax: 0.10.0
libtpu: 0.0.40
codegen_flags: <defaults>
</compile_context>

<pallas_src>
import jax
import jax.numpy as jnp
from jax import lax
from jax.experimental import pallas as pl
from jax.experimental.pallas import tpu as pltpu


# ----------------------------- Fused Pallas kernel ---------------------------

def make_lstm_net_kernel(num_layers, T, Bt, Hp):
    """Kernel: multi-layer LSTM -> last hidden -> Linear(H,1) -> Sigmoid.

    Ref layout (inputs, then output, then scratch), all weights pre-permuted to
    gate order [i | f | o | g] and zero-padded to Hp lanes per gate:
      x_ref        (T*Bt, Ep)     bf16   time-major batch-tile input, flattened (T, Bt)
      w_ih_l       (D_in_p, 4Hp)  bf16   per layer
      w_hh_l       (Hp, 4Hp)      bf16   per layer
      b_l          (1, 4Hp)       f32    per layer, b_ih + b_hh combined
      w_cls        (1, Hp)        f32    classifier row
      b_cls        (1, 1)         f32
      out_ref      (Bt, 1)        f32
      y_scr        (T*Bt, Hp)     bf16   inter-layer activations (skipped by last layer)
      xw_scr       (T*Bt, 4Hp)    f32    hoisted input projection (+bias) for current layer
    """

    def kernel(*refs):
        x_ref = refs[0]
        w_ih_refs = refs[1:1 + num_layers]
        w_hh_refs = refs[1 + num_layers:1 + 2 * num_layers]
        b_refs = refs[1 + 2 * num_layers:1 + 3 * num_layers]
        w_cls_ref = refs[1 + 3 * num_layers]
        b_cls_ref = refs[2 + 3 * num_layers]
        out_ref = refs[3 + 3 * num_layers]
        y_scr = refs[4 + 3 * num_layers]
        xw_scr = refs[5 + 3 * num_layers]

        h_last = jnp.zeros((Bt, Hp), jnp.bfloat16)

        for layer in range(num_layers):
            is_last = layer == num_layers - 1

            # ---- Hoisted input projection: one big matmul per layer. ----
            if layer == 0:
                seq = x_ref[...]                          # (T*Bt, Ep) bf16
            else:
                seq = y_scr[...]                          # (T*Bt, Hp) bf16, no cast
            xw_scr[...] = (
                jnp.dot(seq, w_ih_refs[layer][...],
                        preferred_element_type=jnp.float32)
                + b_refs[layer][...])                     # (T*Bt, 4Hp) f32

            # ---- Recurrence over time (state in registers, modest unroll). --
            def step(t, carry):
                h_bf, c = carry                           # (Bt,Hp) bf16 / f32
                row = pl.multiple_of(t * Bt, Bt)
                gates = xw_scr[pl.ds(row, Bt), :] + jnp.dot(
                    h_bf, w_hh_refs[layer][...],
                    preferred_element_type=jnp.float32)   # (Bt, 4Hp) f32
                # Gate order [i | f | o | g]: one sigmoid slab, one tanh slab.
                sig = jax.nn.sigmoid(gates[:, :3 * Hp])
                i = sig[:, 0 * Hp:1 * Hp]
                f = sig[:, 1 * Hp:2 * Hp]
                o = sig[:, 2 * Hp:3 * Hp]
                g = jnp.tanh(gates[:, 3 * Hp:])
                c = f * c + i * g
                h_bf = (o * jnp.tanh(c)).astype(jnp.bfloat16)
                if not is_last:
                    # Intermediate layers feed the next layer (bf16 directly);
                    # the last layer only needs its final hidden state.
                    y_scr[pl.ds(row, Bt), :] = h_bf
                return (h_bf, c)

            init = (jnp.zeros((Bt, Hp), jnp.bfloat16),
                    jnp.zeros((Bt, Hp), jnp.float32))
            h_last, _ = lax.fori_loop(0, T, step, init, unroll=min(T, 8))

        # ---- Fused classifier: Linear(Hp->1) + Sigmoid as a lane reduction.
        # (Dropout is identity at inference time; padded lanes are zero.)
        z = (jnp.sum(h_last.astype(jnp.float32) * w_cls_ref[...],
                     axis=-1, keepdims=True)
             + b_cls_ref[...])                            # (Bt, 1)
        out_ref[...] = jax.nn.sigmoid(z).astype(out_ref.dtype)

    return kernel


# ---------------------- Weight prep (permute + pad + cast) -------------------

def _prep_gate_weight(w, H, Hp, d_in_p):
    """(d_in, 4H) f32, PyTorch gate order [i|f|g|o] -> (d_in_p, 4Hp) bf16, [i|f|o|g]."""
    d_in = w.shape[0]
    i, f, g, o = (w[:, k * H:(k + 1) * H] for k in range(4))

    def pad(blk):
        return jnp.pad(blk, ((0, d_in_p - d_in), (0, Hp - H)))

    return jnp.concatenate([pad(i), pad(f), pad(o), pad(g)],
                           axis=1).astype(jnp.bfloat16)


def _prep_gate_bias(b, H, Hp):
    """(1, 4H) f32, [i|f|g|o] -> (1, 4Hp) f32, [i|f|o|g], zero-padded."""
    i, f, g, o = (b[:, k * H:(k + 1) * H] for k in range(4))

    def pad(blk):
        return jnp.pad(blk, ((0, 0), (0, Hp - H)))

    return jnp.concatenate([pad(i), pad(f), pad(o), pad(g)], axis=1)


def _vmem_limit_bytes(required_bytes):
    """Generation-aware VMEM limit derived from actual buffer sizes."""
    cap = 64 * 1024 * 1024                                # conservative fallback
    try:
        cap = int(pltpu.get_tpu_info().vmem_capacity_bytes)
    except Exception:
        pass
    want = max(32 * 1024 * 1024, 2 * int(required_bytes) + (4 << 20))
    return int(max(32 * 1024 * 1024, min(want, int(cap * 0.75))))


# ------------------------------ Wrapper --------------------------------------

def lstm_net_forward(token_ids, params, hidden_dim, num_layers, batch_tile=128):
    """Matches LSTM_Net.forward in eval mode (dropout = identity)."""
    B, T = token_ids.shape
    emb = params["embedding"]
    E = emb.shape[1]
    H = hidden_dim
    Hp = ((H + 127) // 128) * 128                 # lane-align hidden dim
    Ep = ((E + 7) // 8) * 8                       # sublane-align embedding dim

    Bt = ((min(batch_tile, ((B + 7) // 8) * 8) + 7) // 8) * 8
    nb = pl.cdiv(B, Bt)
    Bp = nb * Bt

    # TODO(synk): nn.Embedding gather is data-dependent; done in plain JAX
    # (time-major directly, no activation transpose).
    emb_tm = jnp.take(emb, token_ids.T, axis=0)                   # (T, B, E)
    x = jnp.pad(emb_tm, ((0, 0), (0, Bp - B), (0, Ep - E)))       # (T, Bp, Ep)
    x = (x.reshape(T, nb, Bt, Ep).transpose(1, 0, 2, 3)
           .reshape(nb, T * Bt, Ep).astype(jnp.bfloat16))

    # Weight prep: gate permutation [i,f,g,o]->[i,f,o,g], lane padding, bf16.
    w_ihs, w_hhs, bs = [], [], []
    d_in_p = Ep
    for l in range(num_layers):
        w_ihs.append(_prep_gate_weight(params[f"w_ih_{l}"], H, Hp, d_in_p))
        w_hhs.append(_prep_gate_weight(params[f"w_hh_{l}"], H, Hp, Hp))
        bs.append(_prep_gate_bias(params[f"b_{l}"], H, Hp))
        d_in_p = Hp
    w_cls = jnp.pad(params["w_cls"], ((0, 0), (0, Hp - H)))
    b_cls = params["b_cls"]

    kernel = make_lstm_net_kernel(num_layers, T, Bt, Hp)

    in_specs = [pl.BlockSpec((None, T * Bt, Ep), lambda b: (b, 0, 0))]
    weight_args = w_ihs + w_hhs + bs + [w_cls, b_cls]
    for w in weight_args:
        in_specs.append(pl.BlockSpec(w.shape, lambda b: (0, 0)))
    out_spec = pl.BlockSpec((None, Bt, 1), lambda b: (b, 0, 0))

    scratch_shapes = [
        pltpu.VMEM((T * Bt, Hp), jnp.bfloat16),      # inter-layer activations
        pltpu.VMEM((T * Bt, 4 * Hp), jnp.float32),   # hoisted input projection
    ]

    # Derive VMEM budget from the real per-grid-step footprint.
    block_bytes = T * Bt * Ep * 2 + Bt * 1 * 4
    for w in weight_args:
        block_bytes += w.size * w.dtype.itemsize
    scratch_bytes = T * Bt * Hp * 2 + T * Bt * 4 * Hp * 4
    vmem_limit = _vmem_limit_bytes(block_bytes + scratch_bytes)

    out = pl.pallas_call(
        kernel,
        out_shape=jax.ShapeDtypeStruct((nb, Bt, 1), jnp.float32),
        grid=(nb,),
        in_specs=in_specs,
        out_specs=out_spec,
        scratch_shapes=scratch_shapes,
        compiler_params=pltpu.CompilerParams(
            dimension_semantics=("parallel",),
            vmem_limit_bytes=vmem_limit),
    )(x, *w_ihs, *w_hhs, *bs, w_cls, b_cls)

    return out.reshape(Bp, 1)[:B]                                  # (B, 1)


# --------------------------- Pure-JAX reference -------------------------------

def lstm_net_reference(token_ids, params, hidden_dim, num_layers):
    """f32 reference in PyTorch layout/gate-order (i,f,g,o)."""
    B, T = token_ids.shape
    H = hidden_dim
    x = jnp.take(params["embedding"], token_ids, axis=0)          # (B, T, E)
    for l in range(num_layers):
        w_ih, w_hh, b = params[f"w_ih_{l}"], params[f"w_hh_{l}"], params[f"b_{l}"]
        h = jnp.zeros((B, H), jnp.float32)
        c = jnp.zeros((B, H), jnp.float32)
        ys = []
        for t in range(T):
            g = x[:, t, :] @ w_ih + h @ w_hh + b
            i = jax.nn.sigmoid(g[:, 0 * H:1 * H])
            f = jax.nn.sigmoid(g[:, 1 * H:2 * H])
            gg = jnp.tanh(g[:, 2 * H:3 * H])
            o = jax.nn.sigmoid(g[:, 3 * H:4 * H])
            c = f * c + i * gg
            h = o * jnp.tanh(c)
            ys.append(h)
        x = jnp.stack(ys, axis=1)
    z = x[:, -1, :] @ params["w_cls"].T + params["b_cls"]
    return jax.nn.sigmoid(z)


# ------------------------------- Params ---------------------------------------

def init_params(key, vocab_size, embedding_dim, hidden_dim, num_layers):
    """Deterministic synthetic parameters, PyTorch layout (pre-transposed, gate order i,f,g,o)."""
    params = {}
    key, k_emb = jax.random.split(key)
    params["embedding"] = jax.random.normal(
        k_emb, (vocab_size, embedding_dim), jnp.float32)

    bound = hidden_dim ** -0.5
    d_in = embedding_dim
    for layer in range(num_layers):
        key, k1, k2, k3, k4 = jax.random.split(key, 5)
        params[f"w_ih_{layer}"] = jax.random.uniform(
            k1, (d_in, 4 * hidden_dim), jnp.float32, -bound, bound)
        params[f"w_hh_{layer}"] = jax.random.uniform(
            k2, (hidden_dim, 4 * hidden_dim), jnp.float32, -bound, bound)
        b_ih = jax.random.uniform(k3, (4 * hidden_dim,), jnp.float32, -bound, bound)
        b_hh = jax.random.uniform(k4, (4 * hidden_dim,), jnp.float32, -bound, bound)
        params[f"b_{layer}"] = (b_ih + b_hh).reshape(1, 4 * hidden_dim)
        d_in = hidden_dim

    key, k5, k6 = jax.random.split(key, 3)
    params["w_cls"] = jax.random.uniform(
        k5, (1, hidden_dim), jnp.float32, -bound, bound)
    params["b_cls"] = jax.random.uniform(k6, (1, 1), jnp.float32, -bound, bound)
    return params


# ------------------------------- Main -----------------------------------------

if __name__ == "__main__":
    batch, seq_len = 2, 8
    vocab_size, embedding_dim, hidden_dim, num_layers = 32, 16, 32, 2

    key = jax.random.PRNGKey(0)
    key, k_ids = jax.random.split(key)
    token_ids = jax.random.randint(k_ids, (batch, seq_len), 0, vocab_size,
                                   dtype=jnp.int32)

    params = init_params(key, vocab_size, embedding_dim, hidden_dim, num_layers)

    out = lstm_net_forward(token_ids, params, hidden_dim, num_layers)
    out = jax.block_until_ready(out)
    assert out.shape == (batch, 1)
    assert bool(jnp.all(jnp.isfinite(out)))

    # Correctness vs. f32 reference (bf16 weights -> ~1e-2 tolerance).
    ref = lstm_net_reference(token_ids, params, hidden_dim, num_layers)
    assert bool(jnp.allclose(out, ref, atol=3e-2, rtol=0.0))

    print("KERNEL_OK")
</pallas_src>

<mosaic_0001>
module attributes {stable_mosaic.version = 11 : i64} {
  func.func @kernel(%arg0: i32, %arg1: memref<1x64x16xbf16, #tpu.memory_space<vmem>>, %arg2: memref<16x512xbf16, #tpu.memory_space<vmem>>, %arg3: memref<128x512xbf16, #tpu.memory_space<vmem>>, %arg4: memref<128x512xbf16, #tpu.memory_space<vmem>>, %arg5: memref<128x512xbf16, #tpu.memory_space<vmem>>, %arg6: memref<1x512xf32, #tpu.memory_space<vmem>>, %arg7: memref<1x512xf32, #tpu.memory_space<vmem>>, %arg8: memref<1x128xf32, #tpu.memory_space<vmem>>, %arg9: memref<1x1xf32, #tpu.memory_space<vmem>>, %arg10: memref<1x8x1xf32, #tpu.memory_space<vmem>>, %arg11: memref<64x128xbf16, #tpu.memory_space<vmem>>, %arg12: memref<64x512xf32, #tpu.memory_space<vmem>>) attributes {dimension_semantics = [#tpu.dimension_semantics<parallel>], iteration_bounds = array<i64: 1>, scalar_prefetch = 0 : i64, scratch_operands = 2 : i64, tpu.core_type = #tpu.core_type<tc>, window_params = [{transform_indices = @transform_0, window_bounds = array<i64: 1, 64, 16>}, {pipeline_mode = #tpu.pipeline_mode<synchronous>, transform_indices = @transform_1, window_bounds = array<i64: 16, 512>}, {pipeline_mode = #tpu.pipeline_mode<synchronous>, transform_indices = @transform_2, window_bounds = array<i64: 128, 512>}, {pipeline_mode = #tpu.pipeline_mode<synchronous>, transform_indices = @transform_3, window_bounds = array<i64: 128, 512>}, {pipeline_mode = #tpu.pipeline_mode<synchronous>, transform_indices = @transform_4, window_bounds = array<i64: 128, 512>}, {pipeline_mode = #tpu.pipeline_mode<synchronous>, transform_indices = @transform_5, window_bounds = array<i64: 1, 512>}, {pipeline_mode = #tpu.pipeline_mode<synchronous>, transform_indices = @transform_6, window_bounds = array<i64: 1, 512>}, {pipeline_mode = #tpu.pipeline_mode<synchronous>, transform_indices = @transform_7, window_bounds = array<i64: 1, 128>}, {pipeline_mode = #tpu.pipeline_mode<synchronous>, transform_indices = @transform_8, window_bounds = array<i64: 1, 1>}, {transform_indices = @transform_9, window_bounds = array<i64: 1, 8, 1>}]} {
    %c0 = arith.constant 0 : index
    %c0_0 = arith.constant 0 : index
    %c0_1 = arith.constant 0 : index
    %0 = vector.load %arg1[%c0, %c0_0, %c0_1] : memref<1x64x16xbf16, #tpu.memory_space<vmem>>, vector<1x64x16xbf16>
    %1 = vector.shape_cast %0 : vector<1x64x16xbf16> to vector<64x16xbf16>
    %c0_2 = arith.constant 0 : index
    %c0_3 = arith.constant 0 : index
    %2 = vector.load %arg2[%c0_2, %c0_3] : memref<16x512xbf16, #tpu.memory_space<vmem>>, vector<16x512xbf16>
    %cst = arith.constant dense<0.000000e+00> : vector<64x512xf32>
    %3 = tpu.matmul %1, %2, %cst {dimension_numbers = #tpu.dot_dimension_numbers<[1], [0], [0], [1], [0, 0, 1, 1], [], []>} : vector<64x16xbf16>, vector<16x512xbf16>, vector<64x512xf32> -> vector<64x512xf32>
    %c0_4 = arith.constant 0 : index
    %c0_5 = arith.constant 0 : index
    %4 = vector.load %arg6[%c0_4, %c0_5] : memref<1x512xf32, #tpu.memory_space<vmem>>, vector<1x512xf32>
    %5 = vector.broadcast %4 : vector<1x512xf32> to vector<64x512xf32>
    %6 = arith.addf %3, %5 : vector<64x512xf32>
    %c0_6 = arith.constant 0 : index
    %c0_7 = arith.constant 0 : index
    %7 = vector.load %arg12[%c0_6, %c0_7] : memref<64x512xf32, #tpu.memory_space<vmem>>, vector<64x512xf32>
    tpu.vector_store %arg12[%c0_6, %c0_7], %6 {strides = array<i32>} : memref<64x512xf32, #tpu.memory_space<vmem>>, vector<64x512xf32>,
    %cst_8 = arith.constant 0.000000e+00 : bf16
    %8 = vector.broadcast %cst_8 : bf16 to vector<8x128xbf16>
    %cst_9 = arith.constant 0.000000e+00 : f32
    %9 = vector.broadcast %cst_9 : f32 to vector<8x128xf32>
    %c0_i32 = arith.constant 0 : i32
    %c8_i32 = arith.constant 8 : i32
    %10 = arith.muli %c0_i32, %c8_i32 : i32
    %11 = tpu.assume_multiple %10, 8 : i32
    %12 = arith.index_cast %11 : i32 to index
    %c0_10 = arith.constant 0 : index
    %13 = vector.load %arg12[%12, %c0_10] : memref<64x512xf32, #tpu.memory_space<vmem>>, vector<8x512xf32>
    %c0_11 = arith.constant 0 : index
    %c0_12 = arith.constant 0 : index
    %14 = vector.load %arg4[%c0_11, %c0_12] : memref<128x512xbf16, #tpu.memory_space<vmem>>, vector<128x512xbf16>
    %cst_13 = arith.constant dense<0.000000e+00> : vector<8x512xf32>
    %15 = tpu.matmul %8, %14, %cst_13 {dimension_numbers = #tpu.dot_dimension_numbers<[1], [0], [0], [1], [0, 0, 1, 1], [], []>} : vector<8x128xbf16>, vector<128x512xbf16>, vector<8x512xf32> -> vector<8x512xf32>
    %16 = arith.addf %13, %15 : vector<8x512xf32>
    %17 = vector.extract_strided_slice %16 {offsets = [0, 0], sizes = [8, 384], strides = [1, 1]} : vector<8x512xf32> to vector<8x384xf32>
    %18 = arith.negf %17 : vector<8x384xf32>
    %19 = math.exp %18 : vector<8x384xf32>
    %cst_14 = arith.constant 1.000000e+00 : f32
    %20 = vector.broadcast %cst_14 : f32 to vector<8x384xf32>
    %21 = arith.addf %20, %19 : vector<8x384xf32>
    %22 = arith.divf %20, %21 : vector<8x384xf32>
    %23 = vector.extract_strided_slice %22 {offsets = [0, 0], sizes = [8, 128], strides = [1, 1]} : vector<8x384xf32> to vector<8x128xf32>
    %24 = vector.extract_strided_slice %22 {offsets = [0, 128], sizes = [8, 128], strides = [1, 1]} : vector<8x384xf32> to vector<8x128xf32>
    %25 = vector.extract_strided_slice %22 {offsets = [0, 256], sizes = [8, 128], strides = [1, 1]} : vector<8x384xf32> to vector<8x128xf32>
    %26 = vector.extract_strided_slice %16 {offsets = [0, 384], sizes = [8, 128], strides = [1, 1]} : vector<8x512xf32> to vector<8x128xf32>
    %27 = math.tanh %26 : vector<8x128xf32>
    %28 = arith.mulf %24, %9 : vector<8x128xf32>
    %29 = arith.mulf %23, %27 : vector<8x128xf32>
    %30 = arith.addf %28, %29 : vector<8x128xf32>
    %31 = math.tanh %30 : vector<8x128xf32>
    %32 = arith.mulf %25, %31 : vector<8x128xf32>
    %33 = arith.truncf %32 : vector<8x128xf32> to vector<8x128xbf16>
    %34 = arith.index_cast %11 : i32 to index
    %c0_15 = arith.constant 0 : index
    %35 = vector.load %arg11[%34, %c0_15] : memref<64x128xbf16, #tpu.memory_space<vmem>>, vector<8x128xbf16>
    tpu.vector_store %arg11[%34, %c0_15], %33 {strides = array<i32>} : memref<64x128xbf16, #tpu.memory_space<vmem>>, vector<8x128xbf16>,
    %c1_i32 = arith.constant 1 : i32
    %c8_i32_16 = arith.constant 8 : i32
    %36 = arith.muli %c1_i32, %c8_i32_16 : i32
    %37 = tpu.assume_multiple %36, 8 : i32
    %38 = arith.index_cast %37 : i32 to index
    %c0_17 = arith.constant 0 : index
    %39 = vector.load %arg12[%38, %c0_17] : memref<64x512xf32, #tpu.memory_space<vmem>>, vector<8x512xf32>
    %c0_18 = arith.constant 0 : index
    %c0_19 = arith.constant 0 : index
    %40 = vector.load %arg4[%c0_18, %c0_19] : memref<128x512xbf16, #tpu.memory_space<vmem>>, vector<128x512xbf16>
    %cst_20 = arith.constant dense<0.000000e+00> : vector<8x512xf32>
    %41 = tpu.matmul %33, %40, %cst_20 {dimension_numbers = #tpu.dot_dimension_numbers<[1], [0], [0], [1], [0, 0, 1, 1], [], []>} : vector<8x128xbf16>, vector<128x512xbf16>, vector<8x512xf32> -> vector<8x512xf32>
    %42 = arith.addf %39, %41 : vector<8x512xf32>
    %43 = vector.extract_strided_slice %42 {offsets = [0, 0], sizes = [8, 384], strides = [1, 1]} : vector<8x512xf32> to vector<8x384xf32>
    %44 = arith.negf %43 : vector<8x384xf32>
    %45 = math.exp %44 : vector<8x384xf32>
    %cst_21 = arith.constant 1.000000e+00 : f32
    %46 = vector.broadcast %cst_21 : f32 to vector<8x384xf32>
    %47 = arith.addf %46, %45 : vector<8x384xf32>
    %48 = arith.divf %46, %47 : vector<8x384xf32>
    %49 = vector.extract_strided_slice %48 {offsets = [0, 0], sizes = [8, 128], strides = [1, 1]} : vector<8x384xf32> to vector<8x128xf32>
    %50 = vector.extract_strided_slice %48 {offsets = [0, 128], sizes = [8, 128], strides = [1, 1]} : vector<8x384xf32> to vector<8x128xf32>
    %51 = vector.extract_strided_slice %48 {offsets = [0, 256], sizes = [8, 128], strides = [1, 1]} : vector<8x384xf32> to vector<8x128xf32>
    %52 = vector.extract_strided_slice %42 {offsets = [0, 384], sizes = [8, 128], strides = [1, 1]} : vector<8x512xf32> to vector<8x128xf32>
    %53 = math.tanh %52 : vector<8x128xf32>
    %54 = arith.mulf %50, %30 : vector<8x128xf32>
    %55 = arith.mulf %49, %53 : vector<8x128xf32>
    %56 = arith.addf %54, %55 : vector<8x128xf32>
    %57 = math.tanh %56 : vector<8x128xf32>
    %58 = arith.mulf %51, %57 : vector<8x128xf32>
    %59 = arith.truncf %58 : vector<8x128xf32> to vector<8x128xbf16>
    %60 = arith.index_cast %37 : i32 to index
    %c0_22 = arith.constant 0 : index
    %61 = vector.load %arg11[%60, %c0_22] : memref<64x128xbf16, #tpu.memory_space<vmem>>, vector<8x128xbf16>
    tpu.vector_store %arg11[%60, %c0_22], %59 {strides = array<i32>} : memref<64x128xbf16, #tpu.memory_space<vmem>>, vector<8x128xbf16>,
    %c2_i32 = arith.constant 2 : i32
    %c8_i32_23 = arith.constant 8 : i32
    %62 = arith.muli %c2_i32, %c8_i32_23 : i32
    %63 = tpu.assume_multiple %62, 8 : i32
    %64 = arith.index_cast %63 : i32 to index
    %c0_24 = arith.constant 0 : index
    %65 = vector.load %arg12[%64, %c0_24] : memref<64x512xf32, #tpu.memory_space<vmem>>, vector<8x512xf32>
    %c0_25 = arith.constant 0 : index
    %c0_26 = arith.constant 0 : index
    %66 = vector.load %arg4[%c0_25, %c0_26] : memref<128x512xbf16, #tpu.memory_space<vmem>>, vector<128x512xbf16>
    %cst_27 = arith.constant dense<0.000000e+00> : vector<8x512xf32>
    %67 = tpu.matmul %59, %66, %cst_27 {dimension_numbers = #tpu.dot_dimension_numbers<[1], [0], [0], [1], [0, 0, 1, 1], [], []>} : vector<8x128xbf16>, vector<128x512xbf16>, vector<8x512xf32> -> vector<8x512xf32>
    %68 = arith.addf %65, %67 : vector<8x512xf32>
    %69 = vector.extract_strided_slice %68 {offsets = [0, 0], sizes = [8, 384], strides = [1, 1]} : vector<8x512xf32> to vector<8x384xf32>
    %70 = arith.negf %69 : vector<8x384xf32>
    %71 = math.exp %70 : vector<8x384xf32>
    %cst_28 = arith.constant 1.000000e+00 : f32
    %72 = vector.broadcast %cst_28 : f32 to vector<8x384xf32>
    %73 = arith.addf %72, %71 : vector<8x384xf32>
    %74 = arith.divf %72, %73 : vector<8x384xf32>
    %75 = vector.extract_strided_slice %74 {offsets = [0, 0], sizes = [8, 128], strides = [1, 1]} : vector<8x384xf32> to vector<8x128xf32>
    %76 = vector.extract_strided_slice %74 {offsets = [0, 128], sizes = [8, 128], strides = [1, 1]} : vector<8x384xf32> to vector<8x128xf32>
    %77 = vector.extract_strided_slice %74 {offsets = [0, 256], sizes = [8, 128], strides = [1, 1]} : vector<8x384xf32> to vector<8x128xf32>
    %78 = vector.extract_strided_slice %68 {offsets = [0, 384], sizes = [8, 128], strides = [1, 1]} : vector<8x512xf32> to vector<8x128xf32>
    %79 = math.tanh %78 : vector<8x128xf32>
    %80 = arith.mulf %76, %56 : vector<8x128xf32>
    %81 = arith.mulf %75, %79 : vector<8x128xf32>
    %82 = arith.addf %80, %81 : vector<8x128xf32>
    %83 = math.tanh %82 : vector<8x128xf32>
    %84 = arith.mulf %77, %83 : vector<8x128xf32>
    %85 = arith.truncf %84 : vector<8x128xf32> to vector<8x128xbf16>
    %86 = arith.index_cast %63 : i32 to index
    %c0_29 = arith.constant 0 : index
    %87 = vector.load %arg11[%86, %c0_29] : memref<64x128xbf16, #tpu.memory_space<vmem>>, vector<8x128xbf16>
    tpu.vector_store %arg11[%86, %c0_29], %85 {strides = array<i32>} : memref<64x128xbf16, #tpu.memory_space<vmem>>, vector<8x128xbf16>,
    %c3_i32 = arith.constant 3 : i32
    %c8_i32_30 = arith.constant 8 : i32
    %88 = arith.muli %c3_i32, %c8_i32_30 : i32
    %89 = tpu.assume_multiple %88, 8 : i32
    %90 = arith.index_cast %89 : i32 to index
    %c0_31 = arith.constant 0 : index
    %91 = vector.load %arg12[%90, %c0_31] : memref<64x512xf32, #tpu.memory_space<vmem>>, vector<8x512xf32>
    %c0_32 = arith.constant 0 : index
    %c0_33 = arith.constant 0 : index
    %92 = vector.load %arg4[%c0_32, %c0_33] : memref<128x512xbf16, #tpu.memory_space<vmem>>, vector<128x512xbf16>
    %cst_34 = arith.constant dense<0.000000e+00> : vector<8x512xf32>
    %93 = tpu.matmul %85, %92, %cst_34 {dimension_numbers = #tpu.dot_dimension_numbers<[1], [0], [0], [1], [0, 0, 1, 1], [], []>} : vector<8x128xbf16>, vector<128x512xbf16>, vector<8x512xf32> -> vector<8x512xf32>
    %94 = arith.addf %91, %93 : vector<8x512xf32>
    %95 = vector.extract_strided_slice %94 {offsets = [0, 0], sizes = [8, 384], strides = [1, 1]} : vector<8x512xf32> to vector<8x384xf32>
    %96 = arith.negf %95 : vector<8x384xf32>
    %97 = math.exp %96 : vector<8x384xf32>
    %cst_35 = arith.constant 1.000000e+00 : f32
    %98 = vector.broadcast %cst_35 : f32 to vector<8x384xf32>
    %99 = arith.addf %98, %97 : vector<8x384xf32>
    %100 = arith.divf %98, %99 : vector<8x384xf32>
    %101 = vector.extract_strided_slice %100 {offsets = [0, 0], sizes = [8, 128], strides = [1, 1]} : vector<8x384xf32> to vector<8x128xf32>
    %102 = vector.extract_strided_slice %100 {offsets = [0, 128], sizes = [8, 128], strides = [1, 1]} : vector<8x384xf32> to vector<8x128xf32>
    %103 = vector.extract_strided_slice %100 {offsets = [0, 256], sizes = [8, 128], strides = [1, 1]} : vector<8x384xf32> to vector<8x128xf32>
    %104 = vector.extract_strided_slice %94 {offsets = [0, 384], sizes = [8, 128], strides = [1, 1]} : vector<8x512xf32> to vector<8x128xf32>
    %105 = math.tanh %104 : vector<8x128xf32>
    %106 = arith.mulf %102, %82 : vector<8x128xf32>
    %107 = arith.mulf %101, %105 : vector<8x128xf32>
    %108 = arith.addf %106, %107 : vector<8x128xf32>
    %109 = math.tanh %108 : vector<8x128xf32>
    %110 = arith.mulf %103, %109 : vector<8x128xf32>
    %111 = arith.truncf %110 : vector<8x128xf32> to vector<8x128xbf16>
    %112 = arith.index_cast %89 : i32 to index
    %c0_36 = arith.constant 0 : index
    %113 = vector.load %arg11[%112, %c0_36] : memref<64x128xbf16, #tpu.memory_space<vmem>>, vector<8x128xbf16>
    tpu.vector_store %arg11[%112, %c0_36], %111 {strides = array<i32>} : memref<64x128xbf16, #tpu.memory_space<vmem>>, vector<8x128xbf16>,
    %c4_i32 = arith.constant 4 : i32
    %c8_i32_37 = arith.constant 8 : i32
    %114 = arith.muli %c4_i32, %c8_i32_37 : i32
    %115 = tpu.assume_multiple %114, 8 : i32
    %116 = arith.index_cast %115 : i32 to index
    %c0_38 = arith.constant 0 : index
    %117 = vector.load %arg12[%116, %c0_38] : memref<64x512xf32, #tpu.memory_space<vmem>>, vector<8x512xf32>
    %c0_39 = arith.constant 0 : index
    %c0_40 = arith.constant 0 : index
    %118 = vector.load %arg4[%c0_39, %c0_40] : memref<128x512xbf16, #tpu.memory_space<vmem>>, vector<128x512xbf16>
    %cst_41 = arith.constant dense<0.000000e+00> : vector<8x512xf32>
    %119 = tpu.matmul %111, %118, %cst_41 {dimension_numbers = #tpu.dot_dimension_numbers<[1], [0], [0], [1], [0, 0, 1, 1], [], []>} : vector<8x128xbf16>, vector<128x512xbf16>, vector<8x512xf32> -> vector<8x512xf32>
    %120 = arith.addf %117, %119 : vector<8x512xf32>
    %121 = vector.extract_strided_slice %120 {offsets = [0, 0], sizes = [8, 384], strides = [1, 1]} : vector<8x512xf32> to vector<8x384xf32>
    %122 = arith.negf %121 : vector<8x384xf32>
    %123 = math.exp %122 : vector<8x384xf32>
    %cst_42 = arith.constant 1.000000e+00 : f32
    %124 = vector.broadcast %cst_42 : f32 to vector<8x384xf32>
    %125 = arith.addf %124, %123 : vector<8x384xf32>
    %126 = arith.divf %124, %125 : vector<8x384xf32>
    %127 = vector.extract_strided_slice %126 {offsets = [0, 0], sizes = [8, 128], strides = [1, 1]} : vector<8x384xf32> to vector<8x128xf32>
    %128 = vector.extract_strided_slice %126 {offsets = [0, 128], sizes = [8, 128], strides = [1, 1]} : vector<8x384xf32> to vector<8x128xf32>
    %129 = vector.extract_strided_slice %126 {offsets = [0, 256], sizes = [8, 128], strides = [1, 1]} : vector<8x384xf32> to vector<8x128xf32>
    %130 = vector.extract_strided_slice %120 {offsets = [0, 384], sizes = [8, 128], strides = [1, 1]} : vector<8x512xf32> to vector<8x128xf32>
    %131 = math.tanh %130 : vector<8x128xf32>
    %132 = arith.mulf %128, %108 : vector<8x128xf32>
    %133 = arith.mulf %127, %131 : vector<8x128xf32>
    %134 = arith.addf %132, %133 : vector<8x128xf32>
    %135 = math.tanh %134 : vector<8x128xf32>
    %136 = arith.mulf %129, %135 : vector<8x128xf32>
    %137 = arith.truncf %136 : vector<8x128xf32> to vector<8x128xbf16>
    %138 = arith.index_cast %115 : i32 to index
    %c0_43 = arith.constant 0 : index
    %139 = vector.load %arg11[%138, %c0_43] : memref<64x128xbf16, #tpu.memory_space<vmem>>, vector<8x128xbf16>
    tpu.vector_store %arg11[%138, %c0_43], %137 {strides = array<i32>} : memref<64x128xbf16, #tpu.memory_space<vmem>>, vector<8x128xbf16>,
    %c5_i32 = arith.constant 5 : i32
    %c8_i32_44 = arith.constant 8 : i32
    %140 = arith.muli %c5_i32, %c8_i32_44 : i32
    %141 = tpu.assume_multiple %140, 8 : i32
    %142 = arith.index_cast %141 : i32 to index
    %c0_45 = arith.constant 0 : index
    %143 = vector.load %arg12[%142, %c0_45] : memref<64x512xf32, #tpu.memory_space<vmem>>, vector<8x512xf32>
    %c0_46 = arith.constant 0 : index
    %c0_47 = arith.constant 0 : index
    %144 = vector.load %arg4[%c0_46, %c0_47] : memref<128x512xbf16, #tpu.memory_space<vmem>>, vector<128x512xbf16>
    %cst_48 = arith.constant dense<0.000000e+00> : vector<8x512xf32>
    %145 = tpu.matmul %137, %144, %cst_48 {dimension_numbers = #tpu.dot_dimension_numbers<[1], [0], [0], [1], [0, 0, 1, 1], [], []>} : vector<8x128xbf16>, vector<128x512xbf16>, vector<8x512xf32> -> vector<8x512xf32>
    %146 = arith.addf %143, %145 : vector<8x512xf32>
    %147 = vector.extract_strided_slice %146 {offsets = [0, 0], sizes = [8, 384], strides = [1, 1]} : vector<8x512xf32> to vector<8x384xf32>
    %148 = arith.negf %147 : vector<8x384xf32>
    %149 = math.exp %148 : vector<8x384xf32>
    %cst_49 = arith.constant 1.000000e+00 : f32
    %150 = vector.broadcast %cst_49 : f32 to vector<8x384xf32>
    %151 = arith.addf %150, %149 : vector<8x384xf32>
    %152 = arith.divf %150, %151 : vector<8x384xf32>
    %153 = vector.extract_strided_slice %152 {offsets = [0, 0], sizes = [8, 128], strides = [1, 1]} : vector<8x384xf32> to vector<8x128xf32>
    %154 = vector.extract_strided_slice %152 {offsets = [0, 128], sizes = [8, 128], strides = [1, 1]} : vector<8x384xf32> to vector<8x128xf32>
    %155 = vector.extract_strided_slice %152 {offsets = [0, 256], sizes = [8, 128], strides = [1, 1]} : vector<8x384xf32> to vector<8x128xf32>
    %156 = vector.extract_strided_slice %146 {offsets = [0, 384], sizes = [8, 128], strides = [1, 1]} : vector<8x512xf32> to vector<8x128xf32>
    %157 = math.tanh %156 : vector<8x128xf32>
    %158 = arith.mulf %154, %134 : vector<8x128xf32>
    %159 = arith.mulf %153, %157 : vector<8x128xf32>
    %160 = arith.addf %158, %159 : vector<8x128xf32>
    %161 = math.tanh %160 : vector<8x128xf32>
    %162 = arith.mulf %155, %161 : vector<8x128xf32>
    %163 = arith.truncf %162 : vector<8x128xf32> to vector<8x128xbf16>
    %164 = arith.index_cast %141 : i32 to index
    %c0_50 = arith.constant 0 : index
    %165 = vector.load %arg11[%164, %c0_50] : memref<64x128xbf16, #tpu.memory_space<vmem>>, vector<8x128xbf16>
    tpu.vector_store %arg11[%164, %c0_50], %163 {strides = array<i32>} : memref<64x128xbf16, #tpu.memory_space<vmem>>, vector<8x128xbf16>,
    %c6_i32 = arith.constant 6 : i32
    %c8_i32_51 = arith.constant 8 : i32
    %166 = arith.muli %c6_i32, %c8_i32_51 : i32
    %167 = tpu.assume_multiple %166, 8 : i32
    %168 = arith.index_cast %167 : i32 to index
    %c0_52 = arith.constant 0 : index
    %169 = vector.load %arg12[%168, %c0_52] : memref<64x512xf32, #tpu.memory_space<vmem>>, vector<8x512xf32>
    %c0_53 = arith.constant 0 : index
    %c0_54 = arith.constant 0 : index
    %170 = vector.load %arg4[%c0_53, %c0_54] : memref<128x512xbf16, #tpu.memory_space<vmem>>, vector<128x512xbf16>
    %cst_55 = arith.constant dense<0.000000e+00> : vector<8x512xf32>
    %171 = tpu.matmul %163, %170, %cst_55 {dimension_numbers = #tpu.dot_dimension_numbers<[1], [0], [0], [1], [0, 0, 1, 1], [], []>} : vector<8x128xbf16>, vector<128x512xbf16>, vector<8x512xf32> -> vector<8x512xf32>
    %172 = arith.addf %169, %171 : vector<8x512xf32>
    %173 = vector.extract_strided_slice %172 {offsets = [0, 0], sizes = [8, 384], strides = [1, 1]} : vector<8x512xf32> to vector<8x384xf32>
    %174 = arith.negf %173 : vector<8x384xf32>
    %175 = math.exp %174 : vector<8x384xf32>
    %cst_56 = arith.constant 1.000000e+00 : f32
    %176 = vector.broadcast %cst_56 : f32 to vector<8x384xf32>
    %177 = arith.addf %176, %175 : vector<8x384xf32>
    %178 = arith.divf %176, %177 : vector<8x384xf32>
    %179 = vector.extract_strided_slice %178 {offsets = [0, 0], sizes = [8, 128], strides = [1, 1]} : vector<8x384xf32> to vector<8x128xf32>
    %180 = vector.extract_strided_slice %178 {offsets = [0, 128], sizes = [8, 128], strides = [1, 1]} : vector<8x384xf32> to vector<8x128xf32>
    %181 = vector.extract_strided_slice %178 {offsets = [0, 256], sizes = [8, 128], strides = [1, 1]} : vector<8x384xf32> to vector<8x128xf32>
    %182 = vector.extract_strided_slice %172 {offsets = [0, 384], sizes = [8, 128], strides = [1, 1]} : vector<8x512xf32> to vector<8x128xf32>
    %183 = math.tanh %182 : vector<8x128xf32>
    %184 = arith.mulf %180, %160 : vector<8x128xf32>
    %185 = arith.mulf %179, %183 : vector<8x128xf32>
    %186 = arith.addf %184, %185 : vector<8x128xf32>
    %187 = math.tanh %186 : vector<8x128xf32>
    %188 = arith.mulf %181, %187 : vector<8x128xf32>
    %189 = arith.truncf %188 : vector<8x128xf32> to vector<8x128xbf16>
    %190 = arith.index_cast %167 : i32 to index
    %c0_57 = arith.constant 0 : index
    %191 = vector.load %arg11[%190, %c0_57] : memref<64x128xbf16, #tpu.memory_space<vmem>>, vector<8x128xbf16>
    tpu.vector_store %arg11[%190, %c0_57], %189 {strides = array<i32>} : memref<64x128xbf16, #tpu.memory_space<vmem>>, vector<8x128xbf16>,
    %c7_i32 = arith.constant 7 : i32
    %c8_i32_58 = arith.constant 8 : i32
    %192 = arith.muli %c7_i32, %c8_i32_58 : i32
    %193 = tpu.assume_multiple %192, 8 : i32
    %194 = arith.index_cast %193 : i32 to index
    %c0_59 = arith.constant 0 : index
    %195 = vector.load %arg12[%194, %c0_59] : memref<64x512xf32, #tpu.memory_space<vmem>>, vector<8x512xf32>
    %c0_60 = arith.constant 0 : index
    %c0_61 = arith.constant 0 : index
    %196 = vector.load %arg4[%c0_60, %c0_61] : memref<128x512xbf16, #tpu.memory_space<vmem>>, vector<128x512xbf16>
    %cst_62 = arith.constant dense<0.000000e+00> : vector<8x512xf32>
    %197 = tpu.matmul %189, %196, %cst_62 {dimension_numbers = #tpu.dot_dimension_numbers<[1], [0], [0], [1], [0, 0, 1, 1], [], []>} : vector<8x128xbf16>, vector<128x512xbf16>, vector<8x512xf32> -> vector<8x512xf32>
    %198 = arith.addf %195, %197 : vector<8x512xf32>
    %199 = vector.extract_strided_slice %198 {offsets = [0, 0], sizes = [8, 384], strides = [1, 1]} : vector<8x512xf32> to vector<8x384xf32>
    %200 = arith.negf %199 : vector<8x384xf32>
    %201 = math.exp %200 : vector<8x384xf32>
    %cst_63 = arith.constant 1.000000e+00 : f32
    %202 = vector.broadcast %cst_63 : f32 to vector<8x384xf32>
    %203 = arith.addf %202, %201 : vector<8x384xf32>
    %204 = arith.divf %202, %203 : vector<8x384xf32>
    %205 = vector.extract_strided_slice %204 {offsets = [0, 0], sizes = [8, 128], strides = [1, 1]} : vector<8x384xf32> to vector<8x128xf32>
    %206 = vector.extract_strided_slice %204 {offsets = [0, 128], sizes = [8, 128], strides = [1, 1]} : vector<8x384xf32> to vector<8x128xf32>
    %207 = vector.extract_strided_slice %204 {offsets = [0, 256], sizes = [8, 128], strides = [1, 1]} : vector<8x384xf32> to vector<8x128xf32>
    %208 = vector.extract_strided_slice %198 {offsets = [0, 384], sizes = [8, 128], strides = [1, 1]} : vector<8x512xf32> to vector<8x128xf32>
    %209 = math.tanh %208 : vector<8x128xf32>
    %210 = arith.mulf %206, %186 : vector<8x128xf32>
    %211 = arith.mulf %205, %209 : vector<8x128xf32>
    %212 = arith.addf %210, %211 : vector<8x128xf32>
    %213 = math.tanh %212 : vector<8x128xf32>
    %214 = arith.mulf %207, %213 : vector<8x128xf32>
    %215 = arith.truncf %214 : vector<8x128xf32> to vector<8x128xbf16>
    %216 = arith.index_cast %193 : i32 to index
    %c0_64 = arith.constant 0 : index
    %217 = vector.load %arg11[%216, %c0_64] : memref<64x128xbf16, #tpu.memory_space<vmem>>, vector<8x128xbf16>
    tpu.vector_store %arg11[%216, %c0_64], %215 {strides = array<i32>} : memref<64x128xbf16, #tpu.memory_space<vmem>>, vector<8x128xbf16>,
    %c8_i32_65 = arith.constant 8 : i32
    %c0_66 = arith.constant 0 : index
    %c0_67 = arith.constant 0 : index
    %218 = vector.load %arg11[%c0_66, %c0_67] : memref<64x128xbf16, #tpu.memory_space<vmem>>, vector<64x128xbf16>
    %c0_68 = arith.constant 0 : index
    %c0_69 = arith.constant 0 : index
    %219 = vector.load %arg3[%c0_68, %c0_69] : memref<128x512xbf16, #tpu.memory_space<vmem>>, vector<128x512xbf16>
    %cst_70 = arith.constant dense<0.000000e+00> : vector<64x512xf32>
    %220 = tpu.matmul %218, %219, %cst_70 {dimension_numbers = #tpu.dot_dimension_numbers<[1], [0], [0], [1], [0, 0, 1, 1], [], []>} : vector<64x128xbf16>, vector<128x512xbf16>, vector<64x512xf32> -> vector<64x512xf32>
    %c0_71 = arith.constant 0 : index
    %c0_72 = arith.constant 0 : index
    %221 = vector.load %arg7[%c0_71, %c0_72] : memref<1x512xf32, #tpu.memory_space<vmem>>, vector<1x512xf32>
    %222 = vector.broadcast %221 : vector<1x512xf32> to vector<64x512xf32>
    %223 = arith.addf %220, %222 : vector<64x512xf32>
    %c0_73 = arith.constant 0 : index
    %c0_74 = arith.constant 0 : index
    %224 = vector.load %arg12[%c0_73, %c0_74] : memref<64x512xf32, #tpu.memory_space<vmem>>, vector<64x512xf32>
    tpu.vector_store %arg12[%c0_73, %c0_74], %223 {strides = array<i32>} : memref<64x512xf32, #tpu.memory_space<vmem>>, vector<64x512xf32>,
    %cst_75 = arith.constant 0.000000e+00 : bf16
    %225 = vector.broadcast %cst_75 : bf16 to vector<8x128xbf16>
    %cst_76 = arith.constant 0.000000e+00 : f32
    %226 = vector.broadcast %cst_76 : f32 to vector<8x128xf32>
    %c0_i32_77 = arith.constant 0 : i32
    %c8_i32_78 = arith.constant 8 : i32
    %227 = arith.muli %c0_i32_77, %c8_i32_78 : i32
    %228 = tpu.assume_multiple %227, 8 : i32
    %229 = arith.index_cast %228 : i32 to index
    %c0_79 = arith.constant 0 : index
    %230 = vector.load %arg12[%229, %c0_79] : memref<64x512xf32, #tpu.memory_space<vmem>>, vector<8x512xf32>
    %c0_80 = arith.constant 0 : index
    %c0_81 = arith.constant 0 : index
    %231 = vector.load %arg5[%c0_80, %c0_81] : memref<128x512xbf16, #tpu.memory_space<vmem>>, vector<128x512xbf16>
    %cst_82 = arith.constant dense<0.000000e+00> : vector<8x512xf32>
    %232 = tpu.matmul %225, %231, %cst_82 {dimension_numbers = #tpu.dot_dimension_numbers<[1], [0], [0], [1], [0, 0, 1, 1], [], []>} : vector<8x128xbf16>, vector<128x512xbf16>, vector<8x512xf32> -> vector<8x512xf32>
    %233 = arith.addf %230, %232 : vector<8x512xf32>
    %234 = vector.extract_strided_slice %233 {offsets = [0, 0], sizes = [8, 384], strides = [1, 1]} : vector<8x512xf32> to vector<8x384xf32>
    %235 = arith.negf %234 : vector<8x384xf32>
    %236 = math.exp %235 : vector<8x384xf32>
    %cst_83 = arith.constant 1.000000e+00 : f32
    %237 = vector.broadcast %cst_83 : f32 to vector<8x384xf32>
    %238 = arith.addf %237, %236 : vector<8x384xf32>
    %239 = arith.divf %237, %238 : vector<8x384xf32>
    %240 = vector.extract_strided_slice %239 {offsets = [0, 0], sizes = [8, 128], strides = [1, 1]} : vector<8x384xf32> to vector<8x128xf32>
    %241 = vector.extract_strided_slice %239 {offsets = [0, 128], sizes = [8, 128], strides = [1, 1]} : vector<8x384xf32> to vector<8x128xf32>
    %242 = vector.extract_strided_slice %239 {offsets = [0, 256], sizes = [8, 128], strides = [1, 1]} : vector<8x384xf32> to vector<8x128xf32>
    %243 = vector.extract_strided_slice %233 {offsets = [0, 384], sizes = [8, 128], strides = [1, 1]} : vector<8x512xf32> to vector<8x128xf32>
    %244 = math.tanh %243 : vector<8x128xf32>
    %245 = arith.mulf %241, %226 : vector<8x128xf32>
    %246 = arith.mulf %240, %244 : vector<8x128xf32>
    %247 = arith.addf %245, %246 : vector<8x128xf32>
    %248 = math.tanh %247 : vector<8x128xf32>
    %249 = arith.mulf %242, %248 : vector<8x128xf32>
    %250 = arith.truncf %249 : vector<8x128xf32> to vector<8x128xbf16>
    %c1_i32_84 = arith.constant 1 : i32
    %c8_i32_85 = arith.constant 8 : i32
    %251 = arith.muli %c1_i32_84, %c8_i32_85 : i32
    %252 = tpu.assume_multiple %251, 8 : i32
    %253 = arith.index_cast %252 : i32 to index
    %c0_86 = arith.constant 0 : index
    %254 = vector.load %arg12[%253, %c0_86] : memref<64x512xf32, #tpu.memory_space<vmem>>, vector<8x512xf32>
    %c0_87 = arith.constant 0 : index
    %c0_88 = arith.constant 0 : index
    %255 = vector.load %arg5[%c0_87, %c0_88] : memref<128x512xbf16, #tpu.memory_space<vmem>>, vector<128x512xbf16>
    %cst_89 = arith.constant dense<0.000000e+00> : vector<8x512xf32>
    %256 = tpu.matmul %250, %255, %cst_89 {dimension_numbers = #tpu.dot_dimension_numbers<[1], [0], [0], [1], [0, 0, 1, 1], [], []>} : vector<8x128xbf16>, vector<128x512xbf16>, vector<8x512xf32> -> vector<8x512xf32>
    %257 = arith.addf %254, %256 : vector<8x512xf32>
    %258 = vector.extract_strided_slice %257 {offsets = [0, 0], sizes = [8, 384], strides = [1, 1]} : vector<8x512xf32> to vector<8x384xf32>
    %259 = arith.negf %258 : vector<8x384xf32>
    %260 = math.exp %259 : vector<8x384xf32>
    %cst_90 = arith.constant 1.000000e+00 : f32
    %261 = vector.broadcast %cst_90 : f32 to vector<8x384xf32>
    %262 = arith.addf %261, %260 : vector<8x384xf32>
    %263 = arith.divf %261, %262 : vector<8x384xf32>
    %264 = vector.extract_strided_slice %263 {offsets = [0, 0], sizes = [8, 128], strides = [1, 1]} : vector<8x384xf32> to vector<8x128xf32>
    %265 = vector.extract_strided_slice %263 {offsets = [0, 128], sizes = [8, 128], strides = [1, 1]} : vector<8x384xf32> to vector<8x128xf32>
    %266 = vector.extract_strided_slice %263 {offsets = [0, 256], sizes = [8, 128], strides = [1, 1]} : vector<8x384xf32> to vector<8x128xf32>
    %267 = vector.extract_strided_slice %257 {offsets = [0, 384], sizes = [8, 128], strides = [1, 1]} : vector<8x512xf32> to vector<8x128xf32>
    %268 = math.tanh %267 : vector<8x128xf32>
    %269 = arith.mulf %265, %247 : vector<8x128xf32>
    %270 = arith.mulf %264, %268 : vector<8x128xf32>
    %271 = arith.addf %269, %270 : vector<8x128xf32>
    %272 = math.tanh %271 : vector<8x128xf32>
    %273 = arith.mulf %266, %272 : vector<8x128xf32>
    %274 = arith.truncf %273 : vector<8x128xf32> to vector<8x128xbf16>
    %c2_i32_91 = arith.constant 2 : i32
    %c8_i32_92 = arith.constant 8 : i32
    %275 = arith.muli %c2_i32_91, %c8_i32_92 : i32
    %276 = tpu.assume_multiple %275, 8 : i32
    %277 = arith.index_cast %276 : i32 to index
    %c0_93 = arith.constant 0 : index
    %278 = vector.load %arg12[%277, %c0_93] : memref<64x512xf32, #tpu.memory_space<vmem>>, vector<8x512xf32>
    %c0_94 = arith.constant 0 : index
    %c0_95 = arith.constant 0 : index
    %279 = vector.load %arg5[%c0_94, %c0_95] : memref<128x512xbf16, #tpu.memory_space<vmem>>, vector<128x512xbf16>
    %cst_96 = arith.constant dense<0.000000e+00> : vector<8x512xf32>
    %280 = tpu.matmul %274, %279, %cst_96 {dimension_numbers = #tpu.dot_dimension_numbers<[1], [0], [0], [1], [0, 0, 1, 1], [], []>} : vector<8x128xbf16>, vector<128x512xbf16>, vector<8x512xf32> -> vector<8x512xf32>
    %281 = arith.addf %278, %280 : vector<8x512xf32>
    %282 = vector.extract_strided_slice %281 {offsets = [0, 0], sizes = [8, 384], strides = [1, 1]} : vector<8x512xf32> to vector<8x384xf32>
    %283 = arith.negf %282 : vector<8x384xf32>
    %284 = math.exp %283 : vector<8x384xf32>
    %cst_97 = arith.constant 1.000000e+00 : f32
    %285 = vector.broadcast %cst_97 : f32 to vector<8x384xf32>
    %286 = arith.addf %285, %284 : vector<8x384xf32>
    %287 = arith.divf %285, %286 : vector<8x384xf32>
    %288 = vector.extract_strided_slice %287 {offsets = [0, 0], sizes = [8, 128], strides = [1, 1]} : vector<8x384xf32> to vector<8x128xf32>
    %289 = vector.extract_strided_slice %287 {offsets = [0, 128], sizes = [8, 128], strides = [1, 1]} : vector<8x384xf32> to vector<8x128xf32>
    %290 = vector.extract_strided_slice %287 {offsets = [0, 256], sizes = [8, 128], strides = [1, 1]} : vector<8x384xf32> to vector<8x128xf32>
    %291 = vector.extract_strided_slice %281 {offsets = [0, 384], sizes = [8, 128], strides = [1, 1]} : vector<8x512xf32> to vector<8x128xf32>
    %292 = math.tanh %291 : vector<8x128xf32>
    %293 = arith.mulf %289, %271 : vector<8x128xf32>
    %294 = arith.mulf %288, %292 : vector<8x128xf32>
    %295 = arith.addf %293, %294 : vector<8x128xf32>
    %296 = math.tanh %295 : vector<8x128xf32>
    %297 = arith.mulf %290, %296 : vector<8x128xf32>
    %298 = arith.truncf %297 : vector<8x128xf32> to vector<8x128xbf16>
    %c3_i32_98 = arith.constant 3 : i32
    %c8_i32_99 = arith.constant 8 : i32
    %299 = arith.muli %c3_i32_98, %c8_i32_99 : i32
    %300 = tpu.assume_multiple %299, 8 : i32
    %301 = arith.index_cast %300 : i32 to index
    %c0_100 = arith.constant 0 : index
    %302 = vector.load %arg12[%301, %c0_100] : memref<64x512xf32, #tpu.memory_space<vmem>>, vector<8x512xf32>
    %c0_101 = arith.constant 0 : index
    %c0_102 = arith.constant 0 : index
    %303 = vector.load %arg5[%c0_101, %c0_102] : memref<128x512xbf16, #tpu.memory_space<vmem>>, vector<128x512xbf16>
    %cst_103 = arith.constant dense<0.000000e+00> : vector<8x512xf32>
    %304 = tpu.matmul %298, %303, %cst_103 {dimension_numbers = #tpu.dot_dimension_numbers<[1], [0], [0], [1], [0, 0, 1, 1], [], []>} : vector<8x128xbf16>, vector<128x512xbf16>, vector<8x512xf32> -> vector<8x512xf32>
    %305 = arith.addf %302, %304 : vector<8x512xf32>
    %306 = vector.extract_strided_slice %305 {offsets = [0, 0], sizes = [8, 384], strides = [1, 1]} : vector<8x512xf32> to vector<8x384xf32>
    %307 = arith.negf %306 : vector<8x384xf32>
    %308 = math.exp %307 : vector<8x384xf32>
    %cst_104 = arith.constant 1.000000e+00 : f32
    %309 = vector.broadcast %cst_104 : f32 to vector<8x384xf32>
    %310 = arith.addf %309, %308 : vector<8x384xf32>
    %311 = arith.divf %309, %310 : vector<8x384xf32>
    %312 = vector.extract_strided_slice %311 {offsets = [0, 0], sizes = [8, 128], strides = [1, 1]} : vector<8x384xf32> to vector<8x128xf32>
    %313 = vector.extract_strided_slice %311 {offsets = [0, 128], sizes = [8, 128], strides = [1, 1]} : vector<8x384xf32> to vector<8x128xf32>
    %314 = vector.extract_strided_slice %311 {offsets = [0, 256], sizes = [8, 128], strides = [1, 1]} : vector<8x384xf32> to vector<8x128xf32>
    %315 = vector.extract_strided_slice %305 {offsets = [0, 384], sizes = [8, 128], strides = [1, 1]} : vector<8x512xf32> to vector<8x128xf32>
    %316 = math.tanh %315 : vector<8x128xf32>
    %317 = arith.mulf %313, %295 : vector<8x128xf32>
    %318 = arith.mulf %312, %316 : vector<8x128xf32>
    %319 = arith.addf %317, %318 : vector<8x128xf32>
    %320 = math.tanh %319 : vector<8x128xf32>
    %321 = arith.mulf %314, %320 : vector<8x128xf32>
    %322 = arith.truncf %321 : vector<8x128xf32> to vector<8x128xbf16>
    %c4_i32_105 = arith.constant 4 : i32
    %c8_i32_106 = arith.constant 8 : i32
    %323 = arith.muli %c4_i32_105, %c8_i32_106 : i32
    %324 = tpu.assume_multiple %323, 8 : i32
    %325 = arith.index_cast %324 : i32 to index
    %c0_107 = arith.constant 0 : index
    %326 = vector.load %arg12[%325, %c0_107] : memref<64x512xf32, #tpu.memory_space<vmem>>, vector<8x512xf32>
    %c0_108 = arith.constant 0 : index
    %c0_109 = arith.constant 0 : index
    %327 = vector.load %arg5[%c0_108, %c0_109] : memref<128x512xbf16, #tpu.memory_space<vmem>>, vector<128x512xbf16>
    %cst_110 = arith.constant dense<0.000000e+00> : vector<8x512xf32>
    %328 = tpu.matmul %322, %327, %cst_110 {dimension_numbers = #tpu.dot_dimension_numbers<[1], [0], [0], [1], [0, 0, 1, 1], [], []>} : vector<8x128xbf16>, vector<128x512xbf16>, vector<8x512xf32> -> vector<8x512xf32>
    %329 = arith.addf %326, %328 : vector<8x512xf32>
    %330 = vector.extract_strided_slice %329 {offsets = [0, 0], sizes = [8, 384], strides = [1, 1]} : vector<8x512xf32> to vector<8x384xf32>
    %331 = arith.negf %330 : vector<8x384xf32>
    %332 = math.exp %331 : vector<8x384xf32>
    %cst_111 = arith.constant 1.000000e+00 : f32
    %333 = vector.broadcast %cst_111 : f32 to vector<8x384xf32>
    %334 = arith.addf %333, %332 : vector<8x384xf32>
    %335 = arith.divf %333, %334 : vector<8x384xf32>
    %336 = vector.extract_strided_slice %335 {offsets = [0, 0], sizes = [8, 128], strides = [1, 1]} : vector<8x384xf32> to vector<8x128xf32>
    %337 = vector.extract_strided_slice %335 {offsets = [0, 128], sizes = [8, 128], strides = [1, 1]} : vector<8x384xf32> to vector<8x128xf32>
    %338 = vector.extract_strided_slice %335 {offsets = [0, 256], sizes = [8, 128], strides = [1, 1]} : vector<8x384xf32> to vector<8x128xf32>
    %339 = vector.extract_strided_slice %329 {offsets = [0, 384], sizes = [8, 128], strides = [1, 1]} : vector<8x512xf32> to vector<8x128xf32>
    %340 = math.tanh %339 : vector<8x128xf32>
    %341 = arith.mulf %337, %319 : vector<8x128xf32>
    %342 = arith.mulf %336, %340 : vector<8x128xf32>
    %343 = arith.addf %341, %342 : vector<8x128xf32>
    %344 = math.tanh %343 : vector<8x128xf32>
    %345 = arith.mulf %338, %344 : vector<8x128xf32>
    %346 = arith.truncf %345 : vector<8x128xf32> to vector<8x128xbf16>
    %c5_i32_112 = arith.constant 5 : i32
    %c8_i32_113 = arith.constant 8 : i32
    %347 = arith.muli %c5_i32_112, %c8_i32_113 : i32
    %348 = tpu.assume_multiple %347, 8 : i32
    %349 = arith.index_cast %348 : i32 to index
    %c0_114 = arith.constant 0 : index
    %350 = vector.load %arg12[%349, %c0_114] : memref<64x512xf32, #tpu.memory_space<vmem>>, vector<8x512xf32>
    %c0_115 = arith.constant 0 : index
    %c0_116 = arith.constant 0 : index
    %351 = vector.load %arg5[%c0_115, %c0_116] : memref<128x512xbf16, #tpu.memory_space<vmem>>, vector<128x512xbf16>
    %cst_117 = arith.constant dense<0.000000e+00> : vector<8x512xf32>
    %352 = tpu.matmul %346, %351, %cst_117 {dimension_numbers = #tpu.dot_dimension_numbers<[1], [0], [0], [1], [0, 0, 1, 1], [], []>} : vector<8x128xbf16>, vector<128x512xbf16>, vector<8x512xf32> -> vector<8x512xf32>
    %353 = arith.addf %350, %352 : vector<8x512xf32>
    %354 = vector.extract_strided_slice %353 {offsets = [0, 0], sizes = [8, 384], strides = [1, 1]} : vector<8x512xf32> to vector<8x384xf32>
    %355 = arith.negf %354 : vector<8x384xf32>
    %356 = math.exp %355 : vector<8x384xf32>
    %cst_118 = arith.constant 1.000000e+00 : f32
    %357 = vector.broadcast %cst_118 : f32 to vector<8x384xf32>
    %358 = arith.addf %357, %356 : vector<8x384xf32>
    %359 = arith.divf %357, %358 : vector<8x384xf32>
    %360 = vector.extract_strided_slice %359 {offsets = [0, 0], sizes = [8, 128], strides = [1, 1]} : vector<8x384xf32> to vector<8x128xf32>
    %361 = vector.extract_strided_slice %359 {offsets = [0, 128], sizes = [8, 128], strides = [1, 1]} : vector<8x384xf32> to vector<8x128xf32>
    %362 = vector.extract_strided_slice %359 {offsets = [0, 256], sizes = [8, 128], strides = [1, 1]} : vector<8x384xf32> to vector<8x128xf32>
    %363 = vector.extract_strided_slice %353 {offsets = [0, 384], sizes = [8, 128], strides = [1, 1]} : vector<8x512xf32> to vector<8x128xf32>
    %364 = math.tanh %363 : vector<8x128xf32>
    %365 = arith.mulf %361, %343 : vector<8x128xf32>
    %366 = arith.mulf %360, %364 : vector<8x128xf32>
    %367 = arith.addf %365, %366 : vector<8x128xf32>
    %368 = math.tanh %367 : vector<8x128xf32>
    %369 = arith.mulf %362, %368 : vector<8x128xf32>
    %370 = arith.truncf %369 : vector<8x128xf32> to vector<8x128xbf16>
    %c6_i32_119 = arith.constant 6 : i32
    %c8_i32_120 = arith.constant 8 : i32
    %371 = arith.muli %c6_i32_119, %c8_i32_120 : i32
    %372 = tpu.assume_multiple %371, 8 : i32
    %373 = arith.index_cast %372 : i32 to index
    %c0_121 = arith.constant 0 : index
    %374 = vector.load %arg12[%373, %c0_121] : memref<64x512xf32, #tpu.memory_space<vmem>>, vector<8x512xf32>
    %c0_122 = arith.constant 0 : index
    %c0_123 = arith.constant 0 : index
    %375 = vector.load %arg5[%c0_122, %c0_123] : memref<128x512xbf16, #tpu.memory_space<vmem>>, vector<128x512xbf16>
    %cst_124 = arith.constant dense<0.000000e+00> : vector<8x512xf32>
    %376 = tpu.matmul %370, %375, %cst_124 {dimension_numbers = #tpu.dot_dimension_numbers<[1], [0], [0], [1], [0, 0, 1, 1], [], []>} : vector<8x128xbf16>, vector<128x512xbf16>, vector<8x512xf32> -> vector<8x512xf32>
    %377 = arith.addf %374, %376 : vector<8x512xf32>
    %378 = vector.extract_strided_slice %377 {offsets = [0, 0], sizes = [8, 384], strides = [1, 1]} : vector<8x512xf32> to vector<8x384xf32>
    %379 = arith.negf %378 : vector<8x384xf32>
    %380 = math.exp %379 : vector<8x384xf32>
    %cst_125 = arith.constant 1.000000e+00 : f32
    %381 = vector.broadcast %cst_125 : f32 to vector<8x384xf32>
    %382 = arith.addf %381, %380 : vector<8x384xf32>
    %383 = arith.divf %381, %382 : vector<8x384xf32>
    %384 = vector.extract_strided_slice %383 {offsets = [0, 0], sizes = [8, 128], strides = [1, 1]} : vector<8x384xf32> to vector<8x128xf32>
    %385 = vector.extract_strided_slice %383 {offsets = [0, 128], sizes = [8, 128], strides = [1, 1]} : vector<8x384xf32> to vector<8x128xf32>
    %386 = vector.extract_strided_slice %383 {offsets = [0, 256], sizes = [8, 128], strides = [1, 1]} : vector<8x384xf32> to vector<8x128xf32>
    %387 = vector.extract_strided_slice %377 {offsets = [0, 384], sizes = [8, 128], strides = [1, 1]} : vector<8x512xf32> to vector<8x128xf32>
    %388 = math.tanh %387 : vector<8x128xf32>
    %389 = arith.mulf %385, %367 : vector<8x128xf32>
    %390 = arith.mulf %384, %388 : vector<8x128xf32>
    %391 = arith.addf %389, %390 : vector<8x128xf32>
    %392 = math.tanh %391 : vector<8x128xf32>
    %393 = arith.mulf %386, %392 : vector<8x128xf32>
    %394 = arith.truncf %393 : vector<8x128xf32> to vector<8x128xbf16>
    %c7_i32_126 = arith.constant 7 : i32
    %c8_i32_127 = arith.constant 8 : i32
    %395 = arith.muli %c7_i32_126, %c8_i32_127 : i32
    %396 = tpu.assume_multiple %395, 8 : i32
    %397 = arith.index_cast %396 : i32 to index
    %c0_128 = arith.constant 0 : index
    %398 = vector.load %arg12[%397, %c0_128] : memref<64x512xf32, #tpu.memory_space<vmem>>, vector<8x512xf32>
    %c0_129 = arith.constant 0 : index
    %c0_130 = arith.constant 0 : index
    %399 = vector.load %arg5[%c0_129, %c0_130] : memref<128x512xbf16, #tpu.memory_space<vmem>>, vector<128x512xbf16>
    %cst_131 = arith.constant dense<0.000000e+00> : vector<8x512xf32>
    %400 = tpu.matmul %394, %399, %cst_131 {dimension_numbers = #tpu.dot_dimension_numbers<[1], [0], [0], [1], [0, 0, 1, 1], [], []>} : vector<8x128xbf16>, vector<128x512xbf16>, vector<8x512xf32> -> vector<8x512xf32>
    %401 = arith.addf %398, %400 : vector<8x512xf32>
    %402 = vector.extract_strided_slice %401 {offsets = [0, 0], sizes = [8, 384], strides = [1, 1]} : vector<8x512xf32> to vector<8x384xf32>
    %403 = arith.negf %402 : vector<8x384xf32>
    %404 = math.exp %403 : vector<8x384xf32>
    %cst_132 = arith.constant 1.000000e+00 : f32
    %405 = vector.broadcast %cst_132 : f32 to vector<8x384xf32>
    %406 = arith.addf %405, %404 : vector<8x384xf32>
    %407 = arith.divf %405, %406 : vector<8x384xf32>
    %408 = vector.extract_strided_slice %407 {offsets = [0, 0], sizes = [8, 128], strides = [1, 1]} : vector<8x384xf32> to vector<8x128xf32>
    %409 = vector.extract_strided_slice %407 {offsets = [0, 128], sizes = [8, 128], strides = [1, 1]} : vector<8x384xf32> to vector<8x128xf32>
    %410 = vector.extract_strided_slice %407 {offsets = [0, 256], sizes = [8, 128], strides = [1, 1]} : vector<8x384xf32> to vector<8x128xf32>
    %411 = vector.extract_strided_slice %401 {offsets = [0, 384], sizes = [8, 128], strides = [1, 1]} : vector<8x512xf32> to vector<8x128xf32>
    %412 = math.tanh %411 : vector<8x128xf32>
    %413 = arith.mulf %409, %391 : vector<8x128xf32>
    %414 = arith.mulf %408, %412 : vector<8x128xf32>
    %415 = arith.addf %413, %414 : vector<8x128xf32>
    %416 = math.tanh %415 : vector<8x128xf32>
    %417 = arith.mulf %410, %416 : vector<8x128xf32>
    %418 = arith.truncf %417 : vector<8x128xf32> to vector<8x128xbf16>
    %c8_i32_133 = arith.constant 8 : i32
    %419 = arith.extf %418 : vector<8x128xbf16> to vector<8x128xf32>
    %c0_134 = arith.constant 0 : index
    %c0_135 = arith.constant 0 : index
    %420 = vector.load %arg8[%c0_134, %c0_135] : memref<1x128xf32, #tpu.memory_space<vmem>>, vector<1x128xf32>
    %421 = vector.broadcast %420 : vector<1x128xf32> to vector<8x128xf32>
    %422 = arith.mulf %419, %421 : vector<8x128xf32>
    %cst_136 = arith.constant dense<0.000000e+00> : vector<8xf32>
    %423 = vector.multi_reduction <add>, %422, %cst_136 [1] : vector<8x128xf32> to vector<8xf32>
    %424 = vector.shape_cast %423 : vector<8xf32> to vector<8x1xf32>
    %c0_137 = arith.constant 0 : index
    %c0_138 = arith.constant 0 : index
    %425 = vector.load %arg9[%c0_137, %c0_138] : memref<1x1xf32, #tpu.memory_space<vmem>>, vector<1x1xf32>
    %426 = vector.broadcast %425 : vector<1x1xf32> to vector<8x1xf32>
    %427 = arith.addf %424, %426 : vector<8x1xf32>
    %428 = arith.negf %427 : vector<8x1xf32>
    %429 = math.exp %428 : vector<8x1xf32>
    %cst_139 = arith.constant 1.000000e+00 : f32
    %430 = vector.broadcast %cst_139 : f32 to vector<8x1xf32>
    %431 = arith.addf %430, %429 : vector<8x1xf32>
    %432 = arith.divf %430, %431 : vector<8x1xf32>
    %c0_140 = arith.constant 0 : index
    %c0_141 = arith.constant 0 : index
    %c0_142 = arith.constant 0 : index
    %433 = vector.load %arg10[%c0_140, %c0_141, %c0_142] : memref<1x8x1xf32, #tpu.memory_space<vmem>>, vector<1x8x1xf32>
    %434 = vector.shape_cast %433 : vector<1x8x1xf32> to vector<8x1xf32>
    %435 = vector.shape_cast %432 : vector<8x1xf32> to vector<1x8x1xf32>
    tpu.vector_store %arg10[%c0_140, %c0_141, %c0_142], %435 {strides = array<i32>} : memref<1x8x1xf32, #tpu.memory_space<vmem>>, vector<1x8x1xf32>,
    return
  }
  func.func @transform_0(%arg0: i32) -> (i32, i32, i32) {
    %c0_i32 = arith.constant 0 : i32
    %c0_i32_0 = arith.constant 0 : i32
    %c0_i32_1 = arith.constant 0 : i32
    return %arg0, %c0_i32, %c0_i32_0 : i32, i32, i32
  }
  func.func @transform_1(%arg0: i32) -> (i32, i32) {
    %c0_i32 = arith.constant 0 : i32
    %c0_i32_0 = arith.constant 0 : i32
    %c0_i32_1 = arith.constant 0 : i32
    return %c0_i32, %c0_i32_0 : i32, i32
  }
  func.func @transform_2(%arg0: i32) -> (i32, i32) {
    %c0_i32 = arith.constant 0 : i32
    %c0_i32_0 = arith.constant 0 : i32
    %c0_i32_1 = arith.constant 0 : i32
    return %c0_i32, %c0_i32_0 : i32, i32
  }
  func.func @transform_3(%arg0: i32) -> (i32, i32) {
    %c0_i32 = arith.constant 0 : i32
    %c0_i32_0 = arith.constant 0 : i32
    %c0_i32_1 = arith.constant 0 : i32
    return %c0_i32, %c0_i32_0 : i32, i32
  }
  func.func @transform_4(%arg0: i32) -> (i32, i32) {
    %c0_i32 = arith.constant 0 : i32
    %c0_i32_0 = arith.constant 0 : i32
    %c0_i32_1 = arith.constant 0 : i32
    return %c0_i32, %c0_i32_0 : i32, i32
  }
  func.func @transform_5(%arg0: i32) -> (i32, i32) {
    %c0_i32 = arith.constant 0 : i32
    %c0_i32_0 = arith.constant 0 : i32
    %c0_i32_1 = arith.constant 0 : i32
    return %c0_i32, %c0_i32_0 : i32, i32
  }
  func.func @transform_6(%arg0: i32) -> (i32, i32) {
    %c0_i32 = arith.constant 0 : i32
    %c0_i32_0 = arith.constant 0 : i32
    %c0_i32_1 = arith.constant 0 : i32
    return %c0_i32, %c0_i32_0 : i32, i32
  }
  func.func @transform_7(%arg0: i32) -> (i32, i32) {
    %c0_i32 = arith.constant 0 : i32
    %c0_i32_0 = arith.constant 0 : i32
    %c0_i32_1 = arith.constant 0 : i32
    return %c0_i32, %c0_i32_0 : i32, i32
  }
  func.func @transform_8(%arg0: i32) -> (i32, i32) {
    %c0_i32 = arith.constant 0 : i32
    %c0_i32_0 = arith.constant 0 : i32
    %c0_i32_1 = arith.constant 0 : i32
    return %c0_i32, %c0_i32_0 : i32, i32
  }
  func.func @transform_9(%arg0: i32) -> (i32, i32, i32) {
    %c0_i32 = arith.constant 0 : i32
    %c0_i32_0 = arith.constant 0 : i32
    %c0_i32_1 = arith.constant 0 : i32
    return %arg0, %c0_i32, %c0_i32_0 : i32, i32, i32
  }
}

</mosaic_0001>

<llo_original>
// kernel: tpu_custom_call.1
$region0: #{tpu_custom_call.1}
  #allocation0 [shape = 'u32[]', space=smem, size = 0x4, offset = 0x4, fixed_abs, tag = 'smem constant byte address 0x4 - core index']
  #allocation1 [shape = 'u32[72,128]{1,0:T(1,128)}', space=vmem, size = 0x9000, scoped, tag = 'internal scratch']
  #allocation2 [shape = 'bf16[64,128]{1,0:T(8,128)(2,1)}', space=vmem, size = 0x4000, scoped, tag = 'scratch operand']
  #allocation3 [shape = 'f32[64,512]{1,0:T(8,128)}', space=vmem, size = 0x20000, scoped, tag = 'scratch operand']
  #allocation4 [shape = 'f32[1,1]{1,0:T(1,128)S(1)}', space=vmem, size = 0x200, scoped, tag = 'scoped memory for tpu_custom_call.1']
  %s0 = inlined_call_operand.vmem [shape: bf16[1,64,16], index: 0, kind: input, shape index: {}]
  %s1 = inlined_call_operand.vmem [shape: bf16[16,512], index: 1, kind: input, shape index: {}]
  %s2 = inlined_call_operand.hbm [shape: bf16[128,512], index: 2, kind: input, shape index: {}]
  %s3 = inlined_call_operand.hbm [shape: bf16[128,512], index: 3, kind: input, shape index: {}]
  %s4 = inlined_call_operand.hbm [shape: bf16[128,512], index: 4, kind: input, shape index: {}]
  %s5 = inlined_call_operand.vmem [shape: f32[1,512], index: 5, kind: input, shape index: {}]
  %s6 = inlined_call_operand.vmem [shape: f32[1,512], index: 6, kind: input, shape index: {}]
  %s7 = inlined_call_operand.vmem [shape: f32[1,128], index: 7, kind: input, shape index: {}]
  %s8 = inlined_call_operand.<no memory space> [shape: f32[1,1], index: 8, kind: input, shape index: {}]
  %s9 = inlined_call_operand.vmem [shape: f32[1,8,1], index: 9, kind: output, shape index: {}]
  %s10 = sld [smem:[#allocation0]]
  $region58: #{tpu_custom_call.1} parent=0
    _
  %s12 = ssub.s32 1, %s10
  %s13 = scalar_select 0, %s12, %s10
  %v14 = vstv %s8
  %15 = vst [vmem:[#allocation4] sm:$0x1] %v14
  $region1: #{tpu_custom_call.1} parent=0
    #allocation5 [shape = 'u8[131072]{0}', space=vmem, size = 0x20000, scoped, tag = 'input window, operand 2, single buffered']
    #allocation6 [shape = 's32[1]{0}', space=sflag, size = 0x4, scoped, tag = 'scoped memory for tpu_custom_call.1']
    #allocation7 [shape = 'u8[131072]{0}', space=vmem, size = 0x20000, scoped, tag = 'input window, operand 3, single buffered']
    #allocation8 [shape = 's32[1]{0}', space=sflag, size = 0x4, scoped, tag = 'scoped memory for tpu_custom_call.1']
    #allocation9 [shape = 'u8[131072]{0}', space=vmem, size = 0x20000, scoped, tag = 'input window, operand 4, single buffered']
    %16 = vsyncpa [#allocation6], 0
    %17 = vsyncpa [#allocation8], 0
    // Predicated region
    $region2: #{tpu_custom_call.1} parent=1 // pred_check
      _
    $region3: #{tpu_custom_call.1} parent=1 // pred_check_branch
      %19 = sbr.rel (0) target = $region5
    $region4: #{tpu_custom_call.1} parent=1 // pred_region
      _
    $region5: #{tpu_custom_call.1} parent=1 // pred_fallthru
      _
    // Predicated region
    $region6: #{tpu_custom_call.1} parent=1 // pred_check
      _
    $region7: #{tpu_custom_call.1} parent=1 // pred_check_branch
      %21 = sbr.rel (0) target = $region9
    $region8: #{tpu_custom_call.1} parent=1 // pred_region
      _
    $region9: #{tpu_custom_call.1} parent=1 // pred_fallthru
      _
    // Predicated region
    $region10: #{tpu_custom_call.1} parent=1 // pred_check
      _
    $region11: #{tpu_custom_call.1} parent=1 // pred_check_branch
      %23 = sbr.rel (0) target = $region13
    $region12: #{tpu_custom_call.1} parent=1 // pred_region
      %25 = vsyncadd [#allocation6], 0
      %s26 = sshll.u32 %s2, 4
      %s27 = int_to_ptr.hbm [resolvable:$true] %s26
      %s28 = sshll.u32 [#allocation5], 4
      %s29 = int_to_ptr.vmem [resolvable:$true] %s28
      %34 = dma.hbm_to_vmem [thread:$0]  %s27, 4096, %s29, [#allocation6], 256, 256, 16
    $region13: #{tpu_custom_call.1} parent=1 // pred_fallthru
      _
    // Predicated region
    $region14: #{tpu_custom_call.1} parent=1 // pred_check
      _
    $region15: #{tpu_custom_call.1} parent=1 // pred_check_branch
      %36 = sbr.rel (0) target = $region17
    $region16: #{tpu_custom_call.1} parent=1 // pred_region
      %38 = vsyncadd [#allocation8], 0
      %s39 = sshll.u32 %s3, 4
      %s40 = int_to_ptr.hbm [resolvable:$true] %s39
      %s41 = sshll.u32 [#allocation7], 4
      %s42 = int_to_ptr.vmem [resolvable:$true] %s41
      %47 = dma.hbm_to_vmem [thread:$0]  %s40, 4096, %s42, [#allocation8], 256, 256, 16
    $region17: #{tpu_custom_call.1} parent=1 // pred_fallthru
      _
    // Predicated region
    $region18: #{tpu_custom_call.1} parent=1 // pred_check
      _
    $region19: #{tpu_custom_call.1} parent=1 // pred_check_branch
      %49 = sbr.rel (0) target = $region21
    $region20: #{tpu_custom_call.1} parent=1 // pred_region
      %51 = vsyncadd [#allocation8], 0
      %s52 = sshll.u32 %s4, 4
      %s53 = int_to_ptr.hbm [resolvable:$true] %s52
      %s54 = sshll.u32 [#allocation9], 4
      %s55 = int_to_ptr.vmem [resolvable:$true] %s54
      %60 = dma.hbm_to_vmem [thread:$0]  %s53, 4096, %s55, [#allocation8], 256, 256, 16
    $region21: #{tpu_custom_call.1} parent=1 // pred_fallthru
      _
    // Predicated region
    $region22: #{tpu_custom_call.1} parent=1 // pred_check
      _
    $region23: #{tpu_custom_call.1} parent=1 // pred_check_branch
      %62 = sbr.rel (0) target = $region25
    $region24: #{tpu_custom_call.1} parent=1 // pred_region
      _
    $region25: #{tpu_custom_call.1} parent=1 // pred_fallthru
      _
    // Predicated region
    $region26: #{tpu_custom_call.1} parent=1 // pred_check
      _
    $region27: #{tpu_custom_call.1} parent=1 // pred_check_branch
      %64 = sbr.rel (0) target = $region29
    $region28: #{tpu_custom_call.1} parent=1 // pred_region
      _
    $region29: #{tpu_custom_call.1} parent=1 // pred_fallthru
      _
    // Predicated region
    $region30: #{tpu_custom_call.1} parent=1 // pred_check
      _
    $region31: #{tpu_custom_call.1} parent=1 // pred_check_branch
      %66 = sbr.rel (0) target = $region33
    $region32: #{tpu_custom_call.1} parent=1 // pred_region
      _
    $region33: #{tpu_custom_call.1} parent=1 // pred_fallthru
      _
    // Predicated region
    $region34: #{tpu_custom_call.1} parent=1 // pred_check
      _
    $region35: #{tpu_custom_call.1} parent=1 // pred_check_branch
      %68 = sbr.rel (0) target = $region37
    $region36: #{tpu_custom_call.1} parent=1 // pred_region
      _
    $region37: #{tpu_custom_call.1} parent=1 // pred_fallthru
      _
    // Predicated region
    $region38: #{tpu_custom_call.1} parent=1 // pred_check
      _
    $region39: #{tpu_custom_call.1} parent=1 // pred_check_branch
      %70 = sbr.rel (0) target = $region41
    $region40: #{tpu_custom_call.1} parent=1 // pred_region
      %72 = dma.done [#allocation6], 4096
    $region41: #{tpu_custom_call.1} parent=1 // pred_fallthru
      _
    // Predicated region
    $region42: #{tpu_custom_call.1} parent=1 // pred_check
      _
    $region43: #{tpu_custom_call.1} parent=1 // pred_check_branch
      %74 = sbr.rel (0) target = $region45
    $region44: #{tpu_custom_call.1} parent=1 // pred_region
      %76 = dma.done [#allocation8], 4096
    $region45: #{tpu_custom_call.1} parent=1 // pred_fallthru
      _
    // Predicated region
    $region46: #{tpu_custom_call.1} parent=1 // pred_check
      _
    $region47: #{tpu_custom_call.1} parent=1 // pred_check_branch
      %78 = sbr.rel (0) target = $region49
    $region48: #{tpu_custom_call.1} parent=1 // pred_region
      %80 = dma.done [#allocation8], 4096
    $region49: #{tpu_custom_call.1} parent=1 // pred_fallthru
      _
    %v82 = vld [vmem:[%s0] sm:$0xf]
    %v83 = vld [vmem:[%s0 + $0x4] sm:$0xf]
    %v84 = vld [vmem:[%s0 + $0x8] sm:$0xf]
    %v85 = vld [vmem:[%s0 + $0xc] sm:$0xf]
    %v86 = vld [vmem:[%s0 + $0x10] sm:$0xf]
    %v87 = vld [vmem:[%s0 + $0x14] sm:$0xf]
    %v88 = vld [vmem:[%s0 + $0x18] sm:$0xf]
    %v89 = vld [vmem:[%s0 + $0x1c] sm:$0xf]
    %v90 = vld [vmem:[%s1] sm:$0xff]
    %v91 = vld [vmem:[%s1 + $0x8] sm:$0xff]
    %v92 = vld [vmem:[%s1 + $0x10] sm:$0xff]
    %v93 = vld [vmem:[%s1 + $0x18] sm:$0xff]
    %v94 = vld [vmem:[%s5] sm:$0xf]
    %v96 = vperm.slane %v94, 0
    %v97 = vperm.slane %v94, 1
    %v98 = vperm.slane %v94, 2
    %v99 = vperm.slane %v94, 3
    %v112 = vunpack.c.l.b16 %v82
    %v113 = vunpack.c.l.b16 %v83
    %v114 = vunpack.c.l.b16 %v84
    %v115 = vunpack.c.l.b16 %v85
    %v116 = vunpack.c.l.b16 %v86
    %v117 = vunpack.c.l.b16 %v87
    %v118 = vunpack.c.l.b16 %v88
    %v119 = vunpack.c.l.b16 %v89
    %v120 = vpack.c.b16 %v113, %v112
    %v121 = vpack.c.b16 %v115, %v114
    %v122 = vpack.c.b16 %v117, %v116
    %v123 = vpack.c.b16 %v119, %v118
    %v128 = vunpack.c.l.b16 %v90
    %v129 = vunpack.c.h.b16 %v90
    %v130 = vunpack.c.l.b16 %v91
    %v131 = vunpack.c.h.b16 %v91
    %v132 = vunpack.c.l.b16 %v92
    %v133 = vunpack.c.h.b16 %v92
    %v134 = vunpack.c.l.b16 %v93
    %v135 = vunpack.c.h.b16 %v93
    %v136 = vpack.c.b16 %v132, %v128
    %v137 = vpack.c.b16 %v133, %v129
    %v138 = vpack.c.b16 %v134, %v130
    %v139 = vpack.c.b16 %v135, %v131
    %vm144 = vcmask 130048
    %v146 = vsel %vm144, %v120, 0
    %v149 = vsel %vm144, %v121, 0
    %v152 = vsel %vm144, %v122, 0
    %v155 = vsel %vm144, %v123, 0
    %157 = vmatpush.bf16.msra.mxu0 0
    %158 = vmatpush.bf16.msra.mxu0 0
    %159 = vmatpush.bf16.msra.mxu0 0
    %160 = vmatpush.bf16.msra.mxu0 0
    %161 = vmatpush.bf16.msra.mxu0 0
    %162 = vmatpush.bf16.msra.mxu0 0
    %163 = vmatpush.bf16.msra.mxu0 0
    %164 = vmatpush.bf16.msra.mxu0 %v136
    %165 = vmatmul.bf16.gmra.mxu0 %v146
    %v166 = vpop.f32.mrf.mxu0
    %v167 = vadd.f32 %v96, %v166
    %v168 = vpop.f32.mrf.mxu0
    %v169 = vadd.f32 %v96, %v168
    %170 = vmatmul.bf16.gmra.mxu0 %v149
    %v171 = vpop.f32.mrf.mxu0
    %v172 = vadd.f32 %v96, %v171
    %v173 = vpop.f32.mrf.mxu0
    %v174 = vadd.f32 %v96, %v173
    %175 = vmatmul.bf16.gmra.mxu0 %v152
    %v176 = vpop.f32.mrf.mxu0
    %v177 = vadd.f32 %v96, %v176
    %v178 = vpop.f32.mrf.mxu0
    %v179 = vadd.f32 %v96, %v178
    %180 = vmatmul.bf16.gmra.mxu0 %v155
    %v181 = vpop.f32.mrf.mxu0
    %v182 = vadd.f32 %v96, %v181
    %v183 = vpop.f32.mrf.mxu0
    %v184 = vadd.f32 %v96, %v183
    %185 = vdwg.mxu0
    %186 = vmatpush.bf16.msra.mxu0 0
    %187 = vmatpush.bf16.msra.mxu0 0
    %188 = vmatpush.bf16.msra.mxu0 0
    %189 = vmatpush.bf16.msra.mxu0 0
    %190 = vmatpush.bf16.msra.mxu0 0
    %191 = vmatpush.bf16.msra.mxu0 0
    %192 = vmatpush.bf16.msra.mxu0 0
    %193 = vmatpush.bf16.msra.mxu0 %v137
    %194 = vmatmul.bf16.gmra.mxu0 %v146
    %v195 = vpop.f32.mrf.mxu0
    %v196 = vadd.f32 %v97, %v195
    %v197 = vpop.f32.mrf.mxu0
    %v198 = vadd.f32 %v97, %v197
    %199 = vmatmul.bf16.gmra.mxu0 %v149
    %v200 = vpop.f32.mrf.mxu0
    %v201 = vadd.f32 %v97, %v200
    %v202 = vpop.f32.mrf.mxu0
    %v203 = vadd.f32 %v97, %v202
    %204 = vmatmul.bf16.gmra.mxu0 %v152
    %v205 = vpop.f32.mrf.mxu0
    %v206 = vadd.f32 %v97, %v205
    %v207 = vpop.f32.mrf.mxu0
    %v208 = vadd.f32 %v97, %v207
    %209 = vmatmul.bf16.gmra.mxu0 %v155
    %v210 = vpop.f32.mrf.mxu0
    %v211 = vadd.f32 %v97, %v210
    %v212 = vpop.f32.mrf.mxu0
    %v213 = vadd.f32 %v97, %v212
    %214 = vdwg.mxu0
    %215 = vmatpush.bf16.msra.mxu0 0
    %216 = vmatpush.bf16.msra.mxu0 0
    %217 = vmatpush.bf16.msra.mxu0 0
    %218 = vmatpush.bf16.msra.mxu0 0
    %219 = vmatpush.bf16.msra.mxu0 0
    %220 = vmatpush.bf16.msra.mxu0 0
    %221 = vmatpush.bf16.msra.mxu0 0
    %222 = vmatpush.bf16.msra.mxu0 %v138
    %223 = vmatmul.bf16.gmra.mxu0 %v146
    %v224 = vpop.f32.mrf.mxu0
    %v225 = vadd.f32 %v98, %v224
    %v226 = vpop.f32.mrf.mxu0
    %v227 = vadd.f32 %v98, %v226
    %228 = vmatmul.bf16.gmra.mxu0 %v149
    %v229 = vpop.f32.mrf.mxu0
    %v230 = vadd.f32 %v98, %v229
    %v231 = vpop.f32.mrf.mxu0
    %v232 = vadd.f32 %v98, %v231
    %233 = vmatmul.bf16.gmra.mxu0 %v152
    %v234 = vpop.f32.mrf.mxu0
    %v235 = vadd.f32 %v98, %v234
    %v236 = vpop.f32.mrf.mxu0
    %v237 = vadd.f32 %v98, %v236
    %238 = vmatmul.bf16.gmra.mxu0 %v155
    %v239 = vpop.f32.mrf.mxu0
    %v240 = vadd.f32 %v98, %v239
    %v241 = vpop.f32.mrf.mxu0
    %v242 = vadd.f32 %v98, %v241
    %243 = vdwg.mxu0
    %244 = vmatpush.bf16.msra.mxu0 0
    %245 = vmatpush.bf16.msra.mxu0 0
    %246 = vmatpush.bf16.msra.mxu0 0
    %247 = vmatpush.bf16.msra.mxu0 0
    %248 = vmatpush.bf16.msra.mxu0 0
    %249 = vmatpush.bf16.msra.mxu0 0
    %250 = vmatpush.bf16.msra.mxu0 0
    %251 = vmatpush.bf16.msra.mxu0 %v139
    %252 = vmatmul.bf16.gmra.mxu0 %v146
    %v253 = vpop.f32.mrf.mxu0
    %v254 = vadd.f32 %v99, %v253
    %v255 = vpop.f32.mrf.mxu0
    %v256 = vadd.f32 %v99, %v255
    %257 = vmatmul.bf16.gmra.mxu0 %v149
    %v258 = vpop.f32.mrf.mxu0
    %v259 = vadd.f32 %v99, %v258
    %v260 = vpop.f32.mrf.mxu0
    %v261 = vadd.f32 %v99, %v260
    %262 = vmatmul.bf16.gmra.mxu0 %v152
    %v263 = vpop.f32.mrf.mxu0
    %v264 = vadd.f32 %v99, %v263
    %v265 = vpop.f32.mrf.mxu0
    %v266 = vadd.f32 %v99, %v265
    %267 = vmatmul.bf16.gmra.mxu0 %v155
    %v268 = vpop.f32.mrf.mxu0
    %v269 = vadd.f32 %v99, %v268
    %v270 = vpop.f32.mrf.mxu0
    %v271 = vadd.f32 %v99, %v270
    %272 = vdwg.mxu0
    %273 = vst [vmem:[#allocation3] sm:$0xff] %v167
    %274 = vst [vmem:[#allocation3 + $0x8] sm:$0xff] %v196
    %275 = vst [vmem:[#allocation3 + $0x10] sm:$0xff] %v225
    %276 = vst [vmem:[#allocation3 + $0x18] sm:$0xff] %v254
    %277 = vst [vmem:[#allocation3 + $0x20] sm:$0xff] %v169
    %278 = vst [vmem:[#allocation3 + $0x28] sm:$0xff] %v198
    %279 = vst [vmem:[#allocation3 + $0x30] sm:$0xff] %v227
    %280 = vst [vmem:[#allocation3 + $0x38] sm:$0xff] %v256
    %281 = vst [vmem:[#allocation3 + $0x40] sm:$0xff] %v172
    %282 = vst [vmem:[#allocation3 + $0x48] sm:$0xff] %v201
    %283 = vst [vmem:[#allocation3 + $0x50] sm:$0xff] %v230
    %284 = vst [vmem:[#allocation3 + $0x58] sm:$0xff] %v259
    %285 = vst [vmem:[#allocation3 + $0x60] sm:$0xff] %v174
    %286 = vst [vmem:[#allocation3 + $0x68] sm:$0xff] %v203
    %287 = vst [vmem:[#allocation3 + $0x70] sm:$0xff] %v232
    %288 = vst [vmem:[#allocation3 + $0x78] sm:$0xff] %v261
    %289 = vst [vmem:[#allocation3 + $0x80] sm:$0xff] %v177
    %290 = vst [vmem:[#allocation3 + $0x88] sm:$0xff] %v206
    %291 = vst [vmem:[#allocation3 + $0x90] sm:$0xff] %v235
    %292 = vst [vmem:[#allocation3 + $0x98] sm:$0xff] %v264
    %293 = vst [vmem:[#allocation3 + $0xa0] sm:$0xff] %v179
    %294 = vst [vmem:[#allocation3 + $0xa8] sm:$0xff] %v208
    %295 = vst [vmem:[#allocation3 + $0xb0] sm:$0xff] %v237
    %296 = vst [vmem:[#allocation3 + $0xb8] sm:$0xff] %v266
    %297 = vst [vmem:[#allocation3 + $0xc0] sm:$0xff] %v182
    %298 = vst [vmem:[#allocation3 + $0xc8] sm:$0xff] %v211
    %299 = vst [vmem:[#allocation3 + $0xd0] sm:$0xff] %v240
    %300 = vst [vmem:[#allocation3 + $0xd8] sm:$0xff] %v269
    %301 = vst [vmem:[#allocation3 + $0xe0] sm:$0xff] %v184
    %302 = vst [vmem:[#allocation3 + $0xe8] sm:$0xff] %v213
    %303 = vst [vmem:[#allocation3 + $0xf0] sm:$0xff] %v242
    %304 = vst [vmem:[#allocation3 + $0xf8] sm:$0xff] %v271
    %s305 = smul.u32 0, 4
    %s306 = smul.addr %s305, 8
    %s307 = scalar_lea.vmem [#allocation3], %s306
    %v308 = vld [vmem:[%s307] sm:$0xff]
    %v309 = vld [vmem:[%s307 + $0x8] sm:$0xff]
    %v310 = vld [vmem:[%s307 + $0x10] sm:$0xff]
    %v311 = vld [vmem:[%s307 + $0x18] sm:$0xff]
    %v312 = vld [vmem:[#allocation7] sm:$0xff]
    %v313 = vld [vmem:[#allocation7 + $0x8] sm:$0xff]
    %v314 = vld [vmem:[#allocation7 + $0x10] sm:$0xff]
    %v315 = vld [vmem:[#allocation7 + $0x18] sm:$0xff]
    %v316 = vld [vmem:[#allocation7 + $0x20] sm:$0xff]
    %v317 = vld [vmem:[#allocation7 + $0x28] sm:$0xff]
    %v318 = vld [vmem:[#allocation7 + $0x30] sm:$0xff]
    %v319 = vld [vmem:[#allocation7 + $0x38] sm:$0xff]
    %v320 = vld [vmem:[#allocation7 + $0x40] sm:$0xff]
    %v321 = vld [vmem:[#allocation7 + $0x48] sm:$0xff]
    %v322 = vld [vmem:[#allocation7 + $0x50] sm:$0xff]
    %v323 = vld [vmem:[#allocation7 + $0x58] sm:$0xff]
    %v324 = vld [vmem:[#allocation7 + $0x60] sm:$0xff]
    %v325 = vld [vmem:[#allocation7 + $0x68] sm:$0xff]
    %v326 = vld [vmem:[#allocation7 + $0x70] sm:$0xff]
    %v327 = vld [vmem:[#allocation7 + $0x78] sm:$0xff]
    %v328 = vld [vmem:[#allocation7 + $0x80] sm:$0xff]
    %v329 = vld [vmem:[#allocation7 + $0x88] sm:$0xff]
    %v330 = vld [vmem:[#allocation7 + $0x90] sm:$0xff]
    %v331 = vld [vmem:[#allocation7 + $0x98] sm:$0xff]
    %v332 = vld [vmem:[#allocation7 + $0xa0] sm:$0xff]
    %v333 = vld [vmem:[#allocation7 + $0xa8] sm:$0xff]
    %v334 = vld [vmem:[#allocation7 + $0xb0] sm:$0xff]
    %v335 = vld [vmem:[#allocation7 + $0xb8] sm:$0xff]
    %v336 = vld [vmem:[#allocation7 + $0xc0] sm:$0xff]
    %v337 = vld [vmem:[#allocation7 + $0xc8] sm:$0xff]
    %v338 = vld [vmem:[#allocation7 + $0xd0] sm:$0xff]
    %v339 = vld [vmem:[#allocation7 + $0xd8] sm:$0xff]
    %v340 = vld [vmem:[#allocation7 + $0xe0] sm:$0xff]
    %v341 = vld [vmem:[#allocation7 + $0xe8] sm:$0xff]
    %v342 = vld [vmem:[#allocation7 + $0xf0] sm:$0xff]
    %v343 = vld [vmem:[#allocation7 + $0xf8] sm:$0xff]
    %v376 = vunpack.c.l.b16 %v312
    %v377 = vunpack.c.h.b16 %v312
    %v378 = vunpack.c.l.b16 %v313
    %v379 = vunpack.c.h.b16 %v313
    %v380 = vunpack.c.l.b16 %v314
    %v381 = vunpack.c.h.b16 %v314
    %v382 = vunpack.c.l.b16 %v315
    %v383 = vunpack.c.h.b16 %v315
    %v384 = vunpack.c.l.b16 %v316
    %v385 = vunpack.c.h.b16 %v316
    %v386 = vunpack.c.l.b16 %v317
    %v387 = vunpack.c.h.b16 %v317
    %v388 = vunpack.c.l.b16 %v318
    %v389 = vunpack.c.h.b16 %v318
    %v390 = vunpack.c.l.b16 %v319
    %v391 = vunpack.c.h.b16 %v319
    %v392 = vunpack.c.l.b16 %v320
    %v393 = vunpack.c.h.b16 %v320
    %v394 = vunpack.c.l.b16 %v321
    %v395 = vunpack.c.h.b16 %v321
    %v396 = vunpack.c.l.b16 %v322
    %v397 = vunpack.c.h.b16 %v322
    %v398 = vunpack.c.l.b16 %v323
    %v399 = vunpack.c.h.b16 %v323
    %v400 = vunpack.c.l.b16 %v324
    %v401 = vunpack.c.h.b16 %v324
    %v402 = vunpack.c.l.b16 %v325
    %v403 = vunpack.c.h.b16 %v325
    %v404 = vunpack.c.l.b16 %v326
    %v405 = vunpack.c.h.b16 %v326
    %v406 = vunpack.c.l.b16 %v327
    %v407 = vunpack.c.h.b16 %v327
    %v408 = vunpack.c.l.b16 %v328
    %v409 = vunpack.c.h.b16 %v328
    %v410 = vunpack.c.l.b16 %v329
    %v411 = vunpack.c.h.b16 %v329
    %v412 = vunpack.c.l.b16 %v330
    %v413 = vunpack.c.h.b16 %v330
    %v414 = vunpack.c.l.b16 %v331
    %v415 = vunpack.c.h.b16 %v331
    %v416 = vunpack.c.l.b16 %v332
    %v417 = vunpack.c.h.b16 %v332
    %v418 = vunpack.c.l.b16 %v333
    %v419 = vunpack.c.h.b16 %v333
    %v420 = vunpack.c.l.b16 %v334
    %v421 = vunpack.c.h.b16 %v334
    %v422 = vunpack.c.l.b16 %v335
    %v423 = vunpack.c.h.b16 %v335
    %v424 = vunpack.c.l.b16 %v336
    %v425 = vunpack.c.h.b16 %v336
    %v426 = vunpack.c.l.b16 %v337
    %v427 = vunpack.c.h.b16 %v337
    %v428 = vunpack.c.l.b16 %v338
    %v429 = vunpack.c.h.b16 %v338
    %v430 = vunpack.c.l.b16 %v339
    %v431 = vunpack.c.h.b16 %v339
    %v432 = vunpack.c.l.b16 %v340
    %v433 = vunpack.c.h.b16 %v340
    %v434 = vunpack.c.l.b16 %v341
    %v435 = vunpack.c.h.b16 %v341
    %v436 = vunpack.c.l.b16 %v342
    %v437 = vunpack.c.h.b16 %v342
    %v438 = vunpack.c.l.b16 %v343
    %v439 = vunpack.c.h.b16 %v343
    %v440 = vpack.c.b16 %v380, %v376
    %v441 = vpack.c.b16 %v381, %v377
    %v442 = vpack.c.b16 %v382, %v378
    %v443 = vpack.c.b16 %v383, %v379
    %v444 = vpack.c.b16 %v388, %v384
    %v445 = vpack.c.b16 %v389, %v385
    %v446 = vpack.c.b16 %v390, %v386
    %v447 = vpack.c.b16 %v391, %v387
    %v448 = vpack.c.b16 %v396, %v392
    %v449 = vpack.c.b16 %v397, %v393
    %v450 = vpack.c.b16 %v398, %v394
    %v451 = vpack.c.b16 %v399, %v395
    %v452 = vpack.c.b16 %v404, %v400
    %v453 = vpack.c.b16 %v405, %v401
    %v454 = vpack.c.b16 %v406, %v402
    %v455 = vpack.c.b16 %v407, %v403
    %v456 = vpack.c.b16 %v412, %v408
    %v457 = vpack.c.b16 %v413, %v409
    %v458 = vpack.c.b16 %v414, %v410
    %v459 = vpack.c.b16 %v415, %v411
    %v460 = vpack.c.b16 %v420, %v416
    %v461 = vpack.c.b16 %v421, %v417
    %v462 = vpack.c.b16 %v422, %v418
    %v463 = vpack.c.b16 %v423, %v419
    %v464 = vpack.c.b16 %v428, %v424
    %v465 = vpack.c.b16 %v429, %v425
    %v466 = vpack.c.b16 %v430, %v426
    %v467 = vpack.c.b16 %v431, %v427
    %v468 = vpack.c.b16 %v436, %v432
    %v469 = vpack.c.b16 %v437, %v433
    %v470 = vpack.c.b16 %v438, %v434
    %v471 = vpack.c.b16 %v439, %v435
    %504 = vmatpush.bf16.msra.mxu0 %v468
    %505 = vmatpush.bf16.msra.mxu0 %v464
    %506 = vmatpush.bf16.msra.mxu0 %v460
    %507 = vmatpush.bf16.msra.mxu0 %v456
    %508 = vmatpush.bf16.msra.mxu0 %v452
    %509 = vmatpush.bf16.msra.mxu0 %v448
    %510 = vmatpush.bf16.msra.mxu0 %v444
    %511 = vmatpush.bf16.msra.mxu0 %v440
    %512 = vmatmul.bf16.gmra.mxu0 0
    %v513 = vpop.f32.mrf.mxu0
    %v514 = vadd.f32 0.0, %v513
    %v515 = vpop.f32.mrf.mxu0
    %516 = vdwg.mxu0
    %517 = vmatpush.bf16.msra.mxu0 %v469
    %518 = vmatpush.bf16.msra.mxu0 %v465
    %519 = vmatpush.bf16.msra.mxu0 %v461
    %520 = vmatpush.bf16.msra.mxu0 %v457
    %521 = vmatpush.bf16.msra.mxu0 %v453
    %522 = vmatpush.bf16.msra.mxu0 %v449
    %523 = vmatpush.bf16.msra.mxu0 %v445
    %524 = vmatpush.bf16.msra.mxu0 %v441
    %525 = vmatmul.bf16.gmra.mxu0 0
    %v526 = vpop.f32.mrf.mxu0
    %v527 = vadd.f32 0.0, %v526
    %v528 = vpop.f32.mrf.mxu0
    %529 = vdwg.mxu0
    %530 = vmatpush.bf16.msra.mxu0 %v470
    %531 = vmatpush.bf16.msra.mxu0 %v466
    %532 = vmatpush.bf16.msra.mxu0 %v462
    %533 = vmatpush.bf16.msra.mxu0 %v458
    %534 = vmatpush.bf16.msra.mxu0 %v454
    %535 = vmatpush.bf16.msra.mxu0 %v450
    %536 = vmatpush.bf16.msra.mxu0 %v446
    %537 = vmatpush.bf16.msra.mxu0 %v442
    %538 = vmatmul.bf16.gmra.mxu0 0
    %v539 = vpop.f32.mrf.mxu0
    %v540 = vadd.f32 0.0, %v539
    %v541 = vpop.f32.mrf.mxu0
    %542 = vdwg.mxu0
    %543 = vmatpush.bf16.msra.mxu0 %v471
    %544 = vmatpush.bf16.msra.mxu0 %v467
    %545 = vmatpush.bf16.msra.mxu0 %v463
    %546 = vmatpush.bf16.msra.mxu0 %v459
    %547 = vmatpush.bf16.msra.mxu0 %v455
    %548 = vmatpush.bf16.msra.mxu0 %v451
    %549 = vmatpush.bf16.msra.mxu0 %v447
    %550 = vmatpush.bf16.msra.mxu0 %v443
    %551 = vmatmul.bf16.gmra.mxu0 0
    %v552 = vpop.f32.mrf.mxu0
    %v553 = vadd.f32 0.0, %v552
    %v554 = vpop.f32.mrf.mxu0
    %555 = vdwg.mxu0
    %v556 = vadd.f32 %v308, %v514
    %v557 = vadd.f32 %v309, %v527
    %v558 = vadd.f32 %v310, %v540
    %v559 = vadd.f32 %v311, %v553
    %v560 = vxor.u32 %v556, 2147483648
    %v561 = vxor.u32 %v557, 2147483648
    %v562 = vxor.u32 %v558, 2147483648
    %v563 = vmul.f32 %v560, 1.442695
    %v564 = vpow.pop %v563
    %v565 = vmul.f32 %v561, 1.442695
    %v566 = vpow.pop %v565
    %v567 = vmul.f32 %v562, 1.442695
    %v568 = vpow.pop %v567
    %v569 = vadd.f32 %v564, 1.0
    %v570 = vadd.f32 %v566, 1.0
    %v571 = vadd.f32 %v568, 1.0
    %v572 = vrcp.pop %v569
    %v573 = vmul.f32 %v569, %v572
    %v574 = vsub.f32 1.0, %v573
    %v575 = vmul.f32 %v572, %v574
    %v576 = vadd.f32 %v572, %v575
    %vm577 = vweird.f32 %v569
    %vm578 = vweird.f32 %v572
    %vm579 = vmor %vm577, %vm578
    %v580 = vsel %vm579, %v572, %v576
    %v581 = vand.u32 2147483647, %v569
    %vm582 = vcmp.eq.f32.partialorder %v581, 8.507059e+37
    %v583 = vand.u32 %v569, 2147483648
    %v584 = vor.u32 1.1754944e-38, %v583
    %v585 = vsel %vm582, %v584, %v580
    %v586 = vmul.f32 1.0, %v585
    %v587 = vrcp.pop %v570
    %v588 = vmul.f32 %v570, %v587
    %v589 = vsub.f32 1.0, %v588
    %v590 = vmul.f32 %v587, %v589
    %v591 = vadd.f32 %v587, %v590
    %vm592 = vweird.f32 %v570
    %vm593 = vweird.f32 %v587
    %vm594 = vmor %vm592, %vm593
    %v595 = vsel %vm594, %v587, %v591
    %v596 = vand.u32 2147483647, %v570
    %vm597 = vcmp.eq.f32.partialorder %v596, 8.507059e+37
    %v598 = vand.u32 %v570, 2147483648
    %v599 = vor.u32 1.1754944e-38, %v598
    %v600 = vsel %vm597, %v599, %v595
    %v601 = vmul.f32 1.0, %v600
    %v602 = vrcp.pop %v571
    %v603 = vmul.f32 %v571, %v602
    %v604 = vsub.f32 1.0, %v603
    %v605 = vmul.f32 %v602, %v604
    %v606 = vadd.f32 %v602, %v605
    %vm607 = vweird.f32 %v571
    %vm608 = vweird.f32 %v602
    %vm609 = vmor %vm607, %vm608
    %v610 = vsel %vm609, %v602, %v606
    %v611 = vand.u32 2147483647, %v571
    %vm612 = vcmp.eq.f32.partialorder %v611, 8.507059e+37
    %v613 = vand.u32 %v571, 2147483648
    %v614 = vor.u32 1.1754944e-38, %v613
    %v615 = vsel %vm612, %v614, %v610
    %v616 = vmul.f32 1.0, %v615
    %v617 = vtanh.pop %v559
    %v618 = vmul.f32 %v601, 0.0
    %v619 = vmul.f32 %v586, %v617
    %v620 = vadd.f32 %v618, %v619
    %v621 = vtanh.pop %v620
    %v622 = vmul.f32 %v616, %v621
    %v623 = vpack.c.bf16 %v622, %v622
    %624 = vst [vmem:[#allocation2] sm:$0xf] %v623
    %s625 = smul.u32 1, 4
    %s626 = smul.addr %s625, 8
    %s627 = scalar_lea.vmem [#allocation3], %s626
    %v628 = vld [vmem:[%s627] sm:$0xff]
    %v629 = vld [vmem:[%s627 + $0x8] sm:$0xff]
    %v630 = vld [vmem:[%s627 + $0x10] sm:$0xff]
    %v631 = vld [vmem:[%s627 + $0x18] sm:$0xff]
    %v632 = vld [vmem:[#allocation7] sm:$0xff]
    %v633 = vld [vmem:[#allocation7 + $0x8] sm:$0xff]
    %v634 = vld [vmem:[#allocation7 + $0x10] sm:$0xff]
    %v635 = vld [vmem:[#allocation7 + $0x18] sm:$0xff]
    %v636 = vld [vmem:[#allocation7 + $0x20] sm:$0xff]
    %v637 = vld [vmem:[#allocation7 + $0x28] sm:$0xff]
    %v638 = vld [vmem:[#allocation7 + $0x30] sm:$0xff]
    %v639 = vld [vmem:[#allocation7 + $0x38] sm:$0xff]
    %v640 = vld [vmem:[#allocation7 + $0x40] sm:$0xff]
    %v641 = vld [vmem:[#allocation7 + $0x48] sm:$0xff]
    %v642 = vld [vmem:[#allocation7 + $0x50] sm:$0xff]
    %v643 = vld [vmem:[#allocation7 + $0x58] sm:$0xff]
    %v644 = vld [vmem:[#allocation7 + $0x60] sm:$0xff]
    %v645 = vld [vmem:[#allocation7 + $0x68] sm:$0xff]
    %v646 = vld [vmem:[#allocation7 + $0x70] sm:$0xff]
    %v647 = vld [vmem:[#allocation7 + $0x78] sm:$0xff]
    %v648 = vld [vmem:[#allocation7 + $0x80] sm:$0xff]
    %v649 = vld [vmem:[#allocation7 + $0x88] sm:$0xff]
    %v650 = vld [vmem:[#allocation7 + $0x90] sm:$0xff]
    %v651 = vld [vmem:[#allocation7 + $0x98] sm:$0xff]
    %v652 = vld [vmem:[#allocation7 + $0xa0] sm:$0xff]
    %v653 = vld [vmem:[#allocation7 + $0xa8] sm:$0xff]
    %v654 = vld [vmem:[#allocation7 + $0xb0] sm:$0xff]
    %v655 = vld [vmem:[#allocation7 + $0xb8] sm:$0xff]
    %v656 = vld [vmem:[#allocation7 + $0xc0] sm:$0xff]
    %v657 = vld [vmem:[#allocation7 + $0xc8] sm:$0xff]
    %v658 = vld [vmem:[#allocation7 + $0xd0] sm:$0xff]
    %v659 = vld [vmem:[#allocation7 + $0xd8] sm:$0xff]
    %v660 = vld [vmem:[#allocation7 + $0xe0] sm:$0xff]
    %v661 = vld [vmem:[#allocation7 + $0xe8] sm:$0xff]
    %v662 = vld [vmem:[#allocation7 + $0xf0] sm:$0xff]
    %v663 = vld [vmem:[#allocation7 + $0xf8] sm:$0xff]
    %v696 = vunpack.c.l.b16 %v632
    %v697 = vunpack.c.h.b16 %v632
    %v698 = vunpack.c.l.b16 %v633
    %v699 = vunpack.c.h.b16 %v633
    %v700 = vunpack.c.l.b16 %v634
    %v701 = vunpack.c.h.b16 %v634
    %v702 = vunpack.c.l.b16 %v635
    %v703 = vunpack.c.h.b16 %v635
    %v704 = vunpack.c.l.b16 %v636
    %v705 = vunpack.c.h.b16 %v636
    %v706 = vunpack.c.l.b16 %v637
    %v707 = vunpack.c.h.b16 %v637
    %v708 = vunpack.c.l.b16 %v638
    %v709 = vunpack.c.h.b16 %v638
    %v710 = vunpack.c.l.b16 %v639
    %v711 = vunpack.c.h.b16 %v639
    %v712 = vunpack.c.l.b16 %v640
    %v713 = vunpack.c.h.b16 %v640
    %v714 = vunpack.c.l.b16 %v641
    %v715 = vunpack.c.h.b16 %v641
    %v716 = vunpack.c.l.b16 %v642
    %v717 = vunpack.c.h.b16 %v642
    %v718 = vunpack.c.l.b16 %v643
    %v719 = vunpack.c.h.b16 %v643
    %v720 = vunpack.c.l.b16 %v644
    %v721 = vunpack.c.h.b16 %v644
    %v722 = vunpack.c.l.b16 %v645
    %v723 = vunpack.c.h.b16 %v645
    %v724 = vunpack.c.l.b16 %v646
    %v725 = vunpack.c.h.b16 %v646
    %v726 = vunpack.c.l.b16 %v647
    %v727 = vunpack.c.h.b16 %v647
    %v728 = vunpack.c.l.b16 %v648
    %v729 = vunpack.c.h.b16 %v648
    %v730 = vunpack.c.l.b16 %v649
    %v731 = vunpack.c.h.b16 %v649
    %v732 = vunpack.c.l.b16 %v650
    %v733 = vunpack.c.h.b16 %v650
    %v734 = vunpack.c.l.b16 %v651
    %v735 = vunpack.c.h.b16 %v651
    %v736 = vunpack.c.l.b16 %v652
    %v737 = vunpack.c.h.b16 %v652
    %v738 = vunpack.c.l.b16 %v653
    %v739 = vunpack.c.h.b16 %v653
    %v740 = vunpack.c.l.b16 %v654
    %v741 = vunpack.c.h.b16 %v654
    %v742 = vunpack.c.l.b16 %v655
    %v743 = vunpack.c.h.b16 %v655
    %v744 = vunpack.c.l.b16 %v656
    %v745 = vunpack.c.h.b16 %v656
    %v746 = vunpack.c.l.b16 %v657
    %v747 = vunpack.c.h.b16 %v657
    %v748 = vunpack.c.l.b16 %v658
    %v749 = vunpack.c.h.b16 %v658
    %v750 = vunpack.c.l.b16 %v659
    %v751 = vunpack.c.h.b16 %v659
    %v752 = vunpack.c.l.b16 %v660
    %v753 = vunpack.c.h.b16 %v660
    %v754 = vunpack.c.l.b16 %v661
    %v755 = vunpack.c.h.b16 %v661
    %v756 = vunpack.c.l.b16 %v662
    %v757 = vunpack.c.h.b16 %v662
    %v758 = vunpack.c.l.b16 %v663
    %v759 = vunpack.c.h.b16 %v663
    %v760 = vpack.c.b16 %v700, %v696
    %v761 = vpack.c.b16 %v701, %v697
    %v762 = vpack.c.b16 %v702, %v698
    %v763 = vpack.c.b16 %v703, %v699
    %v764 = vpack.c.b16 %v708, %v704
    %v765 = vpack.c.b16 %v709, %v705
    %v766 = vpack.c.b16 %v710, %v706
    %v767 = vpack.c.b16 %v711, %v707
    %v768 = vpack.c.b16 %v716, %v712
    %v769 = vpack.c.b16 %v717, %v713
    %v770 = vpack.c.b16 %v718, %v714
    %v771 = vpack.c.b16 %v719, %v715
    %v772 = vpack.c.b16 %v724, %v720
    %v773 = vpack.c.b16 %v725, %v721
    %v774 = vpack.c.b16 %v726, %v722
    %v775 = vpack.c.b16 %v727, %v723
    %v776 = vpack.c.b16 %v732, %v728
    %v777 = vpack.c.b16 %v733, %v729
    %v778 = vpack.c.b16 %v734, %v730
    %v779 = vpack.c.b16 %v735, %v731
    %v780 = vpack.c.b16 %v740, %v736
    %v781 = vpack.c.b16 %v741, %v737
    %v782 = vpack.c.b16 %v742, %v738
    %v783 = vpack.c.b16 %v743, %v739
    %v784 = vpack.c.b16 %v748, %v744
    %v785 = vpack.c.b16 %v749, %v745
    %v786 = vpack.c.b16 %v750, %v746
    %v787 = vpack.c.b16 %v751, %v747
    %v788 = vpack.c.b16 %v756, %v752
    %v789 = vpack.c.b16 %v757, %v753
    %v790 = vpack.c.b16 %v758, %v754
    %v791 = vpack.c.b16 %v759, %v755
    %824 = vmatpush.bf16.msra.mxu0 %v788
    %825 = vmatpush.bf16.msra.mxu0 %v784
    %826 = vmatpush.bf16.msra.mxu0 %v780
    %827 = vmatpush.bf16.msra.mxu0 %v776
    %828 = vmatpush.bf16.msra.mxu0 %v772
    %829 = vmatpush.bf16.msra.mxu0 %v768
    %830 = vmatpush.bf16.msra.mxu0 %v764
    %831 = vmatpush.bf16.msra.mxu0 %v760
    %832 = vmatmul.bf16.gmra.mxu0 %v623
    %v833 = vpop.f32.mrf.mxu0
    %v834 = vadd.f32 0.0, %v833
    %v835 = vpop.f32.mrf.mxu0
    %836 = vdwg.mxu0
    %837 = vmatpush.bf16.msra.mxu0 %v789
    %838 = vmatpush.bf16.msra.mxu0 %v785
    %839 = vmatpush.bf16.msra.mxu0 %v781
    %840 = vmatpush.bf16.msra.mxu0 %v777
    %841 = vmatpush.bf16.msra.mxu0 %v773
    %842 = vmatpush.bf16.msra.mxu0 %v769
    %843 = vmatpush.bf16.msra.mxu0 %v765
    %844 = vmatpush.bf16.msra.mxu0 %v761
    %845 = vmatmul.bf16.gmra.mxu0 %v623
    %v846 = vpop.f32.mrf.mxu0
    %v847 = vadd.f32 0.0, %v846
    %v848 = vpop.f32.mrf.mxu0
    %849 = vdwg.mxu0
    %850 = vmatpush.bf16.msra.mxu0 %v790
    %851 = vmatpush.bf16.msra.mxu0 %v786
    %852 = vmatpush.bf16.msra.mxu0 %v782
    %853 = vmatpush.bf16.msra.mxu0 %v778
    %854 = vmatpush.bf16.msra.mxu0 %v774
    %855 = vmatpush.bf16.msra.mxu0 %v770
    %856 = vmatpush.bf16.msra.mxu0 %v766
    %857 = vmatpush.bf16.msra.mxu0 %v762
    %858 = vmatmul.bf16.gmra.mxu0 %v623
    %v859 = vpop.f32.mrf.mxu0
    %v860 = vadd.f32 0.0, %v859
    %v861 = vpop.f32.mrf.mxu0
    %862 = vdwg.mxu0
    %863 = vmatpush.bf16.msra.mxu0 %v791
    %864 = vmatpush.bf16.msra.mxu0 %v787
    %865 = vmatpush.bf16.msra.mxu0 %v783
    %866 = vmatpush.bf16.msra.mxu0 %v779
    %867 = vmatpush.bf16.msra.mxu0 %v775
    %868 = vmatpush.bf16.msra.mxu0 %v771
    %869 = vmatpush.bf16.msra.mxu0 %v767
    %870 = vmatpush.bf16.msra.mxu0 %v763
    %871 = vmatmul.bf16.gmra.mxu0 %v623
    %v872 = vpop.f32.mrf.mxu0
    %v873 = vadd.f32 0.0, %v872
    %v874 = vpop.f32.mrf.mxu0
    %875 = vdwg.mxu0
    %v876 = vadd.f32 %v628, %v834
    %v877 = vadd.f32 %v629, %v847
    %v878 = vadd.f32 %v630, %v860
    %v879 = vadd.f32 %v631, %v873
    %v880 = vxor.u32 %v876, 2147483648
    %v881 = vxor.u32 %v877, 2147483648
    %v882 = vxor.u32 %v878, 2147483648
    %v883 = vmul.f32 %v880, 1.442695
    %v884 = vpow.pop %v883
    %v885 = vmul.f32 %v881, 1.442695
    %v886 = vpow.pop %v885
    %v887 = vmul.f32 %v882, 1.442695
    %v888 = vpow.pop %v887
    %v889 = vadd.f32 %v884, 1.0
    %v890 = vadd.f32 %v886, 1.0
    %v891 = vadd.f32 %v888, 1.0
    %v892 = vrcp.pop %v889
    %v893 = vmul.f32 %v889, %v892
    %v894 = vsub.f32 1.0, %v893
    %v895 = vmul.f32 %v892, %v894
    %v896 = vadd.f32 %v892, %v895
    %vm897 = vweird.f32 %v889
    %vm898 = vweird.f32 %v892
    %vm899 = vmor %vm897, %vm898
    %v900 = vsel %vm899, %v892, %v896
    %v901 = vand.u32 2147483647, %v889
    %vm902 = vcmp.eq.f32.partialorder %v901, 8.507059e+37
    %v903 = vand.u32 %v889, 2147483648
    %v904 = vor.u32 1.1754944e-38, %v903
    %v905 = vsel %vm902, %v904, %v900
    %v906 = vmul.f32 1.0, %v905
    %v907 = vrcp.pop %v890
    %v908 = vmul.f32 %v890, %v907
    %v909 = vsub.f32 1.0, %v908
    %v910 = vmul.f32 %v907, %v909
    %v911 = vadd.f32 %v907, %v910
    %vm912 = vweird.f32 %v890
    %vm913 = vweird.f32 %v907
    %vm914 = vmor %vm912, %vm913
    %v915 = vsel %vm914, %v907, %v911
    %v916 = vand.u32 2147483647, %v890
    %vm917 = vcmp.eq.f32.partialorder %v916, 8.507059e+37
    %v918 = vand.u32 %v890, 2147483648
    %v919 = vor.u32 1.1754944e-38, %v918
    %v920 = vsel %vm917, %v919, %v915
    %v921 = vmul.f32 1.0, %v920
    %v922 = vrcp.pop %v891
    %v923 = vmul.f32 %v891, %v922
    %v924 = vsub.f32 1.0, %v923
    %v925 = vmul.f32 %v922, %v924
    %v926 = vadd.f32 %v922, %v925
    %vm927 = vweird.f32 %v891
    %vm928 = vweird.f32 %v922
    %vm929 = vmor %vm927, %vm928
    %v930 = vsel %vm929, %v922, %v926
    %v931 = vand.u32 2147483647, %v891
    %vm932 = vcmp.eq.f32.partialorder %v931, 8.507059e+37
    %v933 = vand.u32 %v891, 2147483648
    %v934 = vor.u32 1.1754944e-38, %v933
    %v935 = vsel %vm932, %v934, %v930
    %v936 = vmul.f32 1.0, %v935
    %v937 = vtanh.pop %v879
    %v938 = vmul.f32 %v921, %v620
    %v939 = vmul.f32 %v906, %v937
    %v940 = vadd.f32 %v938, %v939
    %v941 = vtanh.pop %v940
    %v942 = vmul.f32 %v936, %v941
    %v943 = vpack.c.bf16 %v942, %v942
    %s944 = scalar_lea.vmem [#allocation2], 4
    %945 = vst [vmem:[%s944] sm:$0xf] %v943
    %s946 = smul.u32 2, 4
    %s947 = smul.addr %s946, 8
    %s948 = scalar_lea.vmem [#allocation3], %s947
    %v949 = vld [vmem:[%s948] sm:$0xff]
    %v950 = vld [vmem:[%s948 + $0x8] sm:$0xff]
    %v951 = vld [vmem:[%s948 + $0x10] sm:$0xff]
    %v952 = vld [vmem:[%s948 + $0x18] sm:$0xff]
    %v953 = vld [vmem:[#allocation7] sm:$0xff]
    %v954 = vld [vmem:[#allocation7 + $0x8] sm:$0xff]
    %v955 = vld [vmem:[#allocation7 + $0x10] sm:$0xff]
    %v956 = vld [vmem:[#allocation7 + $0x18] sm:$0xff]
    %v957 = vld [vmem:[#allocation7 + $0x20] sm:$0xff]
    %v958 = vld [vmem:[#allocation7 + $0x28] sm:$0xff]
    %v959 = vld [vmem:[#allocation7 + $0x30] sm:$0xff]
    %v960 = vld [vmem:[#allocation7 + $0x38] sm:$0xff]
    %v961 = vld [vmem:[#allocation7 + $0x40] sm:$0xff]
    %v962 = vld [vmem:[#allocation7 + $0x48] sm:$0xff]
    %v963 = vld [vmem:[#allocation7 + $0x50] sm:$0xff]
    %v964 = vld [vmem:[#allocation7 + $0x58] sm:$0xff]
    %v965 = vld [vmem:[#allocation7 + $0x60] sm:$0xff]
    %v966 = vld [vmem:[#allocation7 + $0x68] sm:$0xff]
    %v967 = vld [vmem:[#allocation7 + $0x70] sm:$0xff]
    %v968 = vld [vmem:[#allocation7 + $0x78] sm:$0xff]
    %v969 = vld [vmem:[#allocation7 + $0x80] sm:$0xff]
    %v970 = vld [vmem:[#allocation7 + $0x88] sm:$0xff]
    %v971 = vld [vmem:[#allocation7 + $0x90] sm:$0xff]
    %v972 = vld [vmem:[#allocation7 + $0x98] sm:$0xff]
    %v973 = vld [vmem:[#allocation7 + $0xa0] sm:$0xff]
    %v974 = vld [vmem:[#allocation7 + $0xa8] sm:$0xff]
    %v975 = vld [vmem:[#allocation7 + $0xb0] sm:$0xff]
    %v976 = vld [vmem:[#allocation7 + $0xb8] sm:$0xff]
    %v977 = vld [vmem:[#allocation7 + $0xc0] sm:$0xff]
    %v978 = vld [vmem:[#allocation7 + $0xc8] sm:$0xff]
    %v979 = vld [vmem:[#allocation7 + $0xd0] sm:$0xff]
    %v980 = vld [vmem:[#allocation7 + $0xd8] sm:$0xff]
    %v981 = vld [vmem:[#allocation7 + $0xe0] sm:$0xff]
    %v982 = vld [vmem:[#allocation7 + $0xe8] sm:$0xff]
    %v983 = vld [vmem:[#allocation7 + $0xf0] sm:$0xff]
    %v984 = vld [vmem:[#allocation7 + $0xf8] sm:$0xff]
    %v1017 = vunpack.c.l.b16 %v953
    %v1018 = vunpack.c.h.b16 %v953
    %v1019 = vunpack.c.l.b16 %v954
    %v1020 = vunpack.c.h.b16 %v954
    %v1021 = vunpack.c.l.b16 %v955
    %v1022 = vunpack.c.h.b16 %v955
    %v1023 = vunpack.c.l.b16 %v956
    %v1024 = vunpack.c.h.b16 %v956
    %v1025 = vunpack.c.l.b16 %v957
    %v1026 = vunpack.c.h.b16 %v957
    %v1027 = vunpack.c.l.b16 %v958
    %v1028 = vunpack.c.h.b16 %v958
    %v1029 = vunpack.c.l.b16 %v959
    %v1030 = vunpack.c.h.b16 %v959
    %v1031 = vunpack.c.l.b16 %v960
    %v1032 = vunpack.c.h.b16 %v960
    %v1033 = vunpack.c.l.b16 %v961
    %v1034 = vunpack.c.h.b16 %v961
    %v1035 = vunpack.c.l.b16 %v962
    %v1036 = vunpack.c.h.b16 %v962
    %v1037 = vunpack.c.l.b16 %v963
    %v1038 = vunpack.c.h.b16 %v963
    %v1039 = vunpack.c.l.b16 %v964
    %v1040 = vunpack.c.h.b16 %v964
    %v1041 = vunpack.c.l.b16 %v965
    %v1042 = vunpack.c.h.b16 %v965
    %v1043 = vunpack.c.l.b16 %v966
    %v1044 = vunpack.c.h.b16 %v966
    %v1045 = vunpack.c.l.b16 %v967
    %v1046 = vunpack.c.h.b16 %v967
    %v1047 = vunpack.c.l.b16 %v968
    %v1048 = vunpack.c.h.b16 %v968
    %v1049 = vunpack.c.l.b16 %v969
    %v1050 = vunpack.c.h.b16 %v969
    %v1051 = vunpack.c.l.b16 %v970
    %v1052 = vunpack.c.h.b16 %v970
    %v1053 = vunpack.c.l.b16 %v971
    %v1054 = vunpack.c.h.b16 %v971
    %v1055 = vunpack.c.l.b16 %v972
    %v1056 = vunpack.c.h.b16 %v972
    %v1057 = vunpack.c.l.b16 %v973
    %v1058 = vunpack.c.h.b16 %v973
    %v1059 = vunpack.c.l.b16 %v974
    %v1060 = vunpack.c.h.b16 %v974
    %v1061 = vunpack.c.l.b16 %v975
    %v1062 = vunpack.c.h.b16 %v975
    %v1063 = vunpack.c.l.b16 %v976
    %v1064 = vunpack.c.h.b16 %v976
    %v1065 = vunpack.c.l.b16 %v977
    %v1066 = vunpack.c.h.b16 %v977
    %v1067 = vunpack.c.l.b16 %v978
    %v1068 = vunpack.c.h.b16 %v978
    %v1069 = vunpack.c.l.b16 %v979
    %v1070 = vunpack.c.h.b16 %v979
    %v1071 = vunpack.c.l.b16 %v980
    %v1072 = vunpack.c.h.b16 %v980
    %v1073 = vunpack.c.l.b16 %v981
    %v1074 = vunpack.c.h.b16 %v981
    %v1075 = vunpack.c.l.b16 %v982
    %v1076 = vunpack.c.h.b16 %v982
    %v1077 = vunpack.c.l.b16 %v983
    %v1078 = vunpack.c.h.b16 %v983
    %v1079 = vunpack.c.l.b16 %v984
    %v1080 = vunpack.c.h.b16 %v984
    %v1081 = vpack.c.b16 %v1021, %v1017
    %v1082 = vpack.c.b16 %v1022, %v1018
    %v1083 = vpack.c.b16 %v1023, %v1019
    %v1084 = vpack.c.b16 %v1024, %v1020
    %v1085 = vpack.c.b16 %v1029, %v1025
    %v1086 = vpack.c.b16 %v1030, %v1026
    %v1087 = vpack.c.b16 %v1031, %v1027
    %v1088 = vpack.c.b16 %v1032, %v1028
    %v1089 = vpack.c.b16 %v1037, %v1033
    %v1090 = vpack.c.b16 %v1038, %v1034
    %v1091 = vpack.c.b16 %v1039, %v1035
    %v1092 = vpack.c.b16 %v1040, %v1036
    %v1093 = vpack.c.b16 %v1045, %v1041
    %v1094 = vpack.c.b16 %v1046, %v1042
    %v1095 = vpack.c.b16 %v1047, %v1043
    %v1096 = vpack.c.b16 %v1048, %v1044
    %v1097 = vpack.c.b16 %v1053, %v1049
    %v1098 = vpack.c.b16 %v1054, %v1050
    %v1099 = vpack.c.b16 %v1055, %v1051
    %v1100 = vpack.c.b16 %v1056, %v1052
    %v1101 = vpack.c.b16 %v1061, %v1057
    %v1102 = vpack.c.b16 %v1062, %v1058
    %v1103 = vpack.c.b16 %v1063, %v1059
    %v1104 = vpack.c.b16 %v1064, %v1060
    %v1105 = vpack.c.b16 %v1069, %v1065
    %v1106 = vpack.c.b16 %v1070, %v1066
    %v1107 = vpack.c.b16 %v1071, %v1067
    %v1108 = vpack.c.b16 %v1072, %v1068
    %v1109 = vpack.c.b16 %v1077, %v1073
    %v1110 = vpack.c.b16 %v1078, %v1074
    %v1111 = vpack.c.b16 %v1079, %v1075
    %v1112 = vpack.c.b16 %v1080, %v1076
    %1145 = vmatpush.bf16.msra.mxu0 %v1109
    %1146 = vmatpush.bf16.msra.mxu0 %v1105
    %1147 = vmatpush.bf16.msra.mxu0 %v1101
    %1148 = vmatpush.bf16.msra.mxu0 %v1097
    %1149 = vmatpush.bf16.msra.mxu0 %v1093
    %1150 = vmatpush.bf16.msra.mxu0 %v1089
    %1151 = vmatpush.bf16.msra.mxu0 %v1085
    %1152 = vmatpush.bf16.msra.mxu0 %v1081
    %1153 = vmatmul.bf16.gmra.mxu0 %v943
    %v1154 = vpop.f32.mrf.mxu0
    %v1155 = vadd.f32 0.0, %v1154
    %v1156 = vpop.f32.mrf.mxu0
    %1157 = vdwg.mxu0
    %1158 = vmatpush.bf16.msra.mxu0 %v1110
    %1159 = vmatpush.bf16.msra.mxu0 %v1106
    %1160 = vmatpush.bf16.msra.mxu0 %v1102
    %1161 = vmatpush.bf16.msra.mxu0 %v1098
    %1162 = vmatpush.bf16.msra.mxu0 %v1094
    %1163 = vmatpush.bf16.msra.mxu0 %v1090
    %1164 = vmatpush.bf16.msra.mxu0 %v1086
    %1165 = vmatpush.bf16.msra.mxu0 %v1082
    %1166 = vmatmul.bf16.gmra.mxu0 %v943
    %v1167 = vpop.f32.mrf.mxu0
    %v1168 = vadd.f32 0.0, %v1167
    %v1169 = vpop.f32.mrf.mxu0
    %1170 = vdwg.mxu0
    %1171 = vmatpush.bf16.msra.mxu0 %v1111
    %1172 = vmatpush.bf16.msra.mxu0 %v1107
    %1173 = vmatpush.bf16.msra.mxu0 %v1103
    %1174 = vmatpush.bf16.msra.mxu0 %v1099
    %1175 = vmatpush.bf16.msra.mxu0 %v1095
    %1176 = vmatpush.bf16.msra.mxu0 %v1091
    %1177 = vmatpush.bf16.msra.mxu0 %v1087
    %1178 = vmatpush.bf16.msra.mxu0 %v1083
    %1179 = vmatmul.bf16.gmra.mxu0 %v943
    %v1180 = vpop.f32.mrf.mxu0
    %v1181 = vadd.f32 0.0, %v1180
    %v1182 = vpop.f32.mrf.mxu0
    %1183 = vdwg.mxu0
    %1184 = vmatpush.bf16.msra.mxu0 %v1112
    %1185 = vmatpush.bf16.msra.mxu0 %v1108
    %1186 = vmatpush.bf16.msra.mxu0 %v1104
    %1187 = vmatpush.bf16.msra.mxu0 %v1100
    %1188 = vmatpush.bf16.msra.mxu0 %v1096
    %1189 = vmatpush.bf16.msra.mxu0 %v1092
    %1190 = vmatpush.bf16.msra.mxu0 %v1088
    %1191 = vmatpush.bf16.msra.mxu0 %v1084
    %1192 = vmatmul.bf16.gmra.mxu0 %v943
    %v1193 = vpop.f32.mrf.mxu0
    %v1194 = vadd.f32 0.0, %v1193
    %v1195 = vpop.f32.mrf.mxu0
    %1196 = vdwg.mxu0
    %v1197 = vadd.f32 %v949, %v1155
    %v1198 = vadd.f32 %v950, %v1168
    %v1199 = vadd.f32 %v951, %v1181
    %v1200 = vadd.f32 %v952, %v1194
    %v1201 = vxor.u32 %v1197, 2147483648
    %v1202 = vxor.u32 %v1198, 2147483648
    %v1203 = vxor.u32 %v1199, 2147483648
    %v1204 = vmul.f32 %v1201, 1.442695
    %v1205 = vpow.pop %v1204
    %v1206 = vmul.f32 %v1202, 1.442695
    %v1207 = vpow.pop %v1206
    %v1208 = vmul.f32 %v1203, 1.442695
    %v1209 = vpow.pop %v1208
    %v1210 = vadd.f32 %v1205, 1.0
    %v1211 = vadd.f32 %v1207, 1.0
    %v1212 = vadd.f32 %v1209, 1.0
    %v1213 = vrcp.pop %v1210
    %v1214 = vmul.f32 %v1210, %v1213
    %v1215 = vsub.f32 1.0, %v1214
    %v1216 = vmul.f32 %v1213, %v1215
    %v1217 = vadd.f32 %v1213, %v1216
    %vm1218 = vweird.f32 %v1210
    %vm1219 = vweird.f32 %v1213
    %vm1220 = vmor %vm1218, %vm1219
    %v1221 = vsel %vm1220, %v1213, %v1217
    %v1222 = vand.u32 2147483647, %v1210
    %vm1223 = vcmp.eq.f32.partialorder %v1222, 8.507059e+37
    %v1224 = vand.u32 %v1210, 2147483648
    %v1225 = vor.u32 1.1754944e-38, %v1224
    %v1226 = vsel %vm1223, %v1225, %v1221
    %v1227 = vmul.f32 1.0, %v1226
    %v1228 = vrcp.pop %v1211
    %v1229 = vmul.f32 %v1211, %v1228
    %v1230 = vsub.f32 1.0, %v1229
    %v1231 = vmul.f32 %v1228, %v1230
    %v1232 = vadd.f32 %v1228, %v1231
    %vm1233 = vweird.f32 %v1211
    %vm1234 = vweird.f32 %v1228
    %vm1235 = vmor %vm1233, %vm1234
    %v1236 = vsel %vm1235, %v1228, %v1232
    %v1237 = vand.u32 2147483647, %v1211
    %vm1238 = vcmp.eq.f32.partialorder %v1237, 8.507059e+37
    %v1239 = vand.u32 %v1211, 2147483648
    %v1240 = vor.u32 1.1754944e-38, %v1239
    %v1241 = vsel %vm1238, %v1240, %v1236
    %v1242 = vmul.f32 1.0, %v1241
    %v1243 = vrcp.pop %v1212
    %v1244 = vmul.f32 %v1212, %v1243
    %v1245 = vsub.f32 1.0, %v1244
    %v1246 = vmul.f32 %v1243, %v1245
    %v1247 = vadd.f32 %v1243, %v1246
    %vm1248 = vweird.f32 %v1212
    %vm1249 = vweird.f32 %v1243
    %vm1250 = vmor %vm1248, %vm1249
    %v1251 = vsel %vm1250, %v1243, %v1247
    %v1252 = vand.u32 2147483647, %v1212
    %vm1253 = vcmp.eq.f32.partialorder %v1252, 8.507059e+37
    %v1254 = vand.u32 %v1212, 2147483648
    %v1255 = vor.u32 1.1754944e-38, %v1254
    %v1256 = vsel %vm1253, %v1255, %v1251
    %v1257 = vmul.f32 1.0, %v1256
    %v1258 = vtanh.pop %v1200
    %v1259 = vmul.f32 %v1242, %v940
    %v1260 = vmul.f32 %v1227, %v1258
    %v1261 = vadd.f32 %v1259, %v1260
    %v1262 = vtanh.pop %v1261
    %v1263 = vmul.f32 %v1257, %v1262
    %v1264 = vpack.c.bf16 %v1263, %v1263
    %s1265 = scalar_lea.vmem [#allocation2], 8
    %1266 = vst [vmem:[%s1265] sm:$0xf] %v1264
    %s1267 = smul.u32 3, 4
    %s1268 = smul.addr %s1267, 8
    %s1269 = scalar_lea.vmem [#allocation3], %s1268
    %v1270 = vld [vmem:[%s1269] sm:$0xff]
    %v1271 = vld [vmem:[%s1269 + $0x8] sm:$0xff]
    %v1272 = vld [vmem:[%s1269 + $0x10] sm:$0xff]
    %v1273 = vld [vmem:[%s1269 + $0x18] sm:$0xff]
    %v1274 = vld [vmem:[#allocation7] sm:$0xff]
    %v1275 = vld [vmem:[#allocation7 + $0x8] sm:$0xff]
    %v1276 = vld [vmem:[#allocation7 + $0x10] sm:$0xff]
    %v1277 = vld [vmem:[#allocation7 + $0x18] sm:$0xff]
    %v1278 = vld [vmem:[#allocation7 + $0x20] sm:$0xff]
    %v1279 = vld [vmem:[#allocation7 + $0x28] sm:$0xff]
    %v1280 = vld [vmem:[#allocation7 + $0x30] sm:$0xff]
    %v1281 = vld [vmem:[#allocation7 + $0x38] sm:$0xff]
    %v1282 = vld [vmem:[#allocation7 + $0x40] sm:$0xff]
    %v1283 = vld [vmem:[#allocation7 + $0x48] sm:$0xff]
    %v1284 = vld [vmem:[#allocation7 + $0x50] sm:$0xff]
    %v1285 = vld [vmem:[#allocation7 + $0x58] sm:$0xff]
    %v1286 = vld [vmem:[#allocation7 + $0x60] sm:$0xff]
    %v1287 = vld [vmem:[#allocation7 + $0x68] sm:$0xff]
    %v1288 = vld [vmem:[#allocation7 + $0x70] sm:$0xff]
    %v1289 = vld [vmem:[#allocation7 + $0x78] sm:$0xff]
    %v1290 = vld [vmem:[#allocation7 + $0x80] sm:$0xff]
    %v1291 = vld [vmem:[#allocation7 + $0x88] sm:$0xff]
    %v1292 = vld [vmem:[#allocation7 + $0x90] sm:$0xff]
    %v1293 = vld [vmem:[#allocation7 + $0x98] sm:$0xff]
    %v1294 = vld [vmem:[#allocation7 + $0xa0] sm:$0xff]
    %v1295 = vld [vmem:[#allocation7 + $0xa8] sm:$0xff]
    %v1296 = vld [vmem:[#allocation7 + $0xb0] sm:$0xff]
    %v1297 = vld [vmem:[#allocation7 + $0xb8] sm:$0xff]
    %v1298 = vld [vmem:[#allocation7 + $0xc0] sm:$0xff]
    %v1299 = vld [vmem:[#allocation7 + $0xc8] sm:$0xff]
    %v1300 = vld [vmem:[#allocation7 + $0xd0] sm:$0xff]
    %v1301 = vld [vmem:[#allocation7 + $0xd8] sm:$0xff]
    %v1302 = vld [vmem:[#allocation7 + $0xe0] sm:$0xff]
    %v1303 = vld [vmem:[#allocation7 + $0xe8] sm:$0xff]
    %v1304 = vld [vmem:[#allocation7 + $0xf0] sm:$0xff]
    %v1305 = vld [vmem:[#allocation7 + $0xf8] sm:$0xff]
    %v1338 = vunpack.c.l.b16 %v1274
    %v1339 = vunpack.c.h.b16 %v1274
    %v1340 = vunpack.c.l.b16 %v1275
    %v1341 = vunpack.c.h.b16 %v1275
    %v1342 = vunpack.c.l.b16 %v1276
    %v1343 = vunpack.c.h.b16 %v1276
    %v1344 = vunpack.c.l.b16 %v1277
    %v1345 = vunpack.c.h.b16 %v1277
    %v1346 = vunpack.c.l.b16 %v1278
    %v1347 = vunpack.c.h.b16 %v1278
    %v1348 = vunpack.c.l.b16 %v1279
    %v1349 = vunpack.c.h.b16 %v1279
    %v1350 = vunpack.c.l.b16 %v1280
    %v1351 = vunpack.c.h.b16 %v1280
    %v1352 = vunpack.c.l.b16 %v1281
    %v1353 = vunpack.c.h.b16 %v1281
    %v1354 = vunpack.c.l.b16 %v1282
    %v1355 = vunpack.c.h.b16 %v1282
    %v1356 = vunpack.c.l.b16 %v1283
    %v1357 = vunpack.c.h.b16 %v1283
    %v1358 = vunpack.c.l.b16 %v1284
    %v1359 = vunpack.c.h.b16 %v1284
    %v1360 = vunpack.c.l.b16 %v1285
    %v1361 = vunpack.c.h.b16 %v1285
    %v1362 = vunpack.c.l.b16 %v1286
    %v1363 = vunpack.c.h.b16 %v1286
    %v1364 = vunpack.c.l.b16 %v1287
    %v1365 = vunpack.c.h.b16 %v1287
    %v1366 = vunpack.c.l.b16 %v1288
    %v1367 = vunpack.c.h.b16 %v1288
    %v1368 = vunpack.c.l.b16 %v1289
    %v1369 = vunpack.c.h.b16 %v1289
    %v1370 = vunpack.c.l.b16 %v1290
    %v1371 = vunpack.c.h.b16 %v1290
    %v1372 = vunpack.c.l.b16 %v1291
    %v1373 = vunpack.c.h.b16 %v1291
    %v1374 = vunpack.c.l.b16 %v1292
    %v1375 = vunpack.c.h.b16 %v1292
    %v1376 = vunpack.c.l.b16 %v1293
    %v1377 = vunpack.c.h.b16 %v1293
    %v1378 = vunpack.c.l.b16 %v1294
    %v1379 = vunpack.c.h.b16 %v1294
    %v1380 = vunpack.c.l.b16 %v1295
    %v1381 = vunpack.c.h.b16 %v1295
    %v1382 = vunpack.c.l.b16 %v1296
    %v1383 = vunpack.c.h.b16 %v1296
    %v1384 = vunpack.c.l.b16 %v1297
    %v1385 = vunpack.c.h.b16 %v1297
    %v1386 = vunpack.c.l.b16 %v1298
    %v1387 = vunpack.c.h.b16 %v1298
    %v1388 = vunpack.c.l.b16 %v1299
    %v1389 = vunpack.c.h.b16 %v1299
    %v1390 = vunpack.c.l.b16 %v1300
    %v1391 = vunpack.c.h.b16 %v1300
    %v1392 = vunpack.c.l.b16 %v1301
    %v1393 = vunpack.c.h.b16 %v1301
    %v1394 = vunpack.c.l.b16 %v1302
    %v1395 = vunpack.c.h.b16 %v1302
    %v1396 = vunpack.c.l.b16 %v1303
    %v1397 = vunpack.c.h.b16 %v1303
    %v1398 = vunpack.c.l.b16 %v1304
    %v1399 = vunpack.c.h.b16 %v1304
    %v1400 = vunpack.c.l.b16 %v1305
    %v1401 = vunpack.c.h.b16 %v1305
    %v1402 = vpack.c.b16 %v1342, %v1338
    %v1403 = vpack.c.b16 %v1343, %v1339
    %v1404 = vpack.c.b16 %v1344, %v1340
    %v1405 = vpack.c.b16 %v1345, %v1341
    %v1406 = vpack.c.b16 %v1350, %v1346
    %v1407 = vpack.c.b16 %v1351, %v1347
    %v1408 = vpack.c.b16 %v1352, %v1348
    %v1409 = vpack.c.b16 %v1353, %v1349
    %v1410 = vpack.c.b16 %v1358, %v1354
    %v1411 = vpack.c.b16 %v1359, %v1355
    %v1412 = vpack.c.b16 %v1360, %v1356
    %v1413 = vpack.c.b16 %v1361, %v1357
    %v1414 = vpack.c.b16 %v1366, %v1362
    %v1415 = vpack.c.b16 %v1367, %v1363
    %v1416 = vpack.c.b16 %v1368, %v1364
    %v1417 = vpack.c.b16 %v1369, %v1365
    %v1418 = vpack.c.b16 %v1374, %v1370
    %v1419 = vpack.c.b16 %v1375, %v1371
    %v1420 = vpack.c.b16 %v1376, %v1372
    %v1421 = vpack.c.b16 %v1377, %v1373
    %v1422 = vpack.c.b16 %v1382, %v1378
    %v1423 = vpack.c.b16 %v1383, %v1379
    %v1424 = vpack.c.b16 %v1384, %v1380
    %v1425 = vpack.c.b16 %v1385, %v1381
    %v1426 = vpack.c.b16 %v1390, %v1386
    %v1427 = vpack.c.b16 %v1391, %v1387
    %v1428 = vpack.c.b16 %v1392, %v1388
    %v1429 = vpack.c.b16 %v1393, %v1389
    %v1430 = vpack.c.b16 %v1398, %v1394
    %v1431 = vpack.c.b16 %v1399, %v1395
    %v1432 = vpack.c.b16 %v1400, %v1396
    %v1433 = vpack.c.b16 %v1401, %v1397
    %1466 = vmatpush.bf16.msra.mxu0 %v1430
    %1467 = vmatpush.bf16.msra.mxu0 %v1426
    %1468 = vmatpush.bf16.msra.mxu0 %v1422
    %1469 = vmatpush.bf16.msra.mxu0 %v1418
    %1470 = vmatpush.bf16.msra.mxu0 %v1414
    %1471 = vmatpush.bf16.msra.mxu0 %v1410
    %1472 = vmatpush.bf16.msra.mxu0 %v1406
    %1473 = vmatpush.bf16.msra.mxu0 %v1402
    %1474 = vmatmul.bf16.gmra.mxu0 %v1264
    %v1475 = vpop.f32.mrf.mxu0
    %v1476 = vadd.f32 0.0, %v1475
    %v1477 = vpop.f32.mrf.mxu0
    %1478 = vdwg.mxu0
    %1479 = vmatpush.bf16.msra.mxu0 %v1431
    %1480 = vmatpush.bf16.msra.mxu0 %v1427
    %1481 = vmatpush.bf16.msra.mxu0 %v1423
    %1482 = vmatpush.bf16.msra.mxu0 %v1419
    %1483 = vmatpush.bf16.msra.mxu0 %v1415
    %1484 = vmatpush.bf16.msra.mxu0 %v1411
    %1485 = vmatpush.bf16.msra.mxu0 %v1407
    %1486 = vmatpush.bf16.msra.mxu0 %v1403
    %1487 = vmatmul.bf16.gmra.mxu0 %v1264
    %v1488 = vpop.f32.mrf.mxu0
    %v1489 = vadd.f32 0.0, %v1488
    %v1490 = vpop.f32.mrf.mxu0
    %1491 = vdwg.mxu0
    %1492 = vmatpush.bf16.msra.mxu0 %v1432
    %1493 = vmatpush.bf16.msra.mxu0 %v1428
    %1494 = vmatpush.bf16.msra.mxu0 %v1424
    %1495 = vmatpush.bf16.msra.mxu0 %v1420
    %1496 = vmatpush.bf16.msra.mxu0 %v1416
    %1497 = vmatpush.bf16.msra.mxu0 %v1412
    %1498 = vmatpush.bf16.msra.mxu0 %v1408
    %1499 = vmatpush.bf16.msra.mxu0 %v1404
    %1500 = vmatmul.bf16.gmra.mxu0 %v1264
    %v1501 = vpop.f32.mrf.mxu0
    %v1502 = vadd.f32 0.0, %v1501
    %v1503 = vpop.f32.mrf.mxu0
    %1504 = vdwg.mxu0
    %1505 = vmatpush.bf16.msra.mxu0 %v1433
    %1506 = vmatpush.bf16.msra.mxu0 %v1429
    %1507 = vmatpush.bf16.msra.mxu0 %v1425
    %1508 = vmatpush.bf16.msra.mxu0 %v1421
    %1509 = vmatpush.bf16.msra.mxu0 %v1417
    %1510 = vmatpush.bf16.msra.mxu0 %v1413
    %1511 = vmatpush.bf16.msra.mxu0 %v1409
    %1512 = vmatpush.bf16.msra.mxu0 %v1405
    %1513 = vmatmul.bf16.gmra.mxu0 %v1264
    %v1514 = vpop.f32.mrf.mxu0
    %v1515 = vadd.f32 0.0, %v1514
    %v1516 = vpop.f32.mrf.mxu0
    %1517 = vdwg.mxu0
    %v1518 = vadd.f32 %v1270, %v1476
    %v1519 = vadd.f32 %v1271, %v1489
    %v1520 = vadd.f32 %v1272, %v1502
    %v1521 = vadd.f32 %v1273, %v1515
    %v1522 = vxor.u32 %v1518, 2147483648
    %v1523 = vxor.u32 %v1519, 2147483648
    %v1524 = vxor.u32 %v1520, 2147483648
    %v1525 = vmul.f32 %v1522, 1.442695
    %v1526 = vpow.pop %v1525
    %v1527 = vmul.f32 %v1523, 1.442695
    %v1528 = vpow.pop %v1527
    %v1529 = vmul.f32 %v1524, 1.442695
    %v1530 = vpow.pop %v1529
    %v1531 = vadd.f32 %v1526, 1.0
    %v1532 = vadd.f32 %v1528, 1.0
    %v1533 = vadd.f32 %v1530, 1.0
    %v1534 = vrcp.pop %v1531
    %v1535 = vmul.f32 %v1531, %v1534
    %v1536 = vsub.f32 1.0, %v1535
    %v1537 = vmul.f32 %v1534, %v1536
    %v1538 = vadd.f32 %v1534, %v1537
    %vm1539 = vweird.f32 %v1531
    %vm1540 = vweird.f32 %v1534
    %vm1541 = vmor %vm1539, %vm1540
    %v1542 = vsel %vm1541, %v1534, %v1538
    %v1543 = vand.u32 2147483647, %v1531
    %vm1544 = vcmp.eq.f32.partialorder %v1543, 8.507059e+37
    %v1545 = vand.u32 %v1531, 2147483648
    %v1546 = vor.u32 1.1754944e-38, %v1545
    %v1547 = vsel %vm1544, %v1546, %v1542
    %v1548 = vmul.f32 1.0, %v1547
    %v1549 = vrcp.pop %v1532
    %v1550 = vmul.f32 %v1532, %v1549
    %v1551 = vsub.f32 1.0, %v1550
    %v1552 = vmul.f32 %v1549, %v1551
    %v1553 = vadd.f32 %v1549, %v1552
    %vm1554 = vweird.f32 %v1532
    %vm1555 = vweird.f32 %v1549
    %vm1556 = vmor %vm1554, %vm1555
    %v1557 = vsel %vm1556, %v1549, %v1553
    %v1558 = vand.u32 2147483647, %v1532
    %vm1559 = vcmp.eq.f32.partialorder %v1558, 8.507059e+37
    %v1560 = vand.u32 %v1532, 2147483648
    %v1561 = vor.u32 1.1754944e-38, %v1560
    %v1562 = vsel %vm1559, %v1561, %v1557
    %v1563 = vmul.f32 1.0, %v1562
    %v1564 = vrcp.pop %v1533
    %v1565 = vmul.f32 %v1533, %v1564
    %v1566 = vsub.f32 1.0, %v1565
    %v1567 = vmul.f32 %v1564, %v1566
    %v1568 = vadd.f32 %v1564, %v1567
    %vm1569 = vweird.f32 %v1533
    %vm1570 = vweird.f32 %v1564
    %vm1571 = vmor %vm1569, %vm1570
    %v1572 = vsel %vm1571, %v1564, %v1568
    %v1573 = vand.u32 2147483647, %v1533
    %vm1574 = vcmp.eq.f32.partialorder %v1573, 8.507059e+37
    %v1575 = vand.u32 %v1533, 2147483648
    %v1576 = vor.u32 1.1754944e-38, %v1575
    %v1577 = vsel %vm1574, %v1576, %v1572
    %v1578 = vmul.f32 1.0, %v1577
    %v1579 = vtanh.pop %v1521
    %v1580 = vmul.f32 %v1563, %v1261
    %v1581 = vmul.f32 %v1548, %v1579
    %v1582 = vadd.f32 %v1580, %v1581
    %v1583 = vtanh.pop %v1582
    %v1584 = vmul.f32 %v1578, %v1583
    %v1585 = vpack.c.bf16 %v1584, %v1584
    %s1586 = scalar_lea.vmem [#allocation2], 12
    %1587 = vst [vmem:[%s1586] sm:$0xf] %v1585
    %s1588 = smul.u32 4, 4
    %s1589 = smul.addr %s1588, 8
    %s1590 = scalar_lea.vmem [#allocation3], %s1589
    %v1591 = vld [vmem:[%s1590] sm:$0xff]
    %v1592 = vld [vmem:[%s1590 + $0x8] sm:$0xff]
    %v1593 = vld [vmem:[%s1590 + $0x10] sm:$0xff]
    %v1594 = vld [vmem:[%s1590 + $0x18] sm:$0xff]
    %v1595 = vld [vmem:[#allocation7] sm:$0xff]
    %v1596 = vld [vmem:[#allocation7 + $0x8] sm:$0xff]
    %v1597 = vld [vmem:[#allocation7 + $0x10] sm:$0xff]
    %v1598 = vld [vmem:[#allocation7 + $0x18] sm:$0xff]
    %v1599 = vld [vmem:[#allocation7 + $0x20] sm:$0xff]
    %v1600 = vld [vmem:[#allocation7 + $0x28] sm:$0xff]
    %v1601 = vld [vmem:[#allocation7 + $0x30] sm:$0xff]
    %v1602 = vld [vmem:[#allocation7 + $0x38] sm:$0xff]
    %v1603 = vld [vmem:[#allocation7 + $0x40] sm:$0xff]
    %v1604 = vld [vmem:[#allocation7 + $0x48] sm:$0xff]
    %v1605 = vld [vmem:[#allocation7 + $0x50] sm:$0xff]
    %v1606 = vld [vmem:[#allocation7 + $0x58] sm:$0xff]
    %v1607 = vld [vmem:[#allocation7 + $0x60] sm:$0xff]
    %v1608 = vld [vmem:[#allocation7 + $0x68] sm:$0xff]
    %v1609 = vld [vmem:[#allocation7 + $0x70] sm:$0xff]
    %v1610 = vld [vmem:[#allocation7 + $0x78] sm:$0xff]
    %v1611 = vld [vmem:[#allocation7 + $0x80] sm:$0xff]
    %v1612 = vld [vmem:[#allocation7 + $0x88] sm:$0xff]
    %v1613 = vld [vmem:[#allocation7 + $0x90] sm:$0xff]
    %v1614 = vld [vmem:[#allocation7 + $0x98] sm:$0xff]
    %v1615 = vld [vmem:[#allocation7 + $0xa0] sm:$0xff]
    %v1616 = vld [vmem:[#allocation7 + $0xa8] sm:$0xff]
    %v1617 = vld [vmem:[#allocation7 + $0xb0] sm:$0xff]
    %v1618 = vld [vmem:[#allocation7 + $0xb8] sm:$0xff]
    %v1619 = vld [vmem:[#allocation7 + $0xc0] sm:$0xff]
    %v1620 = vld [vmem:[#allocation7 + $0xc8] sm:$0xff]
    %v1621 = vld [vmem:[#allocation7 + $0xd0] sm:$0xff]
    %v1622 = vld [vmem:[#allocation7 + $0xd8] sm:$0xff]
    %v1623 = vld [vmem:[#allocation7 + $0xe0] sm:$0xff]
    %v1624 = vld [vmem:[#allocation7 + $0xe8] sm:$0xff]
    %v1625 = vld [vmem:[#allocation7 + $0xf0] sm:$0xff]
    %v1626 = vld [vmem:[#allocation7 + $0xf8] sm:$0xff]
    %v1659 = vunpack.c.l.b16 %v1595
    %v1660 = vunpack.c.h.b16 %v1595
    %v1661 = vunpack.c.l.b16 %v1596
    %v1662 = vunpack.c.h.b16 %v1596
    %v1663 = vunpack.c.l.b16 %v1597
    %v1664 = vunpack.c.h.b16 %v1597
    %v1665 = vunpack.c.l.b16 %v1598
    %v1666 = vunpack.c.h.b16 %v1598
    %v1667 = vunpack.c.l.b16 %v1599
    %v1668 = vunpack.c.h.b16 %v1599
    %v1669 = vunpack.c.l.b16 %v1600
    %v1670 = vunpack.c.h.b16 %v1600
    %v1671 = vunpack.c.l.b16 %v1601
    %v1672 = vunpack.c.h.b16 %v1601
    %v1673 = vunpack.c.l.b16 %v1602
    %v1674 = vunpack.c.h.b16 %v1602
    %v1675 = vunpack.c.l.b16 %v1603
    %v1676 = vunpack.c.h.b16 %v1603
    %v1677 = vunpack.c.l.b16 %v1604
    %v1678 = vunpack.c.h.b16 %v1604
    %v1679 = vunpack.c.l.b16 %v1605
    %v1680 = vunpack.c.h.b16 %v1605
    %v1681 = vunpack.c.l.b16 %v1606
    %v1682 = vunpack.c.h.b16 %v1606
    %v1683 = vunpack.c.l.b16 %v1607
    %v1684 = vunpack.c.h.b16 %v1607
    %v1685 = vunpack.c.l.b16 %v1608
    %v1686 = vunpack.c.h.b16 %v1608
    %v1687 = vunpack.c.l.b16 %v1609
    %v1688 = vunpack.c.h.b16 %v1609
    %v1689 = vunpack.c.l.b16 %v1610
    %v1690 = vunpack.c.h.b16 %v1610
    %v1691 = vunpack.c.l.b16 %v1611
    %v1692 = vunpack.c.h.b16 %v1611
    %v1693 = vunpack.c.l.b16 %v1612
    %v1694 = vunpack.c.h.b16 %v1612
    %v1695 = vunpack.c.l.b16 %v1613
    %v1696 = vunpack.c.h.b16 %v1613
    %v1697 = vunpack.c.l.b16 %v1614
    %v1698 = vunpack.c.h.b16 %v1614
    %v1699 = vunpack.c.l.b16 %v1615
    %v1700 = vunpack.c.h.b16 %v1615
    %v1701 = vunpack.c.l.b16 %v1616
    %v1702 = vunpack.c.h.b16 %v1616
    %v1703 = vunpack.c.l.b16 %v1617
    %v1704 = vunpack.c.h.b16 %v1617
    %v1705 = vunpack.c.l.b16 %v1618
    %v1706 = vunpack.c.h.b16 %v1618
    %v1707 = vunpack.c.l.b16 %v1619
    %v1708 = vunpack.c.h.b16 %v1619
    %v1709 = vunpack.c.l.b16 %v1620
    %v1710 = vunpack.c.h.b16 %v1620
    %v1711 = vunpack.c.l.b16 %v1621
    %v1712 = vunpack.c.h.b16 %v1621
    %v1713 = vunpack.c.l.b16 %v1622
    %v1714 = vunpack.c.h.b16 %v1622
    %v1715 = vunpack.c.l.b16 %v1623
    %v1716 = vunpack.c.h.b16 %v1623
    %v1717 = vunpack.c.l.b16 %v1624
    %v1718 = vunpack.c.h.b16 %v1624
    %v1719 = vunpack.c.l.b16 %v1625
    %v1720 = vunpack.c.h.b16 %v1625
    %v1721 = vunpack.c.l.b16 %v1626
    %v1722 = vunpack.c.h.b16 %v1626
    %v1723 = vpack.c.b16 %v1663, %v1659
    %v1724 = vpack.c.b16 %v1664, %v1660
    %v1725 = vpack.c.b16 %v1665, %v1661
    %v1726 = vpack.c.b16 %v1666, %v1662
    %v1727 = vpack.c.b16 %v1671, %v1667
    %v1728 = vpack.c.b16 %v1672, %v1668
    %v1729 = vpack.c.b16 %v1673, %v1669
    %v1730 = vpack.c.b16 %v1674, %v1670
    %v1731 = vpack.c.b16 %v1679, %v1675
    %v1732 = vpack.c.b16 %v1680, %v1676
    %v1733 = vpack.c.b16 %v1681, %v1677
    %v1734 = vpack.c.b16 %v1682, %v1678
    %v1735 = vpack.c.b16 %v1687, %v1683
    %v1736 = vpack.c.b16 %v1688, %v1684
    %v1737 = vpack.c.b16 %v1689, %v1685
    %v1738 = vpack.c.b16 %v1690, %v1686
    %v1739 = vpack.c.b16 %v1695, %v1691
    %v1740 = vpack.c.b16 %v1696, %v1692
    %v1741 = vpack.c.b16 %v1697, %v1693
    %v1742 = vpack.c.b16 %v1698, %v1694
    %v1743 = vpack.c.b16 %v1703, %v1699
    %v1744 = vpack.c.b16 %v1704, %v1700
    %v1745 = vpack.c.b16 %v1705, %v1701
    %v1746 = vpack.c.b16 %v1706, %v1702
    %v1747 = vpack.c.b16 %v1711, %v1707
    %v1748 = vpack.c.b16 %v1712, %v1708
    %v1749 = vpack.c.b16 %v1713, %v1709
    %v1750 = vpack.c.b16 %v1714, %v1710
    %v1751 = vpack.c.b16 %v1719, %v1715
    %v1752 = vpack.c.b16 %v1720, %v1716
    %v1753 = vpack.c.b16 %v1721, %v1717
    %v1754 = vpack.c.b16 %v1722, %v1718
    %1787 = vmatpush.bf16.msra.mxu0 %v1751
    %1788 = vmatpush.bf16.msra.mxu0 %v1747
    %1789 = vmatpush.bf16.msra.mxu0 %v1743
    %1790 = vmatpush.bf16.msra.mxu0 %v1739
    %1791 = vmatpush.bf16.msra.mxu0 %v1735
    %1792 = vmatpush.bf16.msra.mxu0 %v1731
    %1793 = vmatpush.bf16.msra.mxu0 %v1727
    %1794 = vmatpush.bf16.msra.mxu0 %v1723
    %1795 = vmatmul.bf16.gmra.mxu0 %v1585
    %v1796 = vpop.f32.mrf.mxu0
    %v1797 = vadd.f32 0.0, %v1796
    %v1798 = vpop.f32.mrf.mxu0
    %1799 = vdwg.mxu0
    %1800 = vmatpush.bf16.msra.mxu0 %v1752
    %1801 = vmatpush.bf16.msra.mxu0 %v1748
    %1802 = vmatpush.bf16.msra.mxu0 %v1744
    %1803 = vmatpush.bf16.msra.mxu0 %v1740
    %1804 = vmatpush.bf16.msra.mxu0 %v1736
    %1805 = vmatpush.bf16.msra.mxu0 %v1732
    %1806 = vmatpush.bf16.msra.mxu0 %v1728
    %1807 = vmatpush.bf16.msra.mxu0 %v1724
    %1808 = vmatmul.bf16.gmra.mxu0 %v1585
    %v1809 = vpop.f32.mrf.mxu0
    %v1810 = vadd.f32 0.0, %v1809
    %v1811 = vpop.f32.mrf.mxu0
    %1812 = vdwg.mxu0
    %1813 = vmatpush.bf16.msra.mxu0 %v1753
    %1814 = vmatpush.bf16.msra.mxu0 %v1749
    %1815 = vmatpush.bf16.msra.mxu0 %v1745
    %1816 = vmatpush.bf16.msra.mxu0 %v1741
    %1817 = vmatpush.bf16.msra.mxu0 %v1737
    %1818 = vmatpush.bf16.msra.mxu0 %v1733
    %1819 = vmatpush.bf16.msra.mxu0 %v1729
    %1820 = vmatpush.bf16.msra.mxu0 %v1725
    %1821 = vmatmul.bf16.gmra.mxu0 %v1585
    %v1822 = vpop.f32.mrf.mxu0
    %v1823 = vadd.f32 0.0, %v1822
    %v1824 = vpop.f32.mrf.mxu0
    %1825 = vdwg.mxu0
    %1826 = vmatpush.bf16.msra.mxu0 %v1754
    %1827 = vmatpush.bf16.msra.mxu0 %v1750
    %1828 = vmatpush.bf16.msra.mxu0 %v1746
    %1829 = vmatpush.bf16.msra.mxu0 %v1742
    %1830 = vmatpush.bf16.msra.mxu0 %v1738
    %1831 = vmatpush.bf16.msra.mxu0 %v1734
    %1832 = vmatpush.bf16.msra.mxu0 %v1730
    %1833 = vmatpush.bf16.msra.mxu0 %v1726
    %1834 = vmatmul.bf16.gmra.mxu0 %v1585
    %v1835 = vpop.f32.mrf.mxu0
    %v1836 = vadd.f32 0.0, %v1835
    %v1837 = vpop.f32.mrf.mxu0
    %1838 = vdwg.mxu0
    %v1839 = vadd.f32 %v1591, %v1797
    %v1840 = vadd.f32 %v1592, %v1810
    %v1841 = vadd.f32 %v1593, %v1823
    %v1842 = vadd.f32 %v1594, %v1836
    %v1843 = vxor.u32 %v1839, 2147483648
    %v1844 = vxor.u32 %v1840, 2147483648
    %v1845 = vxor.u32 %v1841, 2147483648
    %v1846 = vmul.f32 %v1843, 1.442695
    %v1847 = vpow.pop %v1846
    %v1848 = vmul.f32 %v1844, 1.442695
    %v1849 = vpow.pop %v1848
    %v1850 = vmul.f32 %v1845, 1.442695
    %v1851 = vpow.pop %v1850
    %v1852 = vadd.f32 %v1847, 1.0
    %v1853 = vadd.f32 %v1849, 1.0
    %v1854 = vadd.f32 %v1851, 1.0
    %v1855 = vrcp.pop %v1852
    %v1856 = vmul.f32 %v1852, %v1855
    %v1857 = vsub.f32 1.0, %v1856
    %v1858 = vmul.f32 %v1855, %v1857
    %v1859 = vadd.f32 %v1855, %v1858
    %vm1860 = vweird.f32 %v1852
    %vm1861 = vweird.f32 %v1855
    %vm1862 = vmor %vm1860, %vm1861
    %v1863 = vsel %vm1862, %v1855, %v1859
    %v1864 = vand.u32 2147483647, %v1852
    %vm1865 = vcmp.eq.f32.partialorder %v1864, 8.507059e+37
    %v1866 = vand.u32 %v1852, 2147483648
    %v1867 = vor.u32 1.1754944e-38, %v1866
    %v1868 = vsel %vm1865, %v1867, %v1863
    %v1869 = vmul.f32 1.0, %v1868
    %v1870 = vrcp.pop %v1853
    %v1871 = vmul.f32 %v1853, %v1870
    %v1872 = vsub.f32 1.0, %v1871
    %v1873 = vmul.f32 %v1870, %v1872
    %v1874 = vadd.f32 %v1870, %v1873
    %vm1875 = vweird.f32 %v1853
    %vm1876 = vweird.f32 %v1870
    %vm1877 = vmor %vm1875, %vm1876
    %v1878 = vsel %vm1877, %v1870, %v1874
    %v1879 = vand.u32 2147483647, %v1853
    %vm1880 = vcmp.eq.f32.partialorder %v1879, 8.507059e+37
    %v1881 = vand.u32 %v1853, 2147483648
    %v1882 = vor.u32 1.1754944e-38, %v1881
    %v1883 = vsel %vm1880, %v1882, %v1878
    %v1884 = vmul.f32 1.0, %v1883
    %v1885 = vrcp.pop %v1854
    %v1886 = vmul.f32 %v1854, %v1885
    %v1887 = vsub.f32 1.0, %v1886
    %v1888 = vmul.f32 %v1885, %v1887
    %v1889 = vadd.f32 %v1885, %v1888
    %vm1890 = vweird.f32 %v1854
    %vm1891 = vweird.f32 %v1885
    %vm1892 = vmor %vm1890, %vm1891
    %v1893 = vsel %vm1892, %v1885, %v1889
    %v1894 = vand.u32 2147483647, %v1854
    %vm1895 = vcmp.eq.f32.partialorder %v1894, 8.507059e+37
    %v1896 = vand.u32 %v1854, 2147483648
    %v1897 = vor.u32 1.1754944e-38, %v1896
    %v1898 = vsel %vm1895, %v1897, %v1893
    %v1899 = vmul.f32 1.0, %v1898
    %v1900 = vtanh.pop %v1842
    %v1901 = vmul.f32 %v1884, %v1582
    %v1902 = vmul.f32 %v1869, %v1900
    %v1903 = vadd.f32 %v1901, %v1902
    %v1904 = vtanh.pop %v1903
    %v1905 = vmul.f32 %v1899, %v1904
    %v1906 = vpack.c.bf16 %v1905, %v1905
    %s1907 = scalar_lea.vmem [#allocation2], 16
    %1908 = vst [vmem:[%s1907] sm:$0xf] %v1906
    %s1909 = smul.u32 5, 4
    %s1910 = smul.addr %s1909, 8
    %s1911 = scalar_lea.vmem [#allocation3], %s1910
    %v1912 = vld [vmem:[%s1911] sm:$0xff]
    %v1913 = vld [vmem:[%s1911 + $0x8] sm:$0xff]
    %v1914 = vld [vmem:[%s1911 + $0x10] sm:$0xff]
    %v1915 = vld [vmem:[%s1911 + $0x18] sm:$0xff]
    %v1916 = vld [vmem:[#allocation7] sm:$0xff]
    %v1917 = vld [vmem:[#allocation7 + $0x8] sm:$0xff]
    %v1918 = vld [vmem:[#allocation7 + $0x10] sm:$0xff]
    %v1919 = vld [vmem:[#allocation7 + $0x18] sm:$0xff]
    %v1920 = vld [vmem:[#allocation7 + $0x20] sm:$0xff]
    %v1921 = vld [vmem:[#allocation7 + $0x28] sm:$0xff]
    %v1922 = vld [vmem:[#allocation7 + $0x30] sm:$0xff]
    %v1923 = vld [vmem:[#allocation7 + $0x38] sm:$0xff]
    %v1924 = vld [vmem:[#allocation7 + $0x40] sm:$0xff]
    %v1925 = vld [vmem:[#allocation7 + $0x48] sm:$0xff]
    %v1926 = vld [vmem:[#allocation7 + $0x50] sm:$0xff]
    %v1927 = vld [vmem:[#allocation7 + $0x58] sm:$0xff]
    %v1928 = vld [vmem:[#allocation7 + $0x60] sm:$0xff]
    %v1929 = vld [vmem:[#allocation7 + $0x68] sm:$0xff]
    %v1930 = vld [vmem:[#allocation7 + $0x70] sm:$0xff]
    %v1931 = vld [vmem:[#allocation7 + $0x78] sm:$0xff]
    %v1932 = vld [vmem:[#allocation7 + $0x80] sm:$0xff]
    %v1933 = vld [vmem:[#allocation7 + $0x88] sm:$0xff]
    %v1934 = vld [vmem:[#allocation7 + $0x90] sm:$0xff]
    %v1935 = vld [vmem:[#allocation7 + $0x98] sm:$0xff]
    %v1936 = vld [vmem:[#allocation7 + $0xa0] sm:$0xff]
    %v1937 = vld [vmem:[#allocation7 + $0xa8] sm:$0xff]
    %v1938 = vld [vmem:[#allocation7 + $0xb0] sm:$0xff]
    %v1939 = vld [vmem:[#allocation7 + $0xb8] sm:$0xff]
    %v1940 = vld [vmem:[#allocation7 + $0xc0] sm:$0xff]
    %v1941 = vld [vmem:[#allocation7 + $0xc8] sm:$0xff]
    %v1942 = vld [vmem:[#allocation7 + $0xd0] sm:$0xff]
    %v1943 = vld [vmem:[#allocation7 + $0xd8] sm:$0xff]
    %v1944 = vld [vmem:[#allocation7 + $0xe0] sm:$0xff]
    %v1945 = vld [vmem:[#allocation7 + $0xe8] sm:$0xff]
    %v1946 = vld [vmem:[#allocation7 + $0xf0] sm:$0xff]
    %v1947 = vld [vmem:[#allocation7 + $0xf8] sm:$0xff]
    %v1980 = vunpack.c.l.b16 %v1916
    %v1981 = vunpack.c.h.b16 %v1916
    %v1982 = vunpack.c.l.b16 %v1917
    %v1983 = vunpack.c.h.b16 %v1917
    %v1984 = vunpack.c.l.b16 %v1918
    %v1985 = vunpack.c.h.b16 %v1918
    %v1986 = vunpack.c.l.b16 %v1919
    %v1987 = vunpack.c.h.b16 %v1919
    %v1988 = vunpack.c.l.b16 %v1920
    %v1989 = vunpack.c.h.b16 %v1920
    %v1990 = vunpack.c.l.b16 %v1921
    %v1991 = vunpack.c.h.b16 %v1921
    %v1992 = vunpack.c.l.b16 %v1922
    %v1993 = vunpack.c.h.b16 %v1922
    %v1994 = vunpack.c.l.b16 %v1923
    %v1995 = vunpack.c.h.b16 %v1923
    %v1996 = vunpack.c.l.b16 %v1924
    %v1997 = vunpack.c.h.b16 %v1924
    %v1998 = vunpack.c.l.b16 %v1925
    %v1999 = vunpack.c.h.b16 %v1925
    %v2000 = vunpack.c.l.b16 %v1926
    %v2001 = vunpack.c.h.b16 %v1926
    %v2002 = vunpack.c.l.b16 %v1927
    %v2003 = vunpack.c.h.b16 %v1927
    %v2004 = vunpack.c.l.b16 %v1928
    %v2005 = vunpack.c.h.b16 %v1928
    %v2006 = vunpack.c.l.b16 %v1929
    %v2007 = vunpack.c.h.b16 %v1929
    %v2008 = vunpack.c.l.b16 %v1930
    %v2009 = vunpack.c.h.b16 %v1930
    %v2010 = vunpack.c.l.b16 %v1931
    %v2011 = vunpack.c.h.b16 %v1931
    %v2012 = vunpack.c.l.b16 %v1932
    %v2013 = vunpack.c.h.b16 %v1932
    %v2014 = vunpack.c.l.b16 %v1933
    %v2015 = vunpack.c.h.b16 %v1933
    %v2016 = vunpack.c.l.b16 %v1934
    %v2017 = vunpack.c.h.b16 %v1934
    %v2018 = vunpack.c.l.b16 %v1935
    %v2019 = vunpack.c.h.b16 %v1935
    %v2020 = vunpack.c.l.b16 %v1936
    %v2021 = vunpack.c.h.b16 %v1936
    %v2022 = vunpack.c.l.b16 %v1937
    %v2023 = vunpack.c.h.b16 %v1937
    %v2024 = vunpack.c.l.b16 %v1938
    %v2025 = vunpack.c.h.b16 %v1938
    %v2026 = vunpack.c.l.b16 %v1939
    %v2027 = vunpack.c.h.b16 %v1939
    %v2028 = vunpack.c.l.b16 %v1940
    %v2029 = vunpack.c.h.b16 %v1940
    %v2030 = vunpack.c.l.b16 %v1941
    %v2031 = vunpack.c.h.b16 %v1941
    %v2032 = vunpack.c.l.b16 %v1942
    %v2033 = vunpack.c.h.b16 %v1942
    %v2034 = vunpack.c.l.b16 %v1943
    %v2035 = vunpack.c.h.b16 %v1943
    %v2036 = vunpack.c.l.b16 %v1944
    %v2037 = vunpack.c.h.b16 %v1944
    %v2038 = vunpack.c.l.b16 %v1945
    %v2039 = vunpack.c.h.b16 %v1945
    %v2040 = vunpack.c.l.b16 %v1946
    %v2041 = vunpack.c.h.b16 %v1946
    %v2042 = vunpack.c.l.b16 %v1947
    %v2043 = vunpack.c.h.b16 %v1947
    %v2044 = vpack.c.b16 %v1984, %v1980
    %v2045 = vpack.c.b16 %v1985, %v1981
    %v2046 = vpack.c.b16 %v1986, %v1982
    %v2047 = vpack.c.b16 %v1987, %v1983
    %v2048 = vpack.c.b16 %v1992, %v1988
    %v2049 = vpack.c.b16 %v1993, %v1989
    %v2050 = vpack.c.b16 %v1994, %v1990
    %v2051 = vpack.c.b16 %v1995, %v1991
    %v2052 = vpack.c.b16 %v2000, %v1996
    %v2053 = vpack.c.b16 %v2001, %v1997
    %v2054 = vpack.c.b16 %v2002, %v1998
    %v2055 = vpack.c.b16 %v2003, %v1999
    %v2056 = vpack.c.b16 %v2008, %v2004
    %v2057 = vpack.c.b16 %v2009, %v2005
    %v2058 = vpack.c.b16 %v2010, %v2006
    %v2059 = vpack.c.b16 %v2011, %v2007
    %v2060 = vpack.c.b16 %v2016, %v2012
    %v2061 = vpack.c.b16 %v2017, %v2013
    %v2062 = vpack.c.b16 %v2018, %v2014
    %v2063 = vpack.c.b16 %v2019, %v2015
    %v2064 = vpack.c.b16 %v2024, %v2020
    %v2065 = vpack.c.b16 %v2025, %v2021
    %v2066 = vpack.c.b16 %v2026, %v2022
    %v2067 = vpack.c.b16 %v2027, %v2023
    %v2068 = vpack.c.b16 %v2032, %v2028
    %v2069 = vpack.c.b16 %v2033, %v2029
    %v2070 = vpack.c.b16 %v2034, %v2030
    %v2071 = vpack.c.b16 %v2035, %v2031
    %v2072 = vpack.c.b16 %v2040, %v2036
    %v2073 = vpack.c.b16 %v2041, %v2037
    %v2074 = vpack.c.b16 %v2042, %v2038
    %v2075 = vpack.c.b16 %v2043, %v2039
    %2108 = vmatpush.bf16.msra.mxu0 %v2072
    %2109 = vmatpush.bf16.msra.mxu0 %v2068
    %2110 = vmatpush.bf16.msra.mxu0 %v2064
    %2111 = vmatpush.bf16.msra.mxu0 %v2060
    %2112 = vmatpush.bf16.msra.mxu0 %v2056
    %2113 = vmatpush.bf16.msra.mxu0 %v2052
    %2114 = vmatpush.bf16.msra.mxu0 %v2048
    %2115 = vmatpush.bf16.msra.mxu0 %v2044
    %2116 = vmatmul.bf16.gmra.mxu0 %v1906
    %v2117 = vpop.f32.mrf.mxu0
    %v2118 = vadd.f32 0.0, %v2117
    %v2119 = vpop.f32.mrf.mxu0
    %2120 = vdwg.mxu0
    %2121 = vmatpush.bf16.msra.mxu0 %v2073
    %2122 = vmatpush.bf16.msra.mxu0 %v2069
    %2123 = vmatpush.bf16.msra.mxu0 %v2065
    %2124 = vmatpush.bf16.msra.mxu0 %v2061
    %2125 = vmatpush.bf16.msra.mxu0 %v2057
    %2126 = vmatpush.bf16.msra.mxu0 %v2053
    %2127 = vmatpush.bf16.msra.mxu0 %v2049
    %2128 = vmatpush.bf16.msra.mxu0 %v2045
    %2129 = vmatmul.bf16.gmra.mxu0 %v1906
    %v2130 = vpop.f32.mrf.mxu0
    %v2131 = vadd.f32 0.0, %v2130
    %v2132 = vpop.f32.mrf.mxu0
    %2133 = vdwg.mxu0
    %2134 = vmatpush.bf16.msra.mxu0 %v2074
    %2135 = vmatpush.bf16.msra.mxu0 %v2070
    %2136 = vmatpush.bf16.msra.mxu0 %v2066
    %2137 = vmatpush.bf16.msra.mxu0 %v2062
    %2138 = vmatpush.bf16.msra.mxu0 %v2058
    %2139 = vmatpush.bf16.msra.mxu0 %v2054
    %2140 = vmatpush.bf16.msra.mxu0 %v2050
    %2141 = vmatpush.bf16.msra.mxu0 %v2046
    %2142 = vmatmul.bf16.gmra.mxu0 %v1906
    %v2143 = vpop.f32.mrf.mxu0
    %v2144 = vadd.f32 0.0, %v2143
    %v2145 = vpop.f32.mrf.mxu0
    %2146 = vdwg.mxu0
    %2147 = vmatpush.bf16.msra.mxu0 %v2075
    %2148 = vmatpush.bf16.msra.mxu0 %v2071
    %2149 = vmatpush.bf16.msra.mxu0 %v2067
    %2150 = vmatpush.bf16.msra.mxu0 %v2063
    %2151 = vmatpush.bf16.msra.mxu0 %v2059
    %2152 = vmatpush.bf16.msra.mxu0 %v2055
    %2153 = vmatpush.bf16.msra.mxu0 %v2051
    %2154 = vmatpush.bf16.msra.mxu0 %v2047
    %2155 = vmatmul.bf16.gmra.mxu0 %v1906
    %v2156 = vpop.f32.mrf.mxu0
    %v2157 = vadd.f32 0.0, %v2156
    %v2158 = vpop.f32.mrf.mxu0
    %2159 = vdwg.mxu0
    %v2160 = vadd.f32 %v1912, %v2118
    %v2161 = vadd.f32 %v1913, %v2131
    %v2162 = vadd.f32 %v1914, %v2144
    %v2163 = vadd.f32 %v1915, %v2157
    %v2164 = vxor.u32 %v2160, 2147483648
    %v2165 = vxor.u32 %v2161, 2147483648
    %v2166 = vxor.u32 %v2162, 2147483648
    %v2167 = vmul.f32 %v2164, 1.442695
    %v2168 = vpow.pop %v2167
    %v2169 = vmul.f32 %v2165, 1.442695
    %v2170 = vpow.pop %v2169
    %v2171 = vmul.f32 %v2166, 1.442695
    %v2172 = vpow.pop %v2171
    %v2173 = vadd.f32 %v2168, 1.0
    %v2174 = vadd.f32 %v2170, 1.0
    %v2175 = vadd.f32 %v2172, 1.0
    %v2176 = vrcp.pop %v2173
    %v2177 = vmul.f32 %v2173, %v2176
    %v2178 = vsub.f32 1.0, %v2177
    %v2179 = vmul.f32 %v2176, %v2178
    %v2180 = vadd.f32 %v2176, %v2179
    %vm2181 = vweird.f32 %v2173
    %vm2182 = vweird.f32 %v2176
    %vm2183 = vmor %vm2181, %vm2182
    %v2184 = vsel %vm2183, %v2176, %v2180
    %v2185 = vand.u32 2147483647, %v2173
    %vm2186 = vcmp.eq.f32.partialorder %v2185, 8.507059e+37
    %v2187 = vand.u32 %v2173, 2147483648
    %v2188 = vor.u32 1.1754944e-38, %v2187
    %v2189 = vsel %vm2186, %v2188, %v2184
    %v2190 = vmul.f32 1.0, %v2189
    %v2191 = vrcp.pop %v2174
    %v2192 = vmul.f32 %v2174, %v2191
    %v2193 = vsub.f32 1.0, %v2192
    %v2194 = vmul.f32 %v2191, %v2193
    %v2195 = vadd.f32 %v2191, %v2194
    %vm2196 = vweird.f32 %v2174
    %vm2197 = vweird.f32 %v2191
    %vm2198 = vmor %vm2196, %vm2197
    %v2199 = vsel %vm2198, %v2191, %v2195
    %v2200 = vand.u32 2147483647, %v2174
    %vm2201 = vcmp.eq.f32.partialorder %v2200, 8.507059e+37
    %v2202 = vand.u32 %v2174, 2147483648
    %v2203 = vor.u32 1.1754944e-38, %v2202
    %v2204 = vsel %vm2201, %v2203, %v2199
    %v2205 = vmul.f32 1.0, %v2204
    %v2206 = vrcp.pop %v2175
    %v2207 = vmul.f32 %v2175, %v2206
    %v2208 = vsub.f32 1.0, %v2207
    %v2209 = vmul.f32 %v2206, %v2208
    %v2210 = vadd.f32 %v2206, %v2209
    %vm2211 = vweird.f32 %v2175
    %vm2212 = vweird.f32 %v2206
    %vm2213 = vmor %vm2211, %vm2212
    %v2214 = vsel %vm2213, %v2206, %v2210
    %v2215 = vand.u32 2147483647, %v2175
    %vm2216 = vcmp.eq.f32.partialorder %v2215, 8.507059e+37
    %v2217 = vand.u32 %v2175, 2147483648
    %v2218 = vor.u32 1.1754944e-38, %v2217
    %v2219 = vsel %vm2216, %v2218, %v2214
    %v2220 = vmul.f32 1.0, %v2219
    %v2221 = vtanh.pop %v2163
    %v2222 = vmul.f32 %v2205, %v1903
    %v2223 = vmul.f32 %v2190, %v2221
    %v2224 = vadd.f32 %v2222, %v2223
    %v2225 = vtanh.pop %v2224
    %v2226 = vmul.f32 %v2220, %v2225
    %v2227 = vpack.c.bf16 %v2226, %v2226
    %s2228 = scalar_lea.vmem [#allocation2], 20
    %2229 = vst [vmem:[%s2228] sm:$0xf] %v2227
    %s2230 = smul.u32 6, 4
    %s2231 = smul.addr %s2230, 8
    %s2232 = scalar_lea.vmem [#allocation3], %s2231
    %v2233 = vld [vmem:[%s2232] sm:$0xff]
    %v2234 = vld [vmem:[%s2232 + $0x8] sm:$0xff]
    %v2235 = vld [vmem:[%s2232 + $0x10] sm:$0xff]
    %v2236 = vld [vmem:[%s2232 + $0x18] sm:$0xff]
    %v2237 = vld [vmem:[#allocation7] sm:$0xff]
    %v2238 = vld [vmem:[#allocation7 + $0x8] sm:$0xff]
    %v2239 = vld [vmem:[#allocation7 + $0x10] sm:$0xff]
    %v2240 = vld [vmem:[#allocation7 + $0x18] sm:$0xff]
    %v2241 = vld [vmem:[#allocation7 + $0x20] sm:$0xff]
    %v2242 = vld [vmem:[#allocation7 + $0x28] sm:$0xff]
    %v2243 = vld [vmem:[#allocation7 + $0x30] sm:$0xff]
    %v2244 = vld [vmem:[#allocation7 + $0x38] sm:$0xff]
    %v2245 = vld [vmem:[#allocation7 + $0x40] sm:$0xff]
    %v2246 = vld [vmem:[#allocation7 + $0x48] sm:$0xff]
    %v2247 = vld [vmem:[#allocation7 + $0x50] sm:$0xff]
    %v2248 = vld [vmem:[#allocation7 + $0x58] sm:$0xff]
    %v2249 = vld [vmem:[#allocation7 + $0x60] sm:$0xff]
    %v2250 = vld [vmem:[#allocation7 + $0x68] sm:$0xff]
    %v2251 = vld [vmem:[#allocation7 + $0x70] sm:$0xff]
    %v2252 = vld [vmem:[#allocation7 + $0x78] sm:$0xff]
    %v2253 = vld [vmem:[#allocation7 + $0x80] sm:$0xff]
    %v2254 = vld [vmem:[#allocation7 + $0x88] sm:$0xff]
    %v2255 = vld [vmem:[#allocation7 + $0x90] sm:$0xff]
    %v2256 = vld [vmem:[#allocation7 + $0x98] sm:$0xff]
    %v2257 = vld [vmem:[#allocation7 + $0xa0] sm:$0xff]
    %v2258 = vld [vmem:[#allocation7 + $0xa8] sm:$0xff]
    %v2259 = vld [vmem:[#allocation7 + $0xb0] sm:$0xff]
    %v2260 = vld [vmem:[#allocation7 + $0xb8] sm:$0xff]
    %v2261 = vld [vmem:[#allocation7 + $0xc0] sm:$0xff]
    %v2262 = vld [vmem:[#allocation7 + $0xc8] sm:$0xff]
    %v2263 = vld [vmem:[#allocation7 + $0xd0] sm:$0xff]
    %v2264 = vld [vmem:[#allocation7 + $0xd8] sm:$0xff]
    %v2265 = vld [vmem:[#allocation7 + $0xe0] sm:$0xff]
    %v2266 = vld [vmem:[#allocation7 + $0xe8] sm:$0xff]
    %v2267 = vld [vmem:[#allocation7 + $0xf0] sm:$0xff]
    %v2268 = vld [vmem:[#allocation7 + $0xf8] sm:$0xff]
    %v2301 = vunpack.c.l.b16 %v2237
    %v2302 = vunpack.c.h.b16 %v2237
    %v2303 = vunpack.c.l.b16 %v2238
    %v2304 = vunpack.c.h.b16 %v2238
    %v2305 = vunpack.c.l.b16 %v2239
    %v2306 = vunpack.c.h.b16 %v2239
    %v2307 = vunpack.c.l.b16 %v2240
    %v2308 = vunpack.c.h.b16 %v2240
    %v2309 = vunpack.c.l.b16 %v2241
    %v2310 = vunpack.c.h.b16 %v2241
    %v2311 = vunpack.c.l.b16 %v2242
    %v2312 = vunpack.c.h.b16 %v2242
    %v2313 = vunpack.c.l.b16 %v2243
    %v2314 = vunpack.c.h.b16 %v2243
    %v2315 = vunpack.c.l.b16 %v2244
    %v2316 = vunpack.c.h.b16 %v2244
    %v2317 = vunpack.c.l.b16 %v2245
    %v2318 = vunpack.c.h.b16 %v2245
    %v2319 = vunpack.c.l.b16 %v2246
    %v2320 = vunpack.c.h.b16 %v2246
    %v2321 = vunpack.c.l.b16 %v2247
    %v2322 = vunpack.c.h.b16 %v2247
    %v2323 = vunpack.c.l.b16 %v2248
    %v2324 = vunpack.c.h.b16 %v2248
    %v2325 = vunpack.c.l.b16 %v2249
    %v2326 = vunpack.c.h.b16 %v2249
    %v2327 = vunpack.c.l.b16 %v2250
    %v2328 = vunpack.c.h.b16 %v2250
    %v2329 = vunpack.c.l.b16 %v2251
    %v2330 = vunpack.c.h.b16 %v2251
    %v2331 = vunpack.c.l.b16 %v2252
    %v2332 = vunpack.c.h.b16 %v2252
    %v2333 = vunpack.c.l.b16 %v2253
    %v2334 = vunpack.c.h.b16 %v2253
    %v2335 = vunpack.c.l.b16 %v2254
    %v2336 = vunpack.c.h.b16 %v2254
    %v2337 = vunpack.c.l.b16 %v2255
    %v2338 = vunpack.c.h.b16 %v2255
    %v2339 = vunpack.c.l.b16 %v2256
    %v2340 = vunpack.c.h.b16 %v2256
    %v2341 = vunpack.c.l.b16 %v2257
    %v2342 = vunpack.c.h.b16 %v2257
    %v2343 = vunpack.c.l.b16 %v2258
    %v2344 = vunpack.c.h.b16 %v2258
    %v2345 = vunpack.c.l.b16 %v2259
    %v2346 = vunpack.c.h.b16 %v2259
    %v2347 = vunpack.c.l.b16 %v2260
    %v2348 = vunpack.c.h.b16 %v2260
    %v2349 = vunpack.c.l.b16 %v2261
    %v2350 = vunpack.c.h.b16 %v2261
    %v2351 = vunpack.c.l.b16 %v2262
    %v2352 = vunpack.c.h.b16 %v2262
    %v2353 = vunpack.c.l.b16 %v2263
    %v2354 = vunpack.c.h.b16 %v2263
    %v2355 = vunpack.c.l.b16 %v2264
    %v2356 = vunpack.c.h.b16 %v2264
    %v2357 = vunpack.c.l.b16 %v2265
    %v2358 = vunpack.c.h.b16 %v2265
    %v2359 = vunpack.c.l.b16 %v2266
    %v2360 = vunpack.c.h.b16 %v2266
    %v2361 = vunpack.c.l.b16 %v2267
    %v2362 = vunpack.c.h.b16 %v2267
    %v2363 = vunpack.c.l.b16 %v2268
    %v2364 = vunpack.c.h.b16 %v2268
    %v2365 = vpack.c.b16 %v2305, %v2301
    %v2366 = vpack.c.b16 %v2306, %v2302
    %v2367 = vpack.c.b16 %v2307, %v2303
    %v2368 = vpack.c.b16 %v2308, %v2304
    %v2369 = vpack.c.b16 %v2313, %v2309
    %v2370 = vpack.c.b16 %v2314, %v2310
    %v2371 = vpack.c.b16 %v2315, %v2311
    %v2372 = vpack.c.b16 %v2316, %v2312
    %v2373 = vpack.c.b16 %v2321, %v2317
    %v2374 = vpack.c.b16 %v2322, %v2318
    %v2375 = vpack.c.b16 %v2323, %v2319
    %v2376 = vpack.c.b16 %v2324, %v2320
    %v2377 = vpack.c.b16 %v2329, %v2325
    %v2378 = vpack.c.b16 %v2330, %v2326
    %v2379 = vpack.c.b16 %v2331, %v2327
    %v2380 = vpack.c.b16 %v2332, %v2328
    %v2381 = vpack.c.b16 %v2337, %v2333
    %v2382 = vpack.c.b16 %v2338, %v2334
    %v2383 = vpack.c.b16 %v2339, %v2335
    %v2384 = vpack.c.b16 %v2340, %v2336
    %v2385 = vpack.c.b16 %v2345, %v2341
    %v2386 = vpack.c.b16 %v2346, %v2342
    %v2387 = vpack.c.b16 %v2347, %v2343
    %v2388 = vpack.c.b16 %v2348, %v2344
    %v2389 = vpack.c.b16 %v2353, %v2349
    %v2390 = vpack.c.b16 %v2354, %v2350
    %v2391 = vpack.c.b16 %v2355, %v2351
    %v2392 = vpack.c.b16 %v2356, %v2352
    %v2393 = vpack.c.b16 %v2361, %v2357
    %v2394 = vpack.c.b16 %v2362, %v2358
    %v2395 = vpack.c.b16 %v2363, %v2359
    %v2396 = vpack.c.b16 %v2364, %v2360
    %2429 = vmatpush.bf16.msra.mxu0 %v2393
    %2430 = vmatpush.bf16.msra.mxu0 %v2389
    %2431 = vmatpush.bf16.msra.mxu0 %v2385
    %2432 = vmatpush.bf16.msra.mxu0 %v2381
    %2433 = vmatpush.bf16.msra.mxu0 %v2377
    %2434 = vmatpush.bf16.msra.mxu0 %v2373
    %2435 = vmatpush.bf16.msra.mxu0 %v2369
    %2436 = vmatpush.bf16.msra.mxu0 %v2365
    %2437 = vmatmul.bf16.gmra.mxu0 %v2227
    %v2438 = vpop.f32.mrf.mxu0
    %v2439 = vadd.f32 0.0, %v2438
    %v2440 = vpop.f32.mrf.mxu0
    %2441 = vdwg.mxu0
    %2442 = vmatpush.bf16.msra.mxu0 %v2394
    %2443 = vmatpush.bf16.msra.mxu0 %v2390
    %2444 = vmatpush.bf16.msra.mxu0 %v2386
    %2445 = vmatpush.bf16.msra.mxu0 %v2382
    %2446 = vmatpush.bf16.msra.mxu0 %v2378
    %2447 = vmatpush.bf16.msra.mxu0 %v2374
    %2448 = vmatpush.bf16.msra.mxu0 %v2370
    %2449 = vmatpush.bf16.msra.mxu0 %v2366
    %2450 = vmatmul.bf16.gmra.mxu0 %v2227
    %v2451 = vpop.f32.mrf.mxu0
    %v2452 = vadd.f32 0.0, %v2451
    %v2453 = vpop.f32.mrf.mxu0
    %2454 = vdwg.mxu0
    %2455 = vmatpush.bf16.msra.mxu0 %v2395
    %2456 = vmatpush.bf16.msra.mxu0 %v2391
    %2457 = vmatpush.bf16.msra.mxu0 %v2387
    %2458 = vmatpush.bf16.msra.mxu0 %v2383
    %2459 = vmatpush.bf16.msra.mxu0 %v2379
    %2460 = vmatpush.bf16.msra.mxu0 %v2375
    %2461 = vmatpush.bf16.msra.mxu0 %v2371
    %2462 = vmatpush.bf16.msra.mxu0 %v2367
    %2463 = vmatmul.bf16.gmra.mxu0 %v2227
    %v2464 = vpop.f32.mrf.mxu0
    %v2465 = vadd.f32 0.0, %v2464
    %v2466 = vpop.f32.mrf.mxu0
    %2467 = vdwg.mxu0
    %2468 = vmatpush.bf16.msra.mxu0 %v2396
    %2469 = vmatpush.bf16.msra.mxu0 %v2392
    %2470 = vmatpush.bf16.msra.mxu0 %v2388
    %2471 = vmatpush.bf16.msra.mxu0 %v2384
    %2472 = vmatpush.bf16.msra.mxu0 %v2380
    %2473 = vmatpush.bf16.msra.mxu0 %v2376
    %2474 = vmatpush.bf16.msra.mxu0 %v2372
    %2475 = vmatpush.bf16.msra.mxu0 %v2368
    %2476 = vmatmul.bf16.gmra.mxu0 %v2227
    %v2477 = vpop.f32.mrf.mxu0
    %v2478 = vadd.f32 0.0, %v2477
    %v2479 = vpop.f32.mrf.mxu0
    %2480 = vdwg.mxu0
    %v2481 = vadd.f32 %v2233, %v2439
    %v2482 = vadd.f32 %v2234, %v2452
    %v2483 = vadd.f32 %v2235, %v2465
    %v2484 = vadd.f32 %v2236, %v2478
    %v2485 = vxor.u32 %v2481, 2147483648
    %v2486 = vxor.u32 %v2482, 2147483648
    %v2487 = vxor.u32 %v2483, 2147483648
    %v2488 = vmul.f32 %v2485, 1.442695
    %v2489 = vpow.pop %v2488
    %v2490 = vmul.f32 %v2486, 1.442695
    %v2491 = vpow.pop %v2490
    %v2492 = vmul.f32 %v2487, 1.442695
    %v2493 = vpow.pop %v2492
    %v2494 = vadd.f32 %v2489, 1.0
    %v2495 = vadd.f32 %v2491, 1.0
    %v2496 = vadd.f32 %v2493, 1.0
    %v2497 = vrcp.pop %v2494
    %v2498 = vmul.f32 %v2494, %v2497
    %v2499 = vsub.f32 1.0, %v2498
    %v2500 = vmul.f32 %v2497, %v2499
    %v2501 = vadd.f32 %v2497, %v2500
    %vm2502 = vweird.f32 %v2494
    %vm2503 = vweird.f32 %v2497
    %vm2504 = vmor %vm2502, %vm2503
    %v2505 = vsel %vm2504, %v2497, %v2501
    %v2506 = vand.u32 2147483647, %v2494
    %vm2507 = vcmp.eq.f32.partialorder %v2506, 8.507059e+37
    %v2508 = vand.u32 %v2494, 2147483648
    %v2509 = vor.u32 1.1754944e-38, %v2508
    %v2510 = vsel %vm2507, %v2509, %v2505
    %v2511 = vmul.f32 1.0, %v2510
    %v2512 = vrcp.pop %v2495
    %v2513 = vmul.f32 %v2495, %v2512
    %v2514 = vsub.f32 1.0, %v2513
    %v2515 = vmul.f32 %v2512, %v2514
    %v2516 = vadd.f32 %v2512, %v2515
    %vm2517 = vweird.f32 %v2495
    %vm2518 = vweird.f32 %v2512
    %vm2519 = vmor %vm2517, %vm2518
    %v2520 = vsel %vm2519, %v2512, %v2516
    %v2521 = vand.u32 2147483647, %v2495
    %vm2522 = vcmp.eq.f32.partialorder %v2521, 8.507059e+37
    %v2523 = vand.u32 %v2495, 2147483648
    %v2524 = vor.u32 1.1754944e-38, %v2523
    %v2525 = vsel %vm2522, %v2524, %v2520
    %v2526 = vmul.f32 1.0, %v2525
    %v2527 = vrcp.pop %v2496
    %v2528 = vmul.f32 %v2496, %v2527
    %v2529 = vsub.f32 1.0, %v2528
    %v2530 = vmul.f32 %v2527, %v2529
    %v2531 = vadd.f32 %v2527, %v2530
    %vm2532 = vweird.f32 %v2496
    %vm2533 = vweird.f32 %v2527
    %vm2534 = vmor %vm2532, %vm2533
    %v2535 = vsel %vm2534, %v2527, %v2531
    %v2536 = vand.u32 2147483647, %v2496
    %vm2537 = vcmp.eq.f32.partialorder %v2536, 8.507059e+37
    %v2538 = vand.u32 %v2496, 2147483648
    %v2539 = vor.u32 1.1754944e-38, %v2538
    %v2540 = vsel %vm2537, %v2539, %v2535
    %v2541 = vmul.f32 1.0, %v2540
    %v2542 = vtanh.pop %v2484
    %v2543 = vmul.f32 %v2526, %v2224
    %v2544 = vmul.f32 %v2511, %v2542
    %v2545 = vadd.f32 %v2543, %v2544
    %v2546 = vtanh.pop %v2545
    %v2547 = vmul.f32 %v2541, %v2546
    %v2548 = vpack.c.bf16 %v2547, %v2547
    %s2549 = scalar_lea.vmem [#allocation2], 24
    %2550 = vst [vmem:[%s2549] sm:$0xf] %v2548
    %s2551 = smul.u32 7, 4
    %s2552 = smul.addr %s2551, 8
    %s2553 = scalar_lea.vmem [#allocation3], %s2552
    %v2554 = vld [vmem:[%s2553] sm:$0xff]
    %v2555 = vld [vmem:[%s2553 + $0x8] sm:$0xff]
    %v2556 = vld [vmem:[%s2553 + $0x10] sm:$0xff]
    %v2557 = vld [vmem:[%s2553 + $0x18] sm:$0xff]
    %v2558 = vld [vmem:[#allocation7] sm:$0xff]
    %v2559 = vld [vmem:[#allocation7 + $0x8] sm:$0xff]
    %v2560 = vld [vmem:[#allocation7 + $0x10] sm:$0xff]
    %v2561 = vld [vmem:[#allocation7 + $0x18] sm:$0xff]
    %v2562 = vld [vmem:[#allocation7 + $0x20] sm:$0xff]
    %v2563 = vld [vmem:[#allocation7 + $0x28] sm:$0xff]
    %v2564 = vld [vmem:[#allocation7 + $0x30] sm:$0xff]
    %v2565 = vld [vmem:[#allocation7 + $0x38] sm:$0xff]
    %v2566 = vld [vmem:[#allocation7 + $0x40] sm:$0xff]
    %v2567 = vld [vmem:[#allocation7 + $0x48] sm:$0xff]
    %v2568 = vld [vmem:[#allocation7 + $0x50] sm:$0xff]
    %v2569 = vld [vmem:[#allocation7 + $0x58] sm:$0xff]
    %v2570 = vld [vmem:[#allocation7 + $0x60] sm:$0xff]
    %v2571 = vld [vmem:[#allocation7 + $0x68] sm:$0xff]
    %v2572 = vld [vmem:[#allocation7 + $0x70] sm:$0xff]
    %v2573 = vld [vmem:[#allocation7 + $0x78] sm:$0xff]
    %v2574 = vld [vmem:[#allocation7 + $0x80] sm:$0xff]
    %v2575 = vld [vmem:[#allocation7 + $0x88] sm:$0xff]
    %v2576 = vld [vmem:[#allocation7 + $0x90] sm:$0xff]
    %v2577 = vld [vmem:[#allocation7 + $0x98] sm:$0xff]
    %v2578 = vld [vmem:[#allocation7 + $0xa0] sm:$0xff]
    %v2579 = vld [vmem:[#allocation7 + $0xa8] sm:$0xff]
    %v2580 = vld [vmem:[#allocation7 + $0xb0] sm:$0xff]
    %v2581 = vld [vmem:[#allocation7 + $0xb8] sm:$0xff]
    %v2582 = vld [vmem:[#allocation7 + $0xc0] sm:$0xff]
    %v2583 = vld [vmem:[#allocation7 + $0xc8] sm:$0xff]
    %v2584 = vld [vmem:[#allocation7 + $0xd0] sm:$0xff]
    %v2585 = vld [vmem:[#allocation7 + $0xd8] sm:$0xff]
    %v2586 = vld [vmem:[#allocation7 + $0xe0] sm:$0xff]
    %v2587 = vld [vmem:[#allocation7 + $0xe8] sm:$0xff]
    %v2588 = vld [vmem:[#allocation7 + $0xf0] sm:$0xff]
    %v2589 = vld [vmem:[#allocation7 + $0xf8] sm:$0xff]
    %v2622 = vunpack.c.l.b16 %v2558
    %v2623 = vunpack.c.h.b16 %v2558
    %v2624 = vunpack.c.l.b16 %v2559
    %v2625 = vunpack.c.h.b16 %v2559
    %v2626 = vunpack.c.l.b16 %v2560
    %v2627 = vunpack.c.h.b16 %v2560
    %v2628 = vunpack.c.l.b16 %v2561
    %v2629 = vunpack.c.h.b16 %v2561
    %v2630 = vunpack.c.l.b16 %v2562
    %v2631 = vunpack.c.h.b16 %v2562
    %v2632 = vunpack.c.l.b16 %v2563
    %v2633 = vunpack.c.h.b16 %v2563
    %v2634 = vunpack.c.l.b16 %v2564
    %v2635 = vunpack.c.h.b16 %v2564
    %v2636 = vunpack.c.l.b16 %v2565
    %v2637 = vunpack.c.h.b16 %v2565
    %v2638 = vunpack.c.l.b16 %v2566
    %v2639 = vunpack.c.h.b16 %v2566
    %v2640 = vunpack.c.l.b16 %v2567
    %v2641 = vunpack.c.h.b16 %v2567
    %v2642 = vunpack.c.l.b16 %v2568
    %v2643 = vunpack.c.h.b16 %v2568
    %v2644 = vunpack.c.l.b16 %v2569
    %v2645 = vunpack.c.h.b16 %v2569
    %v2646 = vunpack.c.l.b16 %v2570
    %v2647 = vunpack.c.h.b16 %v2570
    %v2648 = vunpack.c.l.b16 %v2571
    %v2649 = vunpack.c.h.b16 %v2571
    %v2650 = vunpack.c.l.b16 %v2572
    %v2651 = vunpack.c.h.b16 %v2572
    %v2652 = vunpack.c.l.b16 %v2573
    %v2653 = vunpack.c.h.b16 %v2573
    %v2654 = vunpack.c.l.b16 %v2574
    %v2655 = vunpack.c.h.b16 %v2574
    %v2656 = vunpack.c.l.b16 %v2575
    %v2657 = vunpack.c.h.b16 %v2575
    %v2658 = vunpack.c.l.b16 %v2576
    %v2659 = vunpack.c.h.b16 %v2576
    %v2660 = vunpack.c.l.b16 %v2577
    %v2661 = vunpack.c.h.b16 %v2577
    %v2662 = vunpack.c.l.b16 %v2578
    %v2663 = vunpack.c.h.b16 %v2578
    %v2664 = vunpack.c.l.b16 %v2579
    %v2665 = vunpack.c.h.b16 %v2579
    %v2666 = vunpack.c.l.b16 %v2580
    %v2667 = vunpack.c.h.b16 %v2580
    %v2668 = vunpack.c.l.b16 %v2581
    %v2669 = vunpack.c.h.b16 %v2581
    %v2670 = vunpack.c.l.b16 %v2582
    %v2671 = vunpack.c.h.b16 %v2582
    %v2672 = vunpack.c.l.b16 %v2583
    %v2673 = vunpack.c.h.b16 %v2583
    %v2674 = vunpack.c.l.b16 %v2584
    %v2675 = vunpack.c.h.b16 %v2584
    %v2676 = vunpack.c.l.b16 %v2585
    %v2677 = vunpack.c.h.b16 %v2585
    %v2678 = vunpack.c.l.b16 %v2586
    %v2679 = vunpack.c.h.b16 %v2586
    %v2680 = vunpack.c.l.b16 %v2587
    %v2681 = vunpack.c.h.b16 %v2587
    %v2682 = vunpack.c.l.b16 %v2588
    %v2683 = vunpack.c.h.b16 %v2588
    %v2684 = vunpack.c.l.b16 %v2589
    %v2685 = vunpack.c.h.b16 %v2589
    %v2686 = vpack.c.b16 %v2626, %v2622
    %v2687 = vpack.c.b16 %v2627, %v2623
    %v2688 = vpack.c.b16 %v2628, %v2624
    %v2689 = vpack.c.b16 %v2629, %v2625
    %v2690 = vpack.c.b16 %v2634, %v2630
    %v2691 = vpack.c.b16 %v2635, %v2631
    %v2692 = vpack.c.b16 %v2636, %v2632
    %v2693 = vpack.c.b16 %v2637, %v2633
    %v2694 = vpack.c.b16 %v2642, %v2638
    %v2695 = vpack.c.b16 %v2643, %v2639
    %v2696 = vpack.c.b16 %v2644, %v2640
    %v2697 = vpack.c.b16 %v2645, %v2641
    %v2698 = vpack.c.b16 %v2650, %v2646
    %v2699 = vpack.c.b16 %v2651, %v2647
    %v2700 = vpack.c.b16 %v2652, %v2648
    %v2701 = vpack.c.b16 %v2653, %v2649
    %v2702 = vpack.c.b16 %v2658, %v2654
    %v2703 = vpack.c.b16 %v2659, %v2655
    %v2704 = vpack.c.b16 %v2660, %v2656
    %v2705 = vpack.c.b16 %v2661, %v2657
    %v2706 = vpack.c.b16 %v2666, %v2662
    %v2707 = vpack.c.b16 %v2667, %v2663
    %v2708 = vpack.c.b16 %v2668, %v2664
    %v2709 = vpack.c.b16 %v2669, %v2665
    %v2710 = vpack.c.b16 %v2674, %v2670
    %v2711 = vpack.c.b16 %v2675, %v2671
    %v2712 = vpack.c.b16 %v2676, %v2672
    %v2713 = vpack.c.b16 %v2677, %v2673
    %v2714 = vpack.c.b16 %v2682, %v2678
    %v2715 = vpack.c.b16 %v2683, %v2679
    %v2716 = vpack.c.b16 %v2684, %v2680
    %v2717 = vpack.c.b16 %v2685, %v2681
    %2750 = vmatpush.bf16.msra.mxu0 %v2714
    %2751 = vmatpush.bf16.msra.mxu0 %v2710
    %2752 = vmatpush.bf16.msra.mxu0 %v2706
    %2753 = vmatpush.bf16.msra.mxu0 %v2702
    %2754 = vmatpush.bf16.msra.mxu0 %v2698
    %2755 = vmatpush.bf16.msra.mxu0 %v2694
    %2756 = vmatpush.bf16.msra.mxu0 %v2690
    %2757 = vmatpush.bf16.msra.mxu0 %v2686
    %2758 = vmatmul.bf16.gmra.mxu0 %v2548
    %v2759 = vpop.f32.mrf.mxu0
    %v2760 = vadd.f32 0.0, %v2759
    %v2761 = vpop.f32.mrf.mxu0
    %2762 = vdwg.mxu0
    %2763 = vmatpush.bf16.msra.mxu0 %v2715
    %2764 = vmatpush.bf16.msra.mxu0 %v2711
    %2765 = vmatpush.bf16.msra.mxu0 %v2707
    %2766 = vmatpush.bf16.msra.mxu0 %v2703
    %2767 = vmatpush.bf16.msra.mxu0 %v2699
    %2768 = vmatpush.bf16.msra.mxu0 %v2695
    %2769 = vmatpush.bf16.msra.mxu0 %v2691
    %2770 = vmatpush.bf16.msra.mxu0 %v2687
    %2771 = vmatmul.bf16.gmra.mxu0 %v2548
    %v2772 = vpop.f32.mrf.mxu0
    %v2773 = vadd.f32 0.0, %v2772
    %v2774 = vpop.f32.mrf.mxu0
    %2775 = vdwg.mxu0
    %2776 = vmatpush.bf16.msra.mxu0 %v2716
    %2777 = vmatpush.bf16.msra.mxu0 %v2712
    %2778 = vmatpush.bf16.msra.mxu0 %v2708
    %2779 = vmatpush.bf16.msra.mxu0 %v2704
    %2780 = vmatpush.bf16.msra.mxu0 %v2700
    %2781 = vmatpush.bf16.msra.mxu0 %v2696
    %2782 = vmatpush.bf16.msra.mxu0 %v2692
    %2783 = vmatpush.bf16.msra.mxu0 %v2688
    %2784 = vmatmul.bf16.gmra.mxu0 %v2548
    %v2785 = vpop.f32.mrf.mxu0
    %v2786 = vadd.f32 0.0, %v2785
    %v2787 = vpop.f32.mrf.mxu0
    %2788 = vdwg.mxu0
    %2789 = vmatpush.bf16.msra.mxu0 %v2717
    %2790 = vmatpush.bf16.msra.mxu0 %v2713
    %2791 = vmatpush.bf16.msra.mxu0 %v2709
    %2792 = vmatpush.bf16.msra.mxu0 %v2705
    %2793 = vmatpush.bf16.msra.mxu0 %v2701
    %2794 = vmatpush.bf16.msra.mxu0 %v2697
    %2795 = vmatpush.bf16.msra.mxu0 %v2693
    %2796 = vmatpush.bf16.msra.mxu0 %v2689
    %2797 = vmatmul.bf16.gmra.mxu0 %v2548
    %v2798 = vpop.f32.mrf.mxu0
    %v2799 = vadd.f32 0.0, %v2798
    %v2800 = vpop.f32.mrf.mxu0
    %2801 = vdwg.mxu0
    %v2802 = vadd.f32 %v2554, %v2760
    %v2803 = vadd.f32 %v2555, %v2773
    %v2804 = vadd.f32 %v2556, %v2786
    %v2805 = vadd.f32 %v2557, %v2799
    %v2806 = vxor.u32 %v2802, 2147483648
    %v2807 = vxor.u32 %v2803, 2147483648
    %v2808 = vxor.u32 %v2804, 2147483648
    %v2809 = vmul.f32 %v2806, 1.442695
    %v2810 = vpow.pop %v2809
    %v2811 = vmul.f32 %v2807, 1.442695
    %v2812 = vpow.pop %v2811
    %v2813 = vmul.f32 %v2808, 1.442695
    %v2814 = vpow.pop %v2813
    %v2815 = vadd.f32 %v2810, 1.0
    %v2816 = vadd.f32 %v2812, 1.0
    %v2817 = vadd.f32 %v2814, 1.0
    %v2818 = vrcp.pop %v2815
    %v2819 = vmul.f32 %v2815, %v2818
    %v2820 = vsub.f32 1.0, %v2819
    %v2821 = vmul.f32 %v2818, %v2820
    %v2822 = vadd.f32 %v2818, %v2821
    %vm2823 = vweird.f32 %v2815
    %vm2824 = vweird.f32 %v2818
    %vm2825 = vmor %vm2823, %vm2824
    %v2826 = vsel %vm2825, %v2818, %v2822
    %v2827 = vand.u32 2147483647, %v2815
    %vm2828 = vcmp.eq.f32.partialorder %v2827, 8.507059e+37
    %v2829 = vand.u32 %v2815, 2147483648
    %v2830 = vor.u32 1.1754944e-38, %v2829
    %v2831 = vsel %vm2828, %v2830, %v2826
    %v2832 = vmul.f32 1.0, %v2831
    %v2833 = vrcp.pop %v2816
    %v2834 = vmul.f32 %v2816, %v2833
    %v2835 = vsub.f32 1.0, %v2834
    %v2836 = vmul.f32 %v2833, %v2835
    %v2837 = vadd.f32 %v2833, %v2836
    %vm2838 = vweird.f32 %v2816
    %vm2839 = vweird.f32 %v2833
    %vm2840 = vmor %vm2838, %vm2839
    %v2841 = vsel %vm2840, %v2833, %v2837
    %v2842 = vand.u32 2147483647, %v2816
    %vm2843 = vcmp.eq.f32.partialorder %v2842, 8.507059e+37
    %v2844 = vand.u32 %v2816, 2147483648
    %v2845 = vor.u32 1.1754944e-38, %v2844
    %v2846 = vsel %vm2843, %v2845, %v2841
    %v2847 = vmul.f32 1.0, %v2846
    %v2848 = vrcp.pop %v2817
    %v2849 = vmul.f32 %v2817, %v2848
    %v2850 = vsub.f32 1.0, %v2849
    %v2851 = vmul.f32 %v2848, %v2850
    %v2852 = vadd.f32 %v2848, %v2851
    %vm2853 = vweird.f32 %v2817
    %vm2854 = vweird.f32 %v2848
    %vm2855 = vmor %vm2853, %vm2854
    %v2856 = vsel %vm2855, %v2848, %v2852
    %v2857 = vand.u32 2147483647, %v2817
    %vm2858 = vcmp.eq.f32.partialorder %v2857, 8.507059e+37
    %v2859 = vand.u32 %v2817, 2147483648
    %v2860 = vor.u32 1.1754944e-38, %v2859
    %v2861 = vsel %vm2858, %v2860, %v2856
    %v2862 = vmul.f32 1.0, %v2861
    %v2863 = vtanh.pop %v2805
    %v2864 = vmul.f32 %v2847, %v2545
    %v2865 = vmul.f32 %v2832, %v2863
    %v2866 = vadd.f32 %v2864, %v2865
    %v2867 = vtanh.pop %v2866
    %v2868 = vmul.f32 %v2862, %v2867
    %v2869 = vpack.c.bf16 %v2868, %v2868
    %s2870 = scalar_lea.vmem [#allocation2], 28
    %2871 = vst [vmem:[%s2870] sm:$0xf] %v2869
    %v2872 = vld [vmem:[#allocation2] sm:$0xf]
    %v2873 = vld [vmem:[#allocation2 + $0x4] sm:$0xf]
    %v2874 = vld [vmem:[#allocation2 + $0x8] sm:$0xf]
    %v2875 = vld [vmem:[#allocation2 + $0xc] sm:$0xf]
    %v2876 = vld [vmem:[#allocation2 + $0x10] sm:$0xf]
    %v2877 = vld [vmem:[#allocation2 + $0x14] sm:$0xf]
    %v2878 = vld [vmem:[#allocation2 + $0x18] sm:$0xf]
    %v2879 = vld [vmem:[#allocation2 + $0x1c] sm:$0xf]
    %v2880 = vld [vmem:[#allocation5] sm:$0xff]
    %v2881 = vld [vmem:[#allocation5 + $0x8] sm:$0xff]
    %v2882 = vld [vmem:[#allocation5 + $0x10] sm:$0xff]
    %v2883 = vld [vmem:[#allocation5 + $0x18] sm:$0xff]
    %v2884 = vld [vmem:[#allocation5 + $0x20] sm:$0xff]
    %v2885 = vld [vmem:[#allocation5 + $0x28] sm:$0xff]
    %v2886 = vld [vmem:[#allocation5 + $0x30] sm:$0xff]
    %v2887 = vld [vmem:[#allocation5 + $0x38] sm:$0xff]
    %v2888 = vld [vmem:[#allocation5 + $0x40] sm:$0xff]
    %v2889 = vld [vmem:[#allocation5 + $0x48] sm:$0xff]
    %v2890 = vld [vmem:[#allocation5 + $0x50] sm:$0xff]
    %v2891 = vld [vmem:[#allocation5 + $0x58] sm:$0xff]
    %v2892 = vld [vmem:[#allocation5 + $0x60] sm:$0xff]
    %v2893 = vld [vmem:[#allocation5 + $0x68] sm:$0xff]
    %v2894 = vld [vmem:[#allocation5 + $0x70] sm:$0xff]
    %v2895 = vld [vmem:[#allocation5 + $0x78] sm:$0xff]
    %v2896 = vld [vmem:[#allocation5 + $0x80] sm:$0xff]
    %v2897 = vld [vmem:[#allocation5 + $0x88] sm:$0xff]
    %v2898 = vld [vmem:[#allocation5 + $0x90] sm:$0xff]
    %v2899 = vld [vmem:[#allocation5 + $0x98] sm:$0xff]
    %v2900 = vld [vmem:[#allocation5 + $0xa0] sm:$0xff]
    %v2901 = vld [vmem:[#allocation5 + $0xa8] sm:$0xff]
    %v2902 = vld [vmem:[#allocation5 + $0xb0] sm:$0xff]
    %v2903 = vld [vmem:[#allocation5 + $0xb8] sm:$0xff]
    %v2904 = vld [vmem:[#allocation5 + $0xc0] sm:$0xff]
    %v2905 = vld [vmem:[#allocation5 + $0xc8] sm:$0xff]
    %v2906 = vld [vmem:[#allocation5 + $0xd0] sm:$0xff]
    %v2907 = vld [vmem:[#allocation5 + $0xd8] sm:$0xff]
    %v2908 = vld [vmem:[#allocation5 + $0xe0] sm:$0xff]
    %v2909 = vld [vmem:[#allocation5 + $0xe8] sm:$0xff]
    %v2910 = vld [vmem:[#allocation5 + $0xf0] sm:$0xff]
    %v2911 = vld [vmem:[#allocation5 + $0xf8] sm:$0xff]
    %v2912 = vld [vmem:[%s6] sm:$0xf]
    %v2914 = vperm.slane %v2912, 0
    %v2915 = vperm.slane %v2912, 1
    %v2916 = vperm.slane %v2912, 2
    %v2917 = vperm.slane %v2912, 3
    %v2930 = vunpack.c.l.b16 %v2872
    %v2931 = vunpack.c.l.b16 %v2873
    %v2932 = vunpack.c.l.b16 %v2874
    %v2933 = vunpack.c.l.b16 %v2875
    %v2934 = vunpack.c.l.b16 %v2876
    %v2935 = vunpack.c.l.b16 %v2877
    %v2936 = vunpack.c.l.b16 %v2878
    %v2937 = vunpack.c.l.b16 %v2879
    %v2938 = vpack.c.b16 %v2931, %v2930
    %v2939 = vpack.c.b16 %v2933, %v2932
    %v2940 = vpack.c.b16 %v2935, %v2934
    %v2941 = vpack.c.b16 %v2937, %v2936
    %v2978 = vunpack.c.l.b16 %v2880
    %v2979 = vunpack.c.h.b16 %v2880
    %v2980 = vunpack.c.l.b16 %v2881
    %v2981 = vunpack.c.h.b16 %v2881
    %v2982 = vunpack.c.l.b16 %v2882
    %v2983 = vunpack.c.h.b16 %v2882
    %v2984 = vunpack.c.l.b16 %v2883
    %v2985 = vunpack.c.h.b16 %v2883
    %v2986 = vunpack.c.l.b16 %v2884
    %v2987 = vunpack.c.h.b16 %v2884
    %v2988 = vunpack.c.l.b16 %v2885
    %v2989 = vunpack.c.h.b16 %v2885
    %v2990 = vunpack.c.l.b16 %v2886
    %v2991 = vunpack.c.h.b16 %v2886
    %v2992 = vunpack.c.l.b16 %v2887
    %v2993 = vunpack.c.h.b16 %v2887
    %v2994 = vunpack.c.l.b16 %v2888
    %v2995 = vunpack.c.h.b16 %v2888
    %v2996 = vunpack.c.l.b16 %v2889
    %v2997 = vunpack.c.h.b16 %v2889
    %v2998 = vunpack.c.l.b16 %v2890
    %v2999 = vunpack.c.h.b16 %v2890
    %v3000 = vunpack.c.l.b16 %v2891
    %v3001 = vunpack.c.h.b16 %v2891
    %v3002 = vunpack.c.l.b16 %v2892
    %v3003 = vunpack.c.h.b16 %v2892
    %v3004 = vunpack.c.l.b16 %v2893
    %v3005 = vunpack.c.h.b16 %v2893
    %v3006 = vunpack.c.l.b16 %v2894
    %v3007 = vunpack.c.h.b16 %v2894
    %v3008 = vunpack.c.l.b16 %v2895
    %v3009 = vunpack.c.h.b16 %v2895
    %v3010 = vunpack.c.l.b16 %v2896
    %v3011 = vunpack.c.h.b16 %v2896
    %v3012 = vunpack.c.l.b16 %v2897
    %v3013 = vunpack.c.h.b16 %v2897
    %v3014 = vunpack.c.l.b16 %v2898
    %v3015 = vunpack.c.h.b16 %v2898
    %v3016 = vunpack.c.l.b16 %v2899
    %v3017 = vunpack.c.h.b16 %v2899
    %v3018 = vunpack.c.l.b16 %v2900
    %v3019 = vunpack.c.h.b16 %v2900
    %v3020 = vunpack.c.l.b16 %v2901
    %v3021 = vunpack.c.h.b16 %v2901
    %v3022 = vunpack.c.l.b16 %v2902
    %v3023 = vunpack.c.h.b16 %v2902
    %v3024 = vunpack.c.l.b16 %v2903
    %v3025 = vunpack.c.h.b16 %v2903
    %v3026 = vunpack.c.l.b16 %v2904
    %v3027 = vunpack.c.h.b16 %v2904
    %v3028 = vunpack.c.l.b16 %v2905
    %v3029 = vunpack.c.h.b16 %v2905
    %v3030 = vunpack.c.l.b16 %v2906
    %v3031 = vunpack.c.h.b16 %v2906
    %v3032 = vunpack.c.l.b16 %v2907
    %v3033 = vunpack.c.h.b16 %v2907
    %v3034 = vunpack.c.l.b16 %v2908
    %v3035 = vunpack.c.h.b16 %v2908
    %v3036 = vunpack.c.l.b16 %v2909
    %v3037 = vunpack.c.h.b16 %v2909
    %v3038 = vunpack.c.l.b16 %v2910
    %v3039 = vunpack.c.h.b16 %v2910
    %v3040 = vunpack.c.l.b16 %v2911
    %v3041 = vunpack.c.h.b16 %v2911
    %v3042 = vpack.c.b16 %v2982, %v2978
    %v3043 = vpack.c.b16 %v2983, %v2979
    %v3044 = vpack.c.b16 %v2984, %v2980
    %v3045 = vpack.c.b16 %v2985, %v2981
    %v3046 = vpack.c.b16 %v2990, %v2986
    %v3047 = vpack.c.b16 %v2991, %v2987
    %v3048 = vpack.c.b16 %v2992, %v2988
    %v3049 = vpack.c.b16 %v2993, %v2989
    %v3050 = vpack.c.b16 %v2998, %v2994
    %v3051 = vpack.c.b16 %v2999, %v2995
    %v3052 = vpack.c.b16 %v3000, %v2996
    %v3053 = vpack.c.b16 %v3001, %v2997
    %v3054 = vpack.c.b16 %v3006, %v3002
    %v3055 = vpack.c.b16 %v3007, %v3003
    %v3056 = vpack.c.b16 %v3008, %v3004
    %v3057 = vpack.c.b16 %v3009, %v3005
    %v3058 = vpack.c.b16 %v3014, %v3010
    %v3059 = vpack.c.b16 %v3015, %v3011
    %v3060 = vpack.c.b16 %v3016, %v3012
    %v3061 = vpack.c.b16 %v3017, %v3013
    %v3062 = vpack.c.b16 %v3022, %v3018
    %v3063 = vpack.c.b16 %v3023, %v3019
    %v3064 = vpack.c.b16 %v3024, %v3020
    %v3065 = vpack.c.b16 %v3025, %v3021
    %v3066 = vpack.c.b16 %v3030, %v3026
    %v3067 = vpack.c.b16 %v3031, %v3027
    %v3068 = vpack.c.b16 %v3032, %v3028
    %v3069 = vpack.c.b16 %v3033, %v3029
    %v3070 = vpack.c.b16 %v3038, %v3034
    %v3071 = vpack.c.b16 %v3039, %v3035
    %v3072 = vpack.c.b16 %v3040, %v3036
    %v3073 = vpack.c.b16 %v3041, %v3037
    %3106 = vmatpush.bf16.msra.mxu0 %v3070
    %3107 = vmatpush.bf16.msra.mxu0 %v3066
    %3108 = vmatpush.bf16.msra.mxu0 %v3062
    %3109 = vmatpush.bf16.msra.mxu0 %v3058
    %3110 = vmatpush.bf16.msra.mxu0 %v3054
    %3111 = vmatpush.bf16.msra.mxu0 %v3050
    %3112 = vmatpush.bf16.msra.mxu0 %v3046
    %3113 = vmatpush.bf16.msra.mxu0 %v3042
    %3114 = vmatmul.bf16.gmra.mxu0 %v2938
    %v3115 = vpop.f32.mrf.mxu0
    %v3116 = vadd.f32 %v2914, %v3115
    %v3117 = vpop.f32.mrf.mxu0
    %v3118 = vadd.f32 %v2914, %v3117
    %3119 = vmatmul.bf16.gmra.mxu0 %v2939
    %v3120 = vpop.f32.mrf.mxu0
    %v3121 = vadd.f32 %v2914, %v3120
    %v3122 = vpop.f32.mrf.mxu0
    %v3123 = vadd.f32 %v2914, %v3122
    %3124 = vmatmul.bf16.gmra.mxu0 %v2940
    %v3125 = vpop.f32.mrf.mxu0
    %v3126 = vadd.f32 %v2914, %v3125
    %v3127 = vpop.f32.mrf.mxu0
    %v3128 = vadd.f32 %v2914, %v3127
    %3129 = vmatmul.bf16.gmra.mxu0 %v2941
    %v3130 = vpop.f32.mrf.mxu0
    %v3131 = vadd.f32 %v2914, %v3130
    %v3132 = vpop.f32.mrf.mxu0
    %v3133 = vadd.f32 %v2914, %v3132
    %3134 = vdwg.mxu0
    %3135 = vmatpush.bf16.msra.mxu0 %v3071
    %3136 = vmatpush.bf16.msra.mxu0 %v3067
    %3137 = vmatpush.bf16.msra.mxu0 %v3063
    %3138 = vmatpush.bf16.msra.mxu0 %v3059
    %3139 = vmatpush.bf16.msra.mxu0 %v3055
    %3140 = vmatpush.bf16.msra.mxu0 %v3051
    %3141 = vmatpush.bf16.msra.mxu0 %v3047
    %3142 = vmatpush.bf16.msra.mxu0 %v3043
    %3143 = vmatmul.bf16.gmra.mxu0 %v2938
    %v3144 = vpop.f32.mrf.mxu0
    %v3145 = vadd.f32 %v2915, %v3144
    %v3146 = vpop.f32.mrf.mxu0
    %v3147 = vadd.f32 %v2915, %v3146
    %3148 = vmatmul.bf16.gmra.mxu0 %v2939
    %v3149 = vpop.f32.mrf.mxu0
    %v3150 = vadd.f32 %v2915, %v3149
    %v3151 = vpop.f32.mrf.mxu0
    %v3152 = vadd.f32 %v2915, %v3151
    %3153 = vmatmul.bf16.gmra.mxu0 %v2940
    %v3154 = vpop.f32.mrf.mxu0
    %v3155 = vadd.f32 %v2915, %v3154
    %v3156 = vpop.f32.mrf.mxu0
    %v3157 = vadd.f32 %v2915, %v3156
    %3158 = vmatmul.bf16.gmra.mxu0 %v2941
    %v3159 = vpop.f32.mrf.mxu0
    %v3160 = vadd.f32 %v2915, %v3159
    %v3161 = vpop.f32.mrf.mxu0
    %v3162 = vadd.f32 %v2915, %v3161
    %3163 = vdwg.mxu0
    %3164 = vmatpush.bf16.msra.mxu0 %v3072
    %3165 = vmatpush.bf16.msra.mxu0 %v3068
    %3166 = vmatpush.bf16.msra.mxu0 %v3064
    %3167 = vmatpush.bf16.msra.mxu0 %v3060
    %3168 = vmatpush.bf16.msra.mxu0 %v3056
    %3169 = vmatpush.bf16.msra.mxu0 %v3052
    %3170 = vmatpush.bf16.msra.mxu0 %v3048
    %3171 = vmatpush.bf16.msra.mxu0 %v3044
    %3172 = vmatmul.bf16.gmra.mxu0 %v2938
    %v3173 = vpop.f32.mrf.mxu0
    %v3174 = vadd.f32 %v2916, %v3173
    %v3175 = vpop.f32.mrf.mxu0
    %v3176 = vadd.f32 %v2916, %v3175
    %3177 = vmatmul.bf16.gmra.mxu0 %v2939
    %v3178 = vpop.f32.mrf.mxu0
    %v3179 = vadd.f32 %v2916, %v3178
    %v3180 = vpop.f32.mrf.mxu0
    %v3181 = vadd.f32 %v2916, %v3180
    %3182 = vmatmul.bf16.gmra.mxu0 %v2940
    %v3183 = vpop.f32.mrf.mxu0
    %v3184 = vadd.f32 %v2916, %v3183
    %v3185 = vpop.f32.mrf.mxu0
    %v3186 = vadd.f32 %v2916, %v3185
    %3187 = vmatmul.bf16.gmra.mxu0 %v2941
    %v3188 = vpop.f32.mrf.mxu0
    %v3189 = vadd.f32 %v2916, %v3188
    %v3190 = vpop.f32.mrf.mxu0
    %v3191 = vadd.f32 %v2916, %v3190
    %3192 = vdwg.mxu0
    %3193 = vmatpush.bf16.msra.mxu0 %v3073
    %3194 = vmatpush.bf16.msra.mxu0 %v3069
    %3195 = vmatpush.bf16.msra.mxu0 %v3065
    %3196 = vmatpush.bf16.msra.mxu0 %v3061
    %3197 = vmatpush.bf16.msra.mxu0 %v3057
    %3198 = vmatpush.bf16.msra.mxu0 %v3053
    %3199 = vmatpush.bf16.msra.mxu0 %v3049
    %3200 = vmatpush.bf16.msra.mxu0 %v3045
    %3201 = vmatmul.bf16.gmra.mxu0 %v2938
    %v3202 = vpop.f32.mrf.mxu0
    %v3203 = vadd.f32 %v2917, %v3202
    %v3204 = vpop.f32.mrf.mxu0
    %v3205 = vadd.f32 %v2917, %v3204
    %3206 = vmatmul.bf16.gmra.mxu0 %v2939
    %v3207 = vpop.f32.mrf.mxu0
    %v3208 = vadd.f32 %v2917, %v3207
    %v3209 = vpop.f32.mrf.mxu0
    %v3210 = vadd.f32 %v2917, %v3209
    %3211 = vmatmul.bf16.gmra.mxu0 %v2940
    %v3212 = vpop.f32.mrf.mxu0
    %v3213 = vadd.f32 %v2917, %v3212
    %v3214 = vpop.f32.mrf.mxu0
    %v3215 = vadd.f32 %v2917, %v3214
    %3216 = vmatmul.bf16.gmra.mxu0 %v2941
    %v3217 = vpop.f32.mrf.mxu0
    %v3218 = vadd.f32 %v2917, %v3217
    %v3219 = vpop.f32.mrf.mxu0
    %v3220 = vadd.f32 %v2917, %v3219
    %3221 = vdwg.mxu0
    %3222 = vst [vmem:[#allocation3] sm:$0xff] %v3116
    %3223 = vst [vmem:[#allocation3 + $0x8] sm:$0xff] %v3145
    %3224 = vst [vmem:[#allocation3 + $0x10] sm:$0xff] %v3174
    %3225 = vst [vmem:[#allocation3 + $0x18] sm:$0xff] %v3203
    %3226 = vst [vmem:[#allocation3 + $0x20] sm:$0xff] %v3118
    %3227 = vst [vmem:[#allocation3 + $0x28] sm:$0xff] %v3147
    %3228 = vst [vmem:[#allocation3 + $0x30] sm:$0xff] %v3176
    %3229 = vst [vmem:[#allocation3 + $0x38] sm:$0xff] %v3205
    %3230 = vst [vmem:[#allocation3 + $0x40] sm:$0xff] %v3121
    %3231 = vst [vmem:[#allocation3 + $0x48] sm:$0xff] %v3150
    %3232 = vst [vmem:[#allocation3 + $0x50] sm:$0xff] %v3179
    %3233 = vst [vmem:[#allocation3 + $0x58] sm:$0xff] %v3208
    %3234 = vst [vmem:[#allocation3 + $0x60] sm:$0xff] %v3123
    %3235 = vst [vmem:[#allocation3 + $0x68] sm:$0xff] %v3152
    %3236 = vst [vmem:[#allocation3 + $0x70] sm:$0xff] %v3181
    %3237 = vst [vmem:[#allocation3 + $0x78] sm:$0xff] %v3210
    %3238 = vst [vmem:[#allocation3 + $0x80] sm:$0xff] %v3126
    %3239 = vst [vmem:[#allocation3 + $0x88] sm:$0xff] %v3155
    %3240 = vst [vmem:[#allocation3 + $0x90] sm:$0xff] %v3184
    %3241 = vst [vmem:[#allocation3 + $0x98] sm:$0xff] %v3213
    %3242 = vst [vmem:[#allocation3 + $0xa0] sm:$0xff] %v3128
    %3243 = vst [vmem:[#allocation3 + $0xa8] sm:$0xff] %v3157
    %3244 = vst [vmem:[#allocation3 + $0xb0] sm:$0xff] %v3186
    %3245 = vst [vmem:[#allocation3 + $0xb8] sm:$0xff] %v3215
    %3246 = vst [vmem:[#allocation3 + $0xc0] sm:$0xff] %v3131
    %3247 = vst [vmem:[#allocation3 + $0xc8] sm:$0xff] %v3160
    %3248 = vst [vmem:[#allocation3 + $0xd0] sm:$0xff] %v3189
    %3249 = vst [vmem:[#allocation3 + $0xd8] sm:$0xff] %v3218
    %3250 = vst [vmem:[#allocation3 + $0xe0] sm:$0xff] %v3133
    %3251 = vst [vmem:[#allocation3 + $0xe8] sm:$0xff] %v3162
    %3252 = vst [vmem:[#allocation3 + $0xf0] sm:$0xff] %v3191
    %3253 = vst [vmem:[#allocation3 + $0xf8] sm:$0xff] %v3220
    %v3254 = vld [vmem:[%s307] sm:$0xff]
    %v3255 = vld [vmem:[%s307 + $0x8] sm:$0xff]
    %v3256 = vld [vmem:[%s307 + $0x10] sm:$0xff]
    %v3257 = vld [vmem:[%s307 + $0x18] sm:$0xff]
    %v3258 = vld [vmem:[#allocation9] sm:$0xff]
    %v3259 = vld [vmem:[#allocation9 + $0x8] sm:$0xff]
    %v3260 = vld [vmem:[#allocation9 + $0x10] sm:$0xff]
    %v3261 = vld [vmem:[#allocation9 + $0x18] sm:$0xff]
    %v3262 = vld [vmem:[#allocation9 + $0x20] sm:$0xff]
    %v3263 = vld [vmem:[#allocation9 + $0x28] sm:$0xff]
    %v3264 = vld [vmem:[#allocation9 + $0x30] sm:$0xff]
    %v3265 = vld [vmem:[#allocation9 + $0x38] sm:$0xff]
    %v3266 = vld [vmem:[#allocation9 + $0x40] sm:$0xff]
    %v3267 = vld [vmem:[#allocation9 + $0x48] sm:$0xff]
    %v3268 = vld [vmem:[#allocation9 + $0x50] sm:$0xff]
    %v3269 = vld [vmem:[#allocation9 + $0x58] sm:$0xff]
    %v3270 = vld [vmem:[#allocation9 + $0x60] sm:$0xff]
    %v3271 = vld [vmem:[#allocation9 + $0x68] sm:$0xff]
    %v3272 = vld [vmem:[#allocation9 + $0x70] sm:$0xff]
    %v3273 = vld [vmem:[#allocation9 + $0x78] sm:$0xff]
    %v3274 = vld [vmem:[#allocation9 + $0x80] sm:$0xff]
    %v3275 = vld [vmem:[#allocation9 + $0x88] sm:$0xff]
    %v3276 = vld [vmem:[#allocation9 + $0x90] sm:$0xff]
    %v3277 = vld [vmem:[#allocation9 + $0x98] sm:$0xff]
    %v3278 = vld [vmem:[#allocation9 + $0xa0] sm:$0xff]
    %v3279 = vld [vmem:[#allocation9 + $0xa8] sm:$0xff]
    %v3280 = vld [vmem:[#allocation9 + $0xb0] sm:$0xff]
    %v3281 = vld [vmem:[#allocation9 + $0xb8] sm:$0xff]
    %v3282 = vld [vmem:[#allocation9 + $0xc0] sm:$0xff]
    %v3283 = vld [vmem:[#allocation9 + $0xc8] sm:$0xff]
    %v3284 = vld [vmem:[#allocation9 + $0xd0] sm:$0xff]
    %v3285 = vld [vmem:[#allocation9 + $0xd8] sm:$0xff]
    %v3286 = vld [vmem:[#allocation9 + $0xe0] sm:$0xff]
    %v3287 = vld [vmem:[#allocation9 + $0xe8] sm:$0xff]
    %v3288 = vld [vmem:[#allocation9 + $0xf0] sm:$0xff]
    %v3289 = vld [vmem:[#allocation9 + $0xf8] sm:$0xff]
    %v3322 = vunpack.c.l.b16 %v3258
    %v3323 = vunpack.c.h.b16 %v3258
    %v3324 = vunpack.c.l.b16 %v3259
    %v3325 = vunpack.c.h.b16 %v3259
    %v3326 = vunpack.c.l.b16 %v3260
    %v3327 = vunpack.c.h.b16 %v3260
    %v3328 = vunpack.c.l.b16 %v3261
    %v3329 = vunpack.c.h.b16 %v3261
    %v3330 = vunpack.c.l.b16 %v3262
    %v3331 = vunpack.c.h.b16 %v3262
    %v3332 = vunpack.c.l.b16 %v3263
    %v3333 = vunpack.c.h.b16 %v3263
    %v3334 = vunpack.c.l.b16 %v3264
    %v3335 = vunpack.c.h.b16 %v3264
    %v3336 = vunpack.c.l.b16 %v3265
    %v3337 = vunpack.c.h.b16 %v3265
    %v3338 = vunpack.c.l.b16 %v3266
    %v3339 = vunpack.c.h.b16 %v3266
    %v3340 = vunpack.c.l.b16 %v3267
    %v3341 = vunpack.c.h.b16 %v3267
    %v3342 = vunpack.c.l.b16 %v3268
    %v3343 = vunpack.c.h.b16 %v3268
    %v3344 = vunpack.c.l.b16 %v3269
    %v3345 = vunpack.c.h.b16 %v3269
    %v3346 = vunpack.c.l.b16 %v3270
    %v3347 = vunpack.c.h.b16 %v3270
    %v3348 = vunpack.c.l.b16 %v3271
    %v3349 = vunpack.c.h.b16 %v3271
    %v3350 = vunpack.c.l.b16 %v3272
    %v3351 = vunpack.c.h.b16 %v3272
    %v3352 = vunpack.c.l.b16 %v3273
    %v3353 = vunpack.c.h.b16 %v3273
    %v3354 = vunpack.c.l.b16 %v3274
    %v3355 = vunpack.c.h.b16 %v3274
    %v3356 = vunpack.c.l.b16 %v3275
    %v3357 = vunpack.c.h.b16 %v3275
    %v3358 = vunpack.c.l.b16 %v3276
    %v3359 = vunpack.c.h.b16 %v3276
    %v3360 = vunpack.c.l.b16 %v3277
    %v3361 = vunpack.c.h.b16 %v3277
    %v3362 = vunpack.c.l.b16 %v3278
    %v3363 = vunpack.c.h.b16 %v3278
    %v3364 = vunpack.c.l.b16 %v3279
    %v3365 = vunpack.c.h.b16 %v3279
    %v3366 = vunpack.c.l.b16 %v3280
    %v3367 = vunpack.c.h.b16 %v3280
    %v3368 = vunpack.c.l.b16 %v3281
    %v3369 = vunpack.c.h.b16 %v3281
    %v3370 = vunpack.c.l.b16 %v3282
    %v3371 = vunpack.c.h.b16 %v3282
    %v3372 = vunpack.c.l.b16 %v3283
    %v3373 = vunpack.c.h.b16 %v3283
    %v3374 = vunpack.c.l.b16 %v3284
    %v3375 = vunpack.c.h.b16 %v3284
    %v3376 = vunpack.c.l.b16 %v3285
    %v3377 = vunpack.c.h.b16 %v3285
    %v3378 = vunpack.c.l.b16 %v3286
    %v3379 = vunpack.c.h.b16 %v3286
    %v3380 = vunpack.c.l.b16 %v3287
    %v3381 = vunpack.c.h.b16 %v3287
    %v3382 = vunpack.c.l.b16 %v3288
    %v3383 = vunpack.c.h.b16 %v3288
    %v3384 = vunpack.c.l.b16 %v3289
    %v3385 = vunpack.c.h.b16 %v3289
    %v3386 = vpack.c.b16 %v3326, %v3322
    %v3387 = vpack.c.b16 %v3327, %v3323
    %v3388 = vpack.c.b16 %v3328, %v3324
    %v3389 = vpack.c.b16 %v3329, %v3325
    %v3390 = vpack.c.b16 %v3334, %v3330
    %v3391 = vpack.c.b16 %v3335, %v3331
    %v3392 = vpack.c.b16 %v3336, %v3332
    %v3393 = vpack.c.b16 %v3337, %v3333
    %v3394 = vpack.c.b16 %v3342, %v3338
    %v3395 = vpack.c.b16 %v3343, %v3339
    %v3396 = vpack.c.b16 %v3344, %v3340
    %v3397 = vpack.c.b16 %v3345, %v3341
    %v3398 = vpack.c.b16 %v3350, %v3346
    %v3399 = vpack.c.b16 %v3351, %v3347
    %v3400 = vpack.c.b16 %v3352, %v3348
    %v3401 = vpack.c.b16 %v3353, %v3349
    %v3402 = vpack.c.b16 %v3358, %v3354
    %v3403 = vpack.c.b16 %v3359, %v3355
    %v3404 = vpack.c.b16 %v3360, %v3356
    %v3405 = vpack.c.b16 %v3361, %v3357
    %v3406 = vpack.c.b16 %v3366, %v3362
    %v3407 = vpack.c.b16 %v3367, %v3363
    %v3408 = vpack.c.b16 %v3368, %v3364
    %v3409 = vpack.c.b16 %v3369, %v3365
    %v3410 = vpack.c.b16 %v3374, %v3370
    %v3411 = vpack.c.b16 %v3375, %v3371
    %v3412 = vpack.c.b16 %v3376, %v3372
    %v3413 = vpack.c.b16 %v3377, %v3373
    %v3414 = vpack.c.b16 %v3382, %v3378
    %v3415 = vpack.c.b16 %v3383, %v3379
    %v3416 = vpack.c.b16 %v3384, %v3380
    %v3417 = vpack.c.b16 %v3385, %v3381
    %3450 = vmatpush.bf16.msra.mxu0 %v3414
    %3451 = vmatpush.bf16.msra.mxu0 %v3410
    %3452 = vmatpush.bf16.msra.mxu0 %v3406
    %3453 = vmatpush.bf16.msra.mxu0 %v3402
    %3454 = vmatpush.bf16.msra.mxu0 %v3398
    %3455 = vmatpush.bf16.msra.mxu0 %v3394
    %3456 = vmatpush.bf16.msra.mxu0 %v3390
    %3457 = vmatpush.bf16.msra.mxu0 %v3386
    %3458 = vmatmul.bf16.gmra.mxu0 0
    %v3459 = vpop.f32.mrf.mxu0
    %v3460 = vadd.f32 0.0, %v3459
    %v3461 = vpop.f32.mrf.mxu0
    %3462 = vdwg.mxu0
    %3463 = vmatpush.bf16.msra.mxu0 %v3415
    %3464 = vmatpush.bf16.msra.mxu0 %v3411
    %3465 = vmatpush.bf16.msra.mxu0 %v3407
    %3466 = vmatpush.bf16.msra.mxu0 %v3403
    %3467 = vmatpush.bf16.msra.mxu0 %v3399
    %3468 = vmatpush.bf16.msra.mxu0 %v3395
    %3469 = vmatpush.bf16.msra.mxu0 %v3391
    %3470 = vmatpush.bf16.msra.mxu0 %v3387
    %3471 = vmatmul.bf16.gmra.mxu0 0
    %v3472 = vpop.f32.mrf.mxu0
    %v3473 = vadd.f32 0.0, %v3472
    %v3474 = vpop.f32.mrf.mxu0
    %3475 = vdwg.mxu0
    %3476 = vmatpush.bf16.msra.mxu0 %v3416
    %3477 = vmatpush.bf16.msra.mxu0 %v3412
    %3478 = vmatpush.bf16.msra.mxu0 %v3408
    %3479 = vmatpush.bf16.msra.mxu0 %v3404
    %3480 = vmatpush.bf16.msra.mxu0 %v3400
    %3481 = vmatpush.bf16.msra.mxu0 %v3396
    %3482 = vmatpush.bf16.msra.mxu0 %v3392
    %3483 = vmatpush.bf16.msra.mxu0 %v3388
    %3484 = vmatmul.bf16.gmra.mxu0 0
    %v3485 = vpop.f32.mrf.mxu0
    %v3486 = vadd.f32 0.0, %v3485
    %v3487 = vpop.f32.mrf.mxu0
    %3488 = vdwg.mxu0
    %3489 = vmatpush.bf16.msra.mxu0 %v3417
    %3490 = vmatpush.bf16.msra.mxu0 %v3413
    %3491 = vmatpush.bf16.msra.mxu0 %v3409
    %3492 = vmatpush.bf16.msra.mxu0 %v3405
    %3493 = vmatpush.bf16.msra.mxu0 %v3401
    %3494 = vmatpush.bf16.msra.mxu0 %v3397
    %3495 = vmatpush.bf16.msra.mxu0 %v3393
    %3496 = vmatpush.bf16.msra.mxu0 %v3389
    %3497 = vmatmul.bf16.gmra.mxu0 0
    %v3498 = vpop.f32.mrf.mxu0
    %v3499 = vadd.f32 0.0, %v3498
    %v3500 = vpop.f32.mrf.mxu0
    %3501 = vdwg.mxu0
    %v3502 = vadd.f32 %v3254, %v3460
    %v3503 = vadd.f32 %v3255, %v3473
    %v3504 = vadd.f32 %v3256, %v3486
    %v3505 = vadd.f32 %v3257, %v3499
    %v3506 = vxor.u32 %v3502, 2147483648
    %v3507 = vxor.u32 %v3503, 2147483648
    %v3508 = vxor.u32 %v3504, 2147483648
    %v3509 = vmul.f32 %v3506, 1.442695
    %v3510 = vpow.pop %v3509
    %v3511 = vmul.f32 %v3507, 1.442695
    %v3512 = vpow.pop %v3511
    %v3513 = vmul.f32 %v3508, 1.442695
    %v3514 = vpow.pop %v3513
    %v3515 = vadd.f32 %v3510, 1.0
    %v3516 = vadd.f32 %v3512, 1.0
    %v3517 = vadd.f32 %v3514, 1.0
    %v3518 = vrcp.pop %v3515
    %v3519 = vmul.f32 %v3515, %v3518
    %v3520 = vsub.f32 1.0, %v3519
    %v3521 = vmul.f32 %v3518, %v3520
    %v3522 = vadd.f32 %v3518, %v3521
    %vm3523 = vweird.f32 %v3515
    %vm3524 = vweird.f32 %v3518
    %vm3525 = vmor %vm3523, %vm3524
    %v3526 = vsel %vm3525, %v3518, %v3522
    %v3527 = vand.u32 2147483647, %v3515
    %vm3528 = vcmp.eq.f32.partialorder %v3527, 8.507059e+37
    %v3529 = vand.u32 %v3515, 2147483648
    %v3530 = vor.u32 1.1754944e-38, %v3529
    %v3531 = vsel %vm3528, %v3530, %v3526
    %v3532 = vmul.f32 1.0, %v3531
    %v3533 = vrcp.pop %v3516
    %v3534 = vmul.f32 %v3516, %v3533
    %v3535 = vsub.f32 1.0, %v3534
    %v3536 = vmul.f32 %v3533, %v3535
    %v3537 = vadd.f32 %v3533, %v3536
    %vm3538 = vweird.f32 %v3516
    %vm3539 = vweird.f32 %v3533
    %vm3540 = vmor %vm3538, %vm3539
    %v3541 = vsel %vm3540, %v3533, %v3537
    %v3542 = vand.u32 2147483647, %v3516
    %vm3543 = vcmp.eq.f32.partialorder %v3542, 8.507059e+37
    %v3544 = vand.u32 %v3516, 2147483648
    %v3545 = vor.u32 1.1754944e-38, %v3544
    %v3546 = vsel %vm3543, %v3545, %v3541
    %v3547 = vmul.f32 1.0, %v3546
    %v3548 = vrcp.pop %v3517
    %v3549 = vmul.f32 %v3517, %v3548
    %v3550 = vsub.f32 1.0, %v3549
    %v3551 = vmul.f32 %v3548, %v3550
    %v3552 = vadd.f32 %v3548, %v3551
    %vm3553 = vweird.f32 %v3517
    %vm3554 = vweird.f32 %v3548
    %vm3555 = vmor %vm3553, %vm3554
    %v3556 = vsel %vm3555, %v3548, %v3552
    %v3557 = vand.u32 2147483647, %v3517
    %vm3558 = vcmp.eq.f32.partialorder %v3557, 8.507059e+37
    %v3559 = vand.u32 %v3517, 2147483648
    %v3560 = vor.u32 1.1754944e-38, %v3559
    %v3561 = vsel %vm3558, %v3560, %v3556
    %v3562 = vmul.f32 1.0, %v3561
    %v3563 = vtanh.pop %v3505
    %v3564 = vmul.f32 %v3547, 0.0
    %v3565 = vmul.f32 %v3532, %v3563
    %v3566 = vadd.f32 %v3564, %v3565
    %v3567 = vtanh.pop %v3566
    %v3568 = vmul.f32 %v3562, %v3567
    %v3569 = vpack.c.bf16 %v3568, %v3568
    %v3570 = vld [vmem:[%s627] sm:$0xff]
    %v3571 = vld [vmem:[%s627 + $0x8] sm:$0xff]
    %v3572 = vld [vmem:[%s627 + $0x10] sm:$0xff]
    %v3573 = vld [vmem:[%s627 + $0x18] sm:$0xff]
    %3574 = vmatpush.bf16.msra.mxu0 %v3414
    %3575 = vmatpush.bf16.msra.mxu0 %v3410
    %3576 = vmatpush.bf16.msra.mxu0 %v3406
    %3577 = vmatpush.bf16.msra.mxu0 %v3402
    %3578 = vmatpush.bf16.msra.mxu0 %v3398
    %3579 = vmatpush.bf16.msra.mxu0 %v3394
    %3580 = vmatpush.bf16.msra.mxu0 %v3390
    %3581 = vmatpush.bf16.msra.mxu0 %v3386
    %3582 = vmatmul.bf16.gmra.mxu0 %v3569
    %v3583 = vpop.f32.mrf.mxu0
    %v3584 = vadd.f32 0.0, %v3583
    %v3585 = vpop.f32.mrf.mxu0
    %3586 = vdwg.mxu0
    %3587 = vmatpush.bf16.msra.mxu0 %v3415
    %3588 = vmatpush.bf16.msra.mxu0 %v3411
    %3589 = vmatpush.bf16.msra.mxu0 %v3407
    %3590 = vmatpush.bf16.msra.mxu0 %v3403
    %3591 = vmatpush.bf16.msra.mxu0 %v3399
    %3592 = vmatpush.bf16.msra.mxu0 %v3395
    %3593 = vmatpush.bf16.msra.mxu0 %v3391
    %3594 = vmatpush.bf16.msra.mxu0 %v3387
    %3595 = vmatmul.bf16.gmra.mxu0 %v3569
    %v3596 = vpop.f32.mrf.mxu0
    %v3597 = vadd.f32 0.0, %v3596
    %v3598 = vpop.f32.mrf.mxu0
    %3599 = vdwg.mxu0
    %3600 = vmatpush.bf16.msra.mxu0 %v3416
    %3601 = vmatpush.bf16.msra.mxu0 %v3412
    %3602 = vmatpush.bf16.msra.mxu0 %v3408
    %3603 = vmatpush.bf16.msra.mxu0 %v3404
    %3604 = vmatpush.bf16.msra.mxu0 %v3400
    %3605 = vmatpush.bf16.msra.mxu0 %v3396
    %3606 = vmatpush.bf16.msra.mxu0 %v3392
    %3607 = vmatpush.bf16.msra.mxu0 %v3388
    %3608 = vmatmul.bf16.gmra.mxu0 %v3569
    %v3609 = vpop.f32.mrf.mxu0
    %v3610 = vadd.f32 0.0, %v3609
    %v3611 = vpop.f32.mrf.mxu0
    %3612 = vdwg.mxu0
    %3613 = vmatpush.bf16.msra.mxu0 %v3417
    %3614 = vmatpush.bf16.msra.mxu0 %v3413
    %3615 = vmatpush.bf16.msra.mxu0 %v3409
    %3616 = vmatpush.bf16.msra.mxu0 %v3405
    %3617 = vmatpush.bf16.msra.mxu0 %v3401
    %3618 = vmatpush.bf16.msra.mxu0 %v3397
    %3619 = vmatpush.bf16.msra.mxu0 %v3393
    %3620 = vmatpush.bf16.msra.mxu0 %v3389
    %3621 = vmatmul.bf16.gmra.mxu0 %v3569
    %v3622 = vpop.f32.mrf.mxu0
    %v3623 = vadd.f32 0.0, %v3622
    %v3624 = vpop.f32.mrf.mxu0
    %3625 = vdwg.mxu0
    %v3626 = vadd.f32 %v3570, %v3584
    %v3627 = vadd.f32 %v3571, %v3597
    %v3628 = vadd.f32 %v3572, %v3610
    %v3629 = vadd.f32 %v3573, %v3623
    %v3630 = vxor.u32 %v3626, 2147483648
    %v3631 = vxor.u32 %v3627, 2147483648
    %v3632 = vxor.u32 %v3628, 2147483648
    %v3633 = vmul.f32 %v3630, 1.442695
    %v3634 = vpow.pop %v3633
    %v3635 = vmul.f32 %v3631, 1.442695
    %v3636 = vpow.pop %v3635
    %v3637 = vmul.f32 %v3632, 1.442695
    %v3638 = vpow.pop %v3637
    %v3639 = vadd.f32 %v3634, 1.0
    %v3640 = vadd.f32 %v3636, 1.0
    %v3641 = vadd.f32 %v3638, 1.0
    %v3642 = vrcp.pop %v3639
    %v3643 = vmul.f32 %v3639, %v3642
    %v3644 = vsub.f32 1.0, %v3643
    %v3645 = vmul.f32 %v3642, %v3644
    %v3646 = vadd.f32 %v3642, %v3645
    %vm3647 = vweird.f32 %v3639
    %vm3648 = vweird.f32 %v3642
    %vm3649 = vmor %vm3647, %vm3648
    %v3650 = vsel %vm3649, %v3642, %v3646
    %v3651 = vand.u32 2147483647, %v3639
    %vm3652 = vcmp.eq.f32.partialorder %v3651, 8.507059e+37
    %v3653 = vand.u32 %v3639, 2147483648
    %v3654 = vor.u32 1.1754944e-38, %v3653
    %v3655 = vsel %vm3652, %v3654, %v3650
    %v3656 = vmul.f32 1.0, %v3655
    %v3657 = vrcp.pop %v3640
    %v3658 = vmul.f32 %v3640, %v3657
    %v3659 = vsub.f32 1.0, %v3658
    %v3660 = vmul.f32 %v3657, %v3659
    %v3661 = vadd.f32 %v3657, %v3660
    %vm3662 = vweird.f32 %v3640
    %vm3663 = vweird.f32 %v3657
    %vm3664 = vmor %vm3662, %vm3663
    %v3665 = vsel %vm3664, %v3657, %v3661
    %v3666 = vand.u32 2147483647, %v3640
    %vm3667 = vcmp.eq.f32.partialorder %v3666, 8.507059e+37
    %v3668 = vand.u32 %v3640, 2147483648
    %v3669 = vor.u32 1.1754944e-38, %v3668
    %v3670 = vsel %vm3667, %v3669, %v3665
    %v3671 = vmul.f32 1.0, %v3670
    %v3672 = vrcp.pop %v3641
    %v3673 = vmul.f32 %v3641, %v3672
    %v3674 = vsub.f32 1.0, %v3673
    %v3675 = vmul.f32 %v3672, %v3674
    %v3676 = vadd.f32 %v3672, %v3675
    %vm3677 = vweird.f32 %v3641
    %vm3678 = vweird.f32 %v3672
    %vm3679 = vmor %vm3677, %vm3678
    %v3680 = vsel %vm3679, %v3672, %v3676
    %v3681 = vand.u32 2147483647, %v3641
    %vm3682 = vcmp.eq.f32.partialorder %v3681, 8.507059e+37
    %v3683 = vand.u32 %v3641, 2147483648
    %v3684 = vor.u32 1.1754944e-38, %v3683
    %v3685 = vsel %vm3682, %v3684, %v3680
    %v3686 = vmul.f32 1.0, %v3685
    %v3687 = vtanh.pop %v3629
    %v3688 = vmul.f32 %v3671, %v3566
    %v3689 = vmul.f32 %v3656, %v3687
    %v3690 = vadd.f32 %v3688, %v3689
    %v3691 = vtanh.pop %v3690
    %v3692 = vmul.f32 %v3686, %v3691
    %v3693 = vpack.c.bf16 %v3692, %v3692
    %v3694 = vld [vmem:[%s948] sm:$0xff]
    %v3695 = vld [vmem:[%s948 + $0x8] sm:$0xff]
    %v3696 = vld [vmem:[%s948 + $0x10] sm:$0xff]
    %v3697 = vld [vmem:[%s948 + $0x18] sm:$0xff]
    %3698 = vmatpush.bf16.msra.mxu0 %v3414
    %3699 = vmatpush.bf16.msra.mxu0 %v3410
    %3700 = vmatpush.bf16.msra.mxu0 %v3406
    %3701 = vmatpush.bf16.msra.mxu0 %v3402
    %3702 = vmatpush.bf16.msra.mxu0 %v3398
    %3703 = vmatpush.bf16.msra.mxu0 %v3394
    %3704 = vmatpush.bf16.msra.mxu0 %v3390
    %3705 = vmatpush.bf16.msra.mxu0 %v3386
    %3706 = vmatmul.bf16.gmra.mxu0 %v3693
    %v3707 = vpop.f32.mrf.mxu0
    %v3708 = vadd.f32 0.0, %v3707
    %v3709 = vpop.f32.mrf.mxu0
    %3710 = vdwg.mxu0
    %3711 = vmatpush.bf16.msra.mxu0 %v3415
    %3712 = vmatpush.bf16.msra.mxu0 %v3411
    %3713 = vmatpush.bf16.msra.mxu0 %v3407
    %3714 = vmatpush.bf16.msra.mxu0 %v3403
    %3715 = vmatpush.bf16.msra.mxu0 %v3399
    %3716 = vmatpush.bf16.msra.mxu0 %v3395
    %3717 = vmatpush.bf16.msra.mxu0 %v3391
    %3718 = vmatpush.bf16.msra.mxu0 %v3387
    %3719 = vmatmul.bf16.gmra.mxu0 %v3693
    %v3720 = vpop.f32.mrf.mxu0
    %v3721 = vadd.f32 0.0, %v3720
    %v3722 = vpop.f32.mrf.mxu0
    %3723 = vdwg.mxu0
    %3724 = vmatpush.bf16.msra.mxu0 %v3416
    %3725 = vmatpush.bf16.msra.mxu0 %v3412
    %3726 = vmatpush.bf16.msra.mxu0 %v3408
    %3727 = vmatpush.bf16.msra.mxu0 %v3404
    %3728 = vmatpush.bf16.msra.mxu0 %v3400
    %3729 = vmatpush.bf16.msra.mxu0 %v3396
    %3730 = vmatpush.bf16.msra.mxu0 %v3392
    %3731 = vmatpush.bf16.msra.mxu0 %v3388
    %3732 = vmatmul.bf16.gmra.mxu0 %v3693
    %v3733 = vpop.f32.mrf.mxu0
    %v3734 = vadd.f32 0.0, %v3733
    %v3735 = vpop.f32.mrf.mxu0
    %3736 = vdwg.mxu0
    %3737 = vmatpush.bf16.msra.mxu0 %v3417
    %3738 = vmatpush.bf16.msra.mxu0 %v3413
    %3739 = vmatpush.bf16.msra.mxu0 %v3409
    %3740 = vmatpush.bf16.msra.mxu0 %v3405
    %3741 = vmatpush.bf16.msra.mxu0 %v3401
    %3742 = vmatpush.bf16.msra.mxu0 %v3397
    %3743 = vmatpush.bf16.msra.mxu0 %v3393
    %3744 = vmatpush.bf16.msra.mxu0 %v3389
    %3745 = vmatmul.bf16.gmra.mxu0 %v3693
    %v3746 = vpop.f32.mrf.mxu0
    %v3747 = vadd.f32 0.0, %v3746
    %v3748 = vpop.f32.mrf.mxu0
    %3749 = vdwg.mxu0
    %v3750 = vadd.f32 %v3694, %v3708
    %v3751 = vadd.f32 %v3695, %v3721
    %v3752 = vadd.f32 %v3696, %v3734
    %v3753 = vadd.f32 %v3697, %v3747
    %v3754 = vxor.u32 %v3750, 2147483648
    %v3755 = vxor.u32 %v3751, 2147483648
    %v3756 = vxor.u32 %v3752, 2147483648
    %v3757 = vmul.f32 %v3754, 1.442695
    %v3758 = vpow.pop %v3757
    %v3759 = vmul.f32 %v3755, 1.442695
    %v3760 = vpow.pop %v3759
    %v3761 = vmul.f32 %v3756, 1.442695
    %v3762 = vpow.pop %v3761
    %v3763 = vadd.f32 %v3758, 1.0
    %v3764 = vadd.f32 %v3760, 1.0
    %v3765 = vadd.f32 %v3762, 1.0
    %v3766 = vrcp.pop %v3763
    %v3767 = vmul.f32 %v3763, %v3766
    %v3768 = vsub.f32 1.0, %v3767
    %v3769 = vmul.f32 %v3766, %v3768
    %v3770 = vadd.f32 %v3766, %v3769
    %vm3771 = vweird.f32 %v3763
    %vm3772 = vweird.f32 %v3766
    %vm3773 = vmor %vm3771, %vm3772
    %v3774 = vsel %vm3773, %v3766, %v3770
    %v3775 = vand.u32 2147483647, %v3763
    %vm3776 = vcmp.eq.f32.partialorder %v3775, 8.507059e+37
    %v3777 = vand.u32 %v3763, 2147483648
    %v3778 = vor.u32 1.1754944e-38, %v3777
    %v3779 = vsel %vm3776, %v3778, %v3774
    %v3780 = vmul.f32 1.0, %v3779
    %v3781 = vrcp.pop %v3764
    %v3782 = vmul.f32 %v3764, %v3781
    %v3783 = vsub.f32 1.0, %v3782
    %v3784 = vmul.f32 %v3781, %v3783
    %v3785 = vadd.f32 %v3781, %v3784
    %vm3786 = vweird.f32 %v3764
    %vm3787 = vweird.f32 %v3781
    %vm3788 = vmor %vm3786, %vm3787
    %v3789 = vsel %vm3788, %v3781, %v3785
    %v3790 = vand.u32 2147483647, %v3764
    %vm3791 = vcmp.eq.f32.partialorder %v3790, 8.507059e+37
    %v3792 = vand.u32 %v3764, 2147483648
    %v3793 = vor.u32 1.1754944e-38, %v3792
    %v3794 = vsel %vm3791, %v3793, %v3789
    %v3795 = vmul.f32 1.0, %v3794
    %v3796 = vrcp.pop %v3765
    %v3797 = vmul.f32 %v3765, %v3796
    %v3798 = vsub.f32 1.0, %v3797
    %v3799 = vmul.f32 %v3796, %v3798
    %v3800 = vadd.f32 %v3796, %v3799
    %vm3801 = vweird.f32 %v3765
    %vm3802 = vweird.f32 %v3796
    %vm3803 = vmor %vm3801, %vm3802
    %v3804 = vsel %vm3803, %v3796, %v3800
    %v3805 = vand.u32 2147483647, %v3765
    %vm3806 = vcmp.eq.f32.partialorder %v3805, 8.507059e+37
    %v3807 = vand.u32 %v3765, 2147483648
    %v3808 = vor.u32 1.1754944e-38, %v3807
    %v3809 = vsel %vm3806, %v3808, %v3804
    %v3810 = vmul.f32 1.0, %v3809
    %v3811 = vtanh.pop %v3753
    %v3812 = vmul.f32 %v3795, %v3690
    %v3813 = vmul.f32 %v3780, %v3811
    %v3814 = vadd.f32 %v3812, %v3813
    %v3815 = vtanh.pop %v3814
    %v3816 = vmul.f32 %v3810, %v3815
    %v3817 = vpack.c.bf16 %v3816, %v3816
    %v3818 = vld [vmem:[%s1269] sm:$0xff]
    %v3819 = vld [vmem:[%s1269 + $0x8] sm:$0xff]
    %v3820 = vld [vmem:[%s1269 + $0x10] sm:$0xff]
    %v3821 = vld [vmem:[%s1269 + $0x18] sm:$0xff]
    %3822 = vmatpush.bf16.msra.mxu0 %v3414
    %3823 = vmatpush.bf16.msra.mxu0 %v3410
    %3824 = vmatpush.bf16.msra.mxu0 %v3406
    %3825 = vmatpush.bf16.msra.mxu0 %v3402
    %3826 = vmatpush.bf16.msra.mxu0 %v3398
    %3827 = vmatpush.bf16.msra.mxu0 %v3394
    %3828 = vmatpush.bf16.msra.mxu0 %v3390
    %3829 = vmatpush.bf16.msra.mxu0 %v3386
    %3830 = vmatmul.bf16.gmra.mxu0 %v3817
    %v3831 = vpop.f32.mrf.mxu0
    %v3832 = vadd.f32 0.0, %v3831
    %v3833 = vpop.f32.mrf.mxu0
    %3834 = vdwg.mxu0
    %3835 = vmatpush.bf16.msra.mxu0 %v3415
    %3836 = vmatpush.bf16.msra.mxu0 %v3411
    %3837 = vmatpush.bf16.msra.mxu0 %v3407
    %3838 = vmatpush.bf16.msra.mxu0 %v3403
    %3839 = vmatpush.bf16.msra.mxu0 %v3399
    %3840 = vmatpush.bf16.msra.mxu0 %v3395
    %3841 = vmatpush.bf16.msra.mxu0 %v3391
    %3842 = vmatpush.bf16.msra.mxu0 %v3387
    %3843 = vmatmul.bf16.gmra.mxu0 %v3817
    %v3844 = vpop.f32.mrf.mxu0
    %v3845 = vadd.f32 0.0, %v3844
    %v3846 = vpop.f32.mrf.mxu0
    %3847 = vdwg.mxu0
    %3848 = vmatpush.bf16.msra.mxu0 %v3416
    %3849 = vmatpush.bf16.msra.mxu0 %v3412
    %3850 = vmatpush.bf16.msra.mxu0 %v3408
    %3851 = vmatpush.bf16.msra.mxu0 %v3404
    %3852 = vmatpush.bf16.msra.mxu0 %v3400
    %3853 = vmatpush.bf16.msra.mxu0 %v3396
    %3854 = vmatpush.bf16.msra.mxu0 %v3392
    %3855 = vmatpush.bf16.msra.mxu0 %v3388
    %3856 = vmatmul.bf16.gmra.mxu0 %v3817
    %v3857 = vpop.f32.mrf.mxu0
    %v3858 = vadd.f32 0.0, %v3857
    %v3859 = vpop.f32.mrf.mxu0
    %3860 = vdwg.mxu0
    %3861 = vmatpush.bf16.msra.mxu0 %v3417
    %3862 = vmatpush.bf16.msra.mxu0 %v3413
    %3863 = vmatpush.bf16.msra.mxu0 %v3409
    %3864 = vmatpush.bf16.msra.mxu0 %v3405
    %3865 = vmatpush.bf16.msra.mxu0 %v3401
    %3866 = vmatpush.bf16.msra.mxu0 %v3397
    %3867 = vmatpush.bf16.msra.mxu0 %v3393
    %3868 = vmatpush.bf16.msra.mxu0 %v3389
    %3869 = vmatmul.bf16.gmra.mxu0 %v3817
    %v3870 = vpop.f32.mrf.mxu0
    %v3871 = vadd.f32 0.0, %v3870
    %v3872 = vpop.f32.mrf.mxu0
    %3873 = vdwg.mxu0
    %v3874 = vadd.f32 %v3818, %v3832
    %v3875 = vadd.f32 %v3819, %v3845
    %v3876 = vadd.f32 %v3820, %v3858
    %v3877 = vadd.f32 %v3821, %v3871
    %v3878 = vxor.u32 %v3874, 2147483648
    %v3879 = vxor.u32 %v3875, 2147483648
    %v3880 = vxor.u32 %v3876, 2147483648
    %v3881 = vmul.f32 %v3878, 1.442695
    %v3882 = vpow.pop %v3881
    %v3883 = vmul.f32 %v3879, 1.442695
    %v3884 = vpow.pop %v3883
    %v3885 = vmul.f32 %v3880, 1.442695
    %v3886 = vpow.pop %v3885
    %v3887 = vadd.f32 %v3882, 1.0
    %v3888 = vadd.f32 %v3884, 1.0
    %v3889 = vadd.f32 %v3886, 1.0
    %v3890 = vrcp.pop %v3887
    %v3891 = vmul.f32 %v3887, %v3890
    %v3892 = vsub.f32 1.0, %v3891
    %v3893 = vmul.f32 %v3890, %v3892
    %v3894 = vadd.f32 %v3890, %v3893
    %vm3895 = vweird.f32 %v3887
    %vm3896 = vweird.f32 %v3890
    %vm3897 = vmor %vm3895, %vm3896
    %v3898 = vsel %vm3897, %v3890, %v3894
    %v3899 = vand.u32 2147483647, %v3887
    %vm3900 = vcmp.eq.f32.partialorder %v3899, 8.507059e+37
    %v3901 = vand.u32 %v3887, 2147483648
    %v3902 = vor.u32 1.1754944e-38, %v3901
    %v3903 = vsel %vm3900, %v3902, %v3898
    %v3904 = vmul.f32 1.0, %v3903
    %v3905 = vrcp.pop %v3888
    %v3906 = vmul.f32 %v3888, %v3905
    %v3907 = vsub.f32 1.0, %v3906
    %v3908 = vmul.f32 %v3905, %v3907
    %v3909 = vadd.f32 %v3905, %v3908
    %vm3910 = vweird.f32 %v3888
    %vm3911 = vweird.f32 %v3905
    %vm3912 = vmor %vm3910, %vm3911
    %v3913 = vsel %vm3912, %v3905, %v3909
    %v3914 = vand.u32 2147483647, %v3888
    %vm3915 = vcmp.eq.f32.partialorder %v3914, 8.507059e+37
    %v3916 = vand.u32 %v3888, 2147483648
    %v3917 = vor.u32 1.1754944e-38, %v3916
    %v3918 = vsel %vm3915, %v3917, %v3913
    %v3919 = vmul.f32 1.0, %v3918
    %v3920 = vrcp.pop %v3889
    %v3921 = vmul.f32 %v3889, %v3920
    %v3922 = vsub.f32 1.0, %v3921
    %v3923 = vmul.f32 %v3920, %v3922
    %v3924 = vadd.f32 %v3920, %v3923
    %vm3925 = vweird.f32 %v3889
    %vm3926 = vweird.f32 %v3920
    %vm3927 = vmor %vm3925, %vm3926
    %v3928 = vsel %vm3927, %v3920, %v3924
    %v3929 = vand.u32 2147483647, %v3889
    %vm3930 = vcmp.eq.f32.partialorder %v3929, 8.507059e+37
    %v3931 = vand.u32 %v3889, 2147483648
    %v3932 = vor.u32 1.1754944e-38, %v3931
    %v3933 = vsel %vm3930, %v3932, %v3928
    %v3934 = vmul.f32 1.0, %v3933
    %v3935 = vtanh.pop %v3877
    %v3936 = vmul.f32 %v3919, %v3814
    %v3937 = vmul.f32 %v3904, %v3935
    %v3938 = vadd.f32 %v3936, %v3937
    %v3939 = vtanh.pop %v3938
    %v3940 = vmul.f32 %v3934, %v3939
    %v3941 = vpack.c.bf16 %v3940, %v3940
    %v3942 = vld [vmem:[%s1590] sm:$0xff]
    %v3943 = vld [vmem:[%s1590 + $0x8] sm:$0xff]
    %v3944 = vld [vmem:[%s1590 + $0x10] sm:$0xff]
    %v3945 = vld [vmem:[%s1590 + $0x18] sm:$0xff]
    %3946 = vmatpush.bf16.msra.mxu0 %v3414
    %3947 = vmatpush.bf16.msra.mxu0 %v3410
    %3948 = vmatpush.bf16.msra.mxu0 %v3406
    %3949 = vmatpush.bf16.msra.mxu0 %v3402
    %3950 = vmatpush.bf16.msra.mxu0 %v3398
    %3951 = vmatpush.bf16.msra.mxu0 %v3394
    %3952 = vmatpush.bf16.msra.mxu0 %v3390
    %3953 = vmatpush.bf16.msra.mxu0 %v3386
    %3954 = vmatmul.bf16.gmra.mxu0 %v3941
    %v3955 = vpop.f32.mrf.mxu0
    %v3956 = vadd.f32 0.0, %v3955
    %v3957 = vpop.f32.mrf.mxu0
    %3958 = vdwg.mxu0
    %3959 = vmatpush.bf16.msra.mxu0 %v3415
    %3960 = vmatpush.bf16.msra.mxu0 %v3411
    %3961 = vmatpush.bf16.msra.mxu0 %v3407
    %3962 = vmatpush.bf16.msra.mxu0 %v3403
    %3963 = vmatpush.bf16.msra.mxu0 %v3399
    %3964 = vmatpush.bf16.msra.mxu0 %v3395
    %3965 = vmatpush.bf16.msra.mxu0 %v3391
    %3966 = vmatpush.bf16.msra.mxu0 %v3387
    %3967 = vmatmul.bf16.gmra.mxu0 %v3941
    %v3968 = vpop.f32.mrf.mxu0
    %v3969 = vadd.f32 0.0, %v3968
    %v3970 = vpop.f32.mrf.mxu0
    %3971 = vdwg.mxu0
    %3972 = vmatpush.bf16.msra.mxu0 %v3416
    %3973 = vmatpush.bf16.msra.mxu0 %v3412
    %3974 = vmatpush.bf16.msra.mxu0 %v3408
    %3975 = vmatpush.bf16.msra.mxu0 %v3404
    %3976 = vmatpush.bf16.msra.mxu0 %v3400
    %3977 = vmatpush.bf16.msra.mxu0 %v3396
    %3978 = vmatpush.bf16.msra.mxu0 %v3392
    %3979 = vmatpush.bf16.msra.mxu0 %v3388
    %3980 = vmatmul.bf16.gmra.mxu0 %v3941
    %v3981 = vpop.f32.mrf.mxu0
    %v3982 = vadd.f32 0.0, %v3981
    %v3983 = vpop.f32.mrf.mxu0
    %3984 = vdwg.mxu0
    %3985 = vmatpush.bf16.msra.mxu0 %v3417
    %3986 = vmatpush.bf16.msra.mxu0 %v3413
    %3987 = vmatpush.bf16.msra.mxu0 %v3409
    %3988 = vmatpush.bf16.msra.mxu0 %v3405
    %3989 = vmatpush.bf16.msra.mxu0 %v3401
    %3990 = vmatpush.bf16.msra.mxu0 %v3397
    %3991 = vmatpush.bf16.msra.mxu0 %v3393
    %3992 = vmatpush.bf16.msra.mxu0 %v3389
    %3993 = vmatmul.bf16.gmra.mxu0 %v3941
    %v3994 = vpop.f32.mrf.mxu0
    %v3995 = vadd.f32 0.0, %v3994
    %v3996 = vpop.f32.mrf.mxu0
    %3997 = vdwg.mxu0
    %v3998 = vadd.f32 %v3942, %v3956
    %v3999 = vadd.f32 %v3943, %v3969
    %v4000 = vadd.f32 %v3944, %v3982
    %v4001 = vadd.f32 %v3945, %v3995
    %v4002 = vxor.u32 %v3998, 2147483648
    %v4003 = vxor.u32 %v3999, 2147483648
    %v4004 = vxor.u32 %v4000, 2147483648
    %v4005 = vmul.f32 %v4002, 1.442695
    %v4006 = vpow.pop %v4005
    %v4007 = vmul.f32 %v4003, 1.442695
    %v4008 = vpow.pop %v4007
    %v4009 = vmul.f32 %v4004, 1.442695
    %v4010 = vpow.pop %v4009
    %v4011 = vadd.f32 %v4006, 1.0
    %v4012 = vadd.f32 %v4008, 1.0
    %v4013 = vadd.f32 %v4010, 1.0
    %v4014 = vrcp.pop %v4011
    %v4015 = vmul.f32 %v4011, %v4014
    %v4016 = vsub.f32 1.0, %v4015
    %v4017 = vmul.f32 %v4014, %v4016
    %v4018 = vadd.f32 %v4014, %v4017
    %vm4019 = vweird.f32 %v4011
    %vm4020 = vweird.f32 %v4014
    %vm4021 = vmor %vm4019, %vm4020
    %v4022 = vsel %vm4021, %v4014, %v4018
    %v4023 = vand.u32 2147483647, %v4011
    %vm4024 = vcmp.eq.f32.partialorder %v4023, 8.507059e+37
    %v4025 = vand.u32 %v4011, 2147483648
    %v4026 = vor.u32 1.1754944e-38, %v4025
    %v4027 = vsel %vm4024, %v4026, %v4022
    %v4028 = vmul.f32 1.0, %v4027
    %v4029 = vrcp.pop %v4012
    %v4030 = vmul.f32 %v4012, %v4029
    %v4031 = vsub.f32 1.0, %v4030
    %v4032 = vmul.f32 %v4029, %v4031
    %v4033 = vadd.f32 %v4029, %v4032
    %vm4034 = vweird.f32 %v4012
    %vm4035 = vweird.f32 %v4029
    %vm4036 = vmor %vm4034, %vm4035
    %v4037 = vsel %vm4036, %v4029, %v4033
    %v4038 = vand.u32 2147483647, %v4012
    %vm4039 = vcmp.eq.f32.partialorder %v4038, 8.507059e+37
    %v4040 = vand.u32 %v4012, 2147483648
    %v4041 = vor.u32 1.1754944e-38, %v4040
    %v4042 = vsel %vm4039, %v4041, %v4037
    %v4043 = vmul.f32 1.0, %v4042
    %v4044 = vrcp.pop %v4013
    %v4045 = vmul.f32 %v4013, %v4044
    %v4046 = vsub.f32 1.0, %v4045
    %v4047 = vmul.f32 %v4044, %v4046
    %v4048 = vadd.f32 %v4044, %v4047
    %vm4049 = vweird.f32 %v4013
    %vm4050 = vweird.f32 %v4044
    %vm4051 = vmor %vm4049, %vm4050
    %v4052 = vsel %vm4051, %v4044, %v4048
    %v4053 = vand.u32 2147483647, %v4013
    %vm4054 = vcmp.eq.f32.partialorder %v4053, 8.507059e+37
    %v4055 = vand.u32 %v4013, 2147483648
    %v4056 = vor.u32 1.1754944e-38, %v4055
    %v4057 = vsel %vm4054, %v4056, %v4052
    %v4058 = vmul.f32 1.0, %v4057
    %v4059 = vtanh.pop %v4001
    %v4060 = vmul.f32 %v4043, %v3938
    %v4061 = vmul.f32 %v4028, %v4059
    %v4062 = vadd.f32 %v4060, %v4061
    %v4063 = vtanh.pop %v4062
    %v4064 = vmul.f32 %v4058, %v4063
    %v4065 = vpack.c.bf16 %v4064, %v4064
    %v4066 = vld [vmem:[%s1911] sm:$0xff]
    %v4067 = vld [vmem:[%s1911 + $0x8] sm:$0xff]
    %v4068 = vld [vmem:[%s1911 + $0x10] sm:$0xff]
    %v4069 = vld [vmem:[%s1911 + $0x18] sm:$0xff]
    %4070 = vmatpush.bf16.msra.mxu0 %v3414
    %4071 = vmatpush.bf16.msra.mxu0 %v3410
    %4072 = vmatpush.bf16.msra.mxu0 %v3406
    %4073 = vmatpush.bf16.msra.mxu0 %v3402
    %4074 = vmatpush.bf16.msra.mxu0 %v3398
    %4075 = vmatpush.bf16.msra.mxu0 %v3394
    %4076 = vmatpush.bf16.msra.mxu0 %v3390
    %4077 = vmatpush.bf16.msra.mxu0 %v3386
    %4078 = vmatmul.bf16.gmra.mxu0 %v4065
    %v4079 = vpop.f32.mrf.mxu0
    %v4080 = vadd.f32 0.0, %v4079
    %v4081 = vpop.f32.mrf.mxu0
    %4082 = vdwg.mxu0
    %4083 = vmatpush.bf16.msra.mxu0 %v3415
    %4084 = vmatpush.bf16.msra.mxu0 %v3411
    %4085 = vmatpush.bf16.msra.mxu0 %v3407
    %4086 = vmatpush.bf16.msra.mxu0 %v3403
    %4087 = vmatpush.bf16.msra.mxu0 %v3399
    %4088 = vmatpush.bf16.msra.mxu0 %v3395
    %4089 = vmatpush.bf16.msra.mxu0 %v3391
    %4090 = vmatpush.bf16.msra.mxu0 %v3387
    %4091 = vmatmul.bf16.gmra.mxu0 %v4065
    %v4092 = vpop.f32.mrf.mxu0
    %v4093 = vadd.f32 0.0, %v4092
    %v4094 = vpop.f32.mrf.mxu0
    %4095 = vdwg.mxu0
    %4096 = vmatpush.bf16.msra.mxu0 %v3416
    %4097 = vmatpush.bf16.msra.mxu0 %v3412
    %4098 = vmatpush.bf16.msra.mxu0 %v3408
    %4099 = vmatpush.bf16.msra.mxu0 %v3404
    %4100 = vmatpush.bf16.msra.mxu0 %v3400
    %4101 = vmatpush.bf16.msra.mxu0 %v3396
    %4102 = vmatpush.bf16.msra.mxu0 %v3392
    %4103 = vmatpush.bf16.msra.mxu0 %v3388
    %4104 = vmatmul.bf16.gmra.mxu0 %v4065
    %v4105 = vpop.f32.mrf.mxu0
    %v4106 = vadd.f32 0.0, %v4105
    %v4107 = vpop.f32.mrf.mxu0
    %4108 = vdwg.mxu0
    %4109 = vmatpush.bf16.msra.mxu0 %v3417
    %4110 = vmatpush.bf16.msra.mxu0 %v3413
    %4111 = vmatpush.bf16.msra.mxu0 %v3409
    %4112 = vmatpush.bf16.msra.mxu0 %v3405
    %4113 = vmatpush.bf16.msra.mxu0 %v3401
    %4114 = vmatpush.bf16.msra.mxu0 %v3397
    %4115 = vmatpush.bf16.msra.mxu0 %v3393
    %4116 = vmatpush.bf16.msra.mxu0 %v3389
    %4117 = vmatmul.bf16.gmra.mxu0 %v4065
    %v4118 = vpop.f32.mrf.mxu0
    %v4119 = vadd.f32 0.0, %v4118
    %v4120 = vpop.f32.mrf.mxu0
    %4121 = vdwg.mxu0
    %v4122 = vadd.f32 %v4066, %v4080
    %v4123 = vadd.f32 %v4067, %v4093
    %v4124 = vadd.f32 %v4068, %v4106
    %v4125 = vadd.f32 %v4069, %v4119
    %v4126 = vxor.u32 %v4122, 2147483648
    %v4127 = vxor.u32 %v4123, 2147483648
    %v4128 = vxor.u32 %v4124, 2147483648
    %v4129 = vmul.f32 %v4126, 1.442695
    %v4130 = vpow.pop %v4129
    %v4131 = vmul.f32 %v4127, 1.442695
    %v4132 = vpow.pop %v4131
    %v4133 = vmul.f32 %v4128, 1.442695
    %v4134 = vpow.pop %v4133
    %v4135 = vadd.f32 %v4130, 1.0
    %v4136 = vadd.f32 %v4132, 1.0
    %v4137 = vadd.f32 %v4134, 1.0
    %v4138 = vrcp.pop %v4135
    %v4139 = vmul.f32 %v4135, %v4138
    %v4140 = vsub.f32 1.0, %v4139
    %v4141 = vmul.f32 %v4138, %v4140
    %v4142 = vadd.f32 %v4138, %v4141
    %vm4143 = vweird.f32 %v4135
    %vm4144 = vweird.f32 %v4138
    %vm4145 = vmor %vm4143, %vm4144
    %v4146 = vsel %vm4145, %v4138, %v4142
    %v4147 = vand.u32 2147483647, %v4135
    %vm4148 = vcmp.eq.f32.partialorder %v4147, 8.507059e+37
    %v4149 = vand.u32 %v4135, 2147483648
    %v4150 = vor.u32 1.1754944e-38, %v4149
    %v4151 = vsel %vm4148, %v4150, %v4146
    %v4152 = vmul.f32 1.0, %v4151
    %v4153 = vrcp.pop %v4136
    %v4154 = vmul.f32 %v4136, %v4153
    %v4155 = vsub.f32 1.0, %v4154
    %v4156 = vmul.f32 %v4153, %v4155
    %v4157 = vadd.f32 %v4153, %v4156
    %vm4158 = vweird.f32 %v4136
    %vm4159 = vweird.f32 %v4153
    %vm4160 = vmor %vm4158, %vm4159
    %v4161 = vsel %vm4160, %v4153, %v4157
    %v4162 = vand.u32 2147483647, %v4136
    %vm4163 = vcmp.eq.f32.partialorder %v4162, 8.507059e+37
    %v4164 = vand.u32 %v4136, 2147483648
    %v4165 = vor.u32 1.1754944e-38, %v4164
    %v4166 = vsel %vm4163, %v4165, %v4161
    %v4167 = vmul.f32 1.0, %v4166
    %v4168 = vrcp.pop %v4137
    %v4169 = vmul.f32 %v4137, %v4168
    %v4170 = vsub.f32 1.0, %v4169
    %v4171 = vmul.f32 %v4168, %v4170
    %v4172 = vadd.f32 %v4168, %v4171
    %vm4173 = vweird.f32 %v4137
    %vm4174 = vweird.f32 %v4168
    %vm4175 = vmor %vm4173, %vm4174
    %v4176 = vsel %vm4175, %v4168, %v4172
    %v4177 = vand.u32 2147483647, %v4137
    %vm4178 = vcmp.eq.f32.partialorder %v4177, 8.507059e+37
    %v4179 = vand.u32 %v4137, 2147483648
    %v4180 = vor.u32 1.1754944e-38, %v4179
    %v4181 = vsel %vm4178, %v4180, %v4176
    %v4182 = vmul.f32 1.0, %v4181
    %v4183 = vtanh.pop %v4125
    %v4184 = vmul.f32 %v4167, %v4062
    %v4185 = vmul.f32 %v4152, %v4183
    %v4186 = vadd.f32 %v4184, %v4185
    %v4187 = vtanh.pop %v4186
    %v4188 = vmul.f32 %v4182, %v4187
    %v4189 = vpack.c.bf16 %v4188, %v4188
    %v4190 = vld [vmem:[%s2232] sm:$0xff]
    %v4191 = vld [vmem:[%s2232 + $0x8] sm:$0xff]
    %v4192 = vld [vmem:[%s2232 + $0x10] sm:$0xff]
    %v4193 = vld [vmem:[%s2232 + $0x18] sm:$0xff]
    %4194 = vmatpush.bf16.msra.mxu0 %v3414
    %4195 = vmatpush.bf16.msra.mxu0 %v3410
    %4196 = vmatpush.bf16.msra.mxu0 %v3406
    %4197 = vmatpush.bf16.msra.mxu0 %v3402
    %4198 = vmatpush.bf16.msra.mxu0 %v3398
    %4199 = vmatpush.bf16.msra.mxu0 %v3394
    %4200 = vmatpush.bf16.msra.mxu0 %v3390
    %4201 = vmatpush.bf16.msra.mxu0 %v3386
    %4202 = vmatmul.bf16.gmra.mxu0 %v4189
    %v4203 = vpop.f32.mrf.mxu0
    %v4204 = vadd.f32 0.0, %v4203
    %v4205 = vpop.f32.mrf.mxu0
    %4206 = vdwg.mxu0
    %4207 = vmatpush.bf16.msra.mxu0 %v3415
    %4208 = vmatpush.bf16.msra.mxu0 %v3411
    %4209 = vmatpush.bf16.msra.mxu0 %v3407
    %4210 = vmatpush.bf16.msra.mxu0 %v3403
    %4211 = vmatpush.bf16.msra.mxu0 %v3399
    %4212 = vmatpush.bf16.msra.mxu0 %v3395
    %4213 = vmatpush.bf16.msra.mxu0 %v3391
    %4214 = vmatpush.bf16.msra.mxu0 %v3387
    %4215 = vmatmul.bf16.gmra.mxu0 %v4189
    %v4216 = vpop.f32.mrf.mxu0
    %v4217 = vadd.f32 0.0, %v4216
    %v4218 = vpop.f32.mrf.mxu0
    %4219 = vdwg.mxu0
    %4220 = vmatpush.bf16.msra.mxu0 %v3416
    %4221 = vmatpush.bf16.msra.mxu0 %v3412
    %4222 = vmatpush.bf16.msra.mxu0 %v3408
    %4223 = vmatpush.bf16.msra.mxu0 %v3404
    %4224 = vmatpush.bf16.msra.mxu0 %v3400
    %4225 = vmatpush.bf16.msra.mxu0 %v3396
    %4226 = vmatpush.bf16.msra.mxu0 %v3392
    %4227 = vmatpush.bf16.msra.mxu0 %v3388
    %4228 = vmatmul.bf16.gmra.mxu0 %v4189
    %v4229 = vpop.f32.mrf.mxu0
    %v4230 = vadd.f32 0.0, %v4229
    %v4231 = vpop.f32.mrf.mxu0
    %4232 = vdwg.mxu0
    %4233 = vmatpush.bf16.msra.mxu0 %v3417
    %4234 = vmatpush.bf16.msra.mxu0 %v3413
    %4235 = vmatpush.bf16.msra.mxu0 %v3409
    %4236 = vmatpush.bf16.msra.mxu0 %v3405
    %4237 = vmatpush.bf16.msra.mxu0 %v3401
    %4238 = vmatpush.bf16.msra.mxu0 %v3397
    %4239 = vmatpush.bf16.msra.mxu0 %v3393
    %4240 = vmatpush.bf16.msra.mxu0 %v3389
    %4241 = vmatmul.bf16.gmra.mxu0 %v4189
    %v4242 = vpop.f32.mrf.mxu0
    %v4243 = vadd.f32 0.0, %v4242
    %v4244 = vpop.f32.mrf.mxu0
    %4245 = vdwg.mxu0
    %v4246 = vadd.f32 %v4190, %v4204
    %v4247 = vadd.f32 %v4191, %v4217
    %v4248 = vadd.f32 %v4192, %v4230
    %v4249 = vadd.f32 %v4193, %v4243
    %v4250 = vxor.u32 %v4246, 2147483648
    %v4251 = vxor.u32 %v4247, 2147483648
    %v4252 = vxor.u32 %v4248, 2147483648
    %v4253 = vmul.f32 %v4250, 1.442695
    %v4254 = vpow.pop %v4253
    %v4255 = vmul.f32 %v4251, 1.442695
    %v4256 = vpow.pop %v4255
    %v4257 = vmul.f32 %v4252, 1.442695
    %v4258 = vpow.pop %v4257
    %v4259 = vadd.f32 %v4254, 1.0
    %v4260 = vadd.f32 %v4256, 1.0
    %v4261 = vadd.f32 %v4258, 1.0
    %v4262 = vrcp.pop %v4259
    %v4263 = vmul.f32 %v4259, %v4262
    %v4264 = vsub.f32 1.0, %v4263
    %v4265 = vmul.f32 %v4262, %v4264
    %v4266 = vadd.f32 %v4262, %v4265
    %vm4267 = vweird.f32 %v4259
    %vm4268 = vweird.f32 %v4262
    %vm4269 = vmor %vm4267, %vm4268
    %v4270 = vsel %vm4269, %v4262, %v4266
    %v4271 = vand.u32 2147483647, %v4259
    %vm4272 = vcmp.eq.f32.partialorder %v4271, 8.507059e+37
    %v4273 = vand.u32 %v4259, 2147483648
    %v4274 = vor.u32 1.1754944e-38, %v4273
    %v4275 = vsel %vm4272, %v4274, %v4270
    %v4276 = vmul.f32 1.0, %v4275
    %v4277 = vrcp.pop %v4260
    %v4278 = vmul.f32 %v4260, %v4277
    %v4279 = vsub.f32 1.0, %v4278
    %v4280 = vmul.f32 %v4277, %v4279
    %v4281 = vadd.f32 %v4277, %v4280
    %vm4282 = vweird.f32 %v4260
    %vm4283 = vweird.f32 %v4277
    %vm4284 = vmor %vm4282, %vm4283
    %v4285 = vsel %vm4284, %v4277, %v4281
    %v4286 = vand.u32 2147483647, %v4260
    %vm4287 = vcmp.eq.f32.partialorder %v4286, 8.507059e+37
    %v4288 = vand.u32 %v4260, 2147483648
    %v4289 = vor.u32 1.1754944e-38, %v4288
    %v4290 = vsel %vm4287, %v4289, %v4285
    %v4291 = vmul.f32 1.0, %v4290
    %v4292 = vrcp.pop %v4261
    %v4293 = vmul.f32 %v4261, %v4292
    %v4294 = vsub.f32 1.0, %v4293
    %v4295 = vmul.f32 %v4292, %v4294
    %v4296 = vadd.f32 %v4292, %v4295
    %vm4297 = vweird.f32 %v4261
    %vm4298 = vweird.f32 %v4292
    %vm4299 = vmor %vm4297, %vm4298
    %v4300 = vsel %vm4299, %v4292, %v4296
    %v4301 = vand.u32 2147483647, %v4261
    %vm4302 = vcmp.eq.f32.partialorder %v4301, 8.507059e+37
    %v4303 = vand.u32 %v4261, 2147483648
    %v4304 = vor.u32 1.1754944e-38, %v4303
    %v4305 = vsel %vm4302, %v4304, %v4300
    %v4306 = vmul.f32 1.0, %v4305
    %v4307 = vtanh.pop %v4249
    %v4308 = vmul.f32 %v4291, %v4186
    %v4309 = vmul.f32 %v4276, %v4307
    %v4310 = vadd.f32 %v4308, %v4309
    %v4311 = vtanh.pop %v4310
    %v4312 = vmul.f32 %v4306, %v4311
    %v4313 = vpack.c.bf16 %v4312, %v4312
    %v4314 = vld [vmem:[%s2553] sm:$0xff]
    %v4315 = vld [vmem:[%s2553 + $0x8] sm:$0xff]
    %v4316 = vld [vmem:[%s2553 + $0x10] sm:$0xff]
    %v4317 = vld [vmem:[%s2553 + $0x18] sm:$0xff]
    %4318 = vmatpush.bf16.msra.mxu0 %v3414
    %4319 = vmatpush.bf16.msra.mxu0 %v3410
    %4320 = vmatpush.bf16.msra.mxu0 %v3406
    %4321 = vmatpush.bf16.msra.mxu0 %v3402
    %4322 = vmatpush.bf16.msra.mxu0 %v3398
    %4323 = vmatpush.bf16.msra.mxu0 %v3394
    %4324 = vmatpush.bf16.msra.mxu0 %v3390
    %4325 = vmatpush.bf16.msra.mxu0 %v3386
    %4326 = vmatmul.bf16.gmra.mxu0 %v4313
    %v4327 = vpop.f32.mrf.mxu0
    %v4328 = vadd.f32 0.0, %v4327
    %v4329 = vpop.f32.mrf.mxu0
    %4330 = vdwg.mxu0
    %4331 = vmatpush.bf16.msra.mxu0 %v3415
    %4332 = vmatpush.bf16.msra.mxu0 %v3411
    %4333 = vmatpush.bf16.msra.mxu0 %v3407
    %4334 = vmatpush.bf16.msra.mxu0 %v3403
    %4335 = vmatpush.bf16.msra.mxu0 %v3399
    %4336 = vmatpush.bf16.msra.mxu0 %v3395
    %4337 = vmatpush.bf16.msra.mxu0 %v3391
    %4338 = vmatpush.bf16.msra.mxu0 %v3387
    %4339 = vmatmul.bf16.gmra.mxu0 %v4313
    %v4340 = vpop.f32.mrf.mxu0
    %v4341 = vadd.f32 0.0, %v4340
    %v4342 = vpop.f32.mrf.mxu0
    %4343 = vdwg.mxu0
    %4344 = vmatpush.bf16.msra.mxu0 %v3416
    %4345 = vmatpush.bf16.msra.mxu0 %v3412
    %4346 = vmatpush.bf16.msra.mxu0 %v3408
    %4347 = vmatpush.bf16.msra.mxu0 %v3404
    %4348 = vmatpush.bf16.msra.mxu0 %v3400
    %4349 = vmatpush.bf16.msra.mxu0 %v3396
    %4350 = vmatpush.bf16.msra.mxu0 %v3392
    %4351 = vmatpush.bf16.msra.mxu0 %v3388
    %4352 = vmatmul.bf16.gmra.mxu0 %v4313
    %v4353 = vpop.f32.mrf.mxu0
    %v4354 = vadd.f32 0.0, %v4353
    %v4355 = vpop.f32.mrf.mxu0
    %4356 = vdwg.mxu0
    %4357 = vmatpush.bf16.msra.mxu0 %v3417
    %4358 = vmatpush.bf16.msra.mxu0 %v3413
    %4359 = vmatpush.bf16.msra.mxu0 %v3409
    %4360 = vmatpush.bf16.msra.mxu0 %v3405
    %4361 = vmatpush.bf16.msra.mxu0 %v3401
    %4362 = vmatpush.bf16.msra.mxu0 %v3397
    %4363 = vmatpush.bf16.msra.mxu0 %v3393
    %4364 = vmatpush.bf16.msra.mxu0 %v3389
    %4365 = vmatmul.bf16.gmra.mxu0 %v4313
    %v4366 = vpop.f32.mrf.mxu0
    %v4367 = vadd.f32 0.0, %v4366
    %v4368 = vpop.f32.mrf.mxu0
    %4369 = vdwg.mxu0
    %v4370 = vadd.f32 %v4314, %v4328
    %v4371 = vadd.f32 %v4315, %v4341
    %v4372 = vadd.f32 %v4316, %v4354
    %v4373 = vadd.f32 %v4317, %v4367
    %v4374 = vxor.u32 %v4370, 2147483648
    %v4375 = vxor.u32 %v4371, 2147483648
    %v4376 = vxor.u32 %v4372, 2147483648
    %v4377 = vmul.f32 %v4374, 1.442695
    %v4378 = vpow.pop %v4377
    %v4379 = vmul.f32 %v4375, 1.442695
    %v4380 = vpow.pop %v4379
    %v4381 = vmul.f32 %v4376, 1.442695
    %v4382 = vpow.pop %v4381
    %v4383 = vadd.f32 %v4378, 1.0
    %v4384 = vadd.f32 %v4380, 1.0
    %v4385 = vadd.f32 %v4382, 1.0
    %v4386 = vrcp.pop %v4383
    %v4387 = vmul.f32 %v4383, %v4386
    %v4388 = vsub.f32 1.0, %v4387
    %v4389 = vmul.f32 %v4386, %v4388
    %v4390 = vadd.f32 %v4386, %v4389
    %vm4391 = vweird.f32 %v4383
    %vm4392 = vweird.f32 %v4386
    %vm4393 = vmor %vm4391, %vm4392
    %v4394 = vsel %vm4393, %v4386, %v4390
    %v4395 = vand.u32 2147483647, %v4383
    %vm4396 = vcmp.eq.f32.partialorder %v4395, 8.507059e+37
    %v4397 = vand.u32 %v4383, 2147483648
    %v4398 = vor.u32 1.1754944e-38, %v4397
    %v4399 = vsel %vm4396, %v4398, %v4394
    %v4400 = vmul.f32 1.0, %v4399
    %v4401 = vrcp.pop %v4384
    %v4402 = vmul.f32 %v4384, %v4401
    %v4403 = vsub.f32 1.0, %v4402
    %v4404 = vmul.f32 %v4401, %v4403
    %v4405 = vadd.f32 %v4401, %v4404
    %vm4406 = vweird.f32 %v4384
    %vm4407 = vweird.f32 %v4401
    %vm4408 = vmor %vm4406, %vm4407
    %v4409 = vsel %vm4408, %v4401, %v4405
    %v4410 = vand.u32 2147483647, %v4384
    %vm4411 = vcmp.eq.f32.partialorder %v4410, 8.507059e+37
    %v4412 = vand.u32 %v4384, 2147483648
    %v4413 = vor.u32 1.1754944e-38, %v4412
    %v4414 = vsel %vm4411, %v4413, %v4409
    %v4415 = vmul.f32 1.0, %v4414
    %v4416 = vrcp.pop %v4385
    %v4417 = vmul.f32 %v4385, %v4416
    %v4418 = vsub.f32 1.0, %v4417
    %v4419 = vmul.f32 %v4416, %v4418
    %v4420 = vadd.f32 %v4416, %v4419
    %vm4421 = vweird.f32 %v4385
    %vm4422 = vweird.f32 %v4416
    %vm4423 = vmor %vm4421, %vm4422
    %v4424 = vsel %vm4423, %v4416, %v4420
    %v4425 = vand.u32 2147483647, %v4385
    %vm4426 = vcmp.eq.f32.partialorder %v4425, 8.507059e+37
    %v4427 = vand.u32 %v4385, 2147483648
    %v4428 = vor.u32 1.1754944e-38, %v4427
    %v4429 = vsel %vm4426, %v4428, %v4424
    %v4430 = vmul.f32 1.0, %v4429
    %v4431 = vtanh.pop %v4373
    %v4432 = vmul.f32 %v4415, %v4310
    %v4433 = vmul.f32 %v4400, %v4431
    %v4434 = vadd.f32 %v4432, %v4433
    %v4435 = vtanh.pop %v4434
    %v4436 = vmul.f32 %v4430, %v4435
    %v4437 = vpack.c.bf16 %v4436, %v4436
    %v4438 = vunpack.c.l.bf16 %v4437
    %v4439 = vld [vmem:[%s7] sm:$0x1]
    %v4441 = vperm.slane %v4439, 0
    %v4443 = vmul.f32 %v4438, %v4441
    %4444 = vadd.xlane.f32.xlu0 %v4443
    %v4445 = vpop.xlane.xlu0 %4444
    %v4446 = vld [vmem:[#allocation4] sm:$0x1]
    %v4448 = vperm.slane %v4446, 0
    %v4450 = vadd.f32 %v4445, %v4448
    %v4451 = vxor.u32 %v4450, 2147483648
    %v4452 = vmul.f32 %v4451, 1.442695
    %v4453 = vpow.pop %v4452
    %v4454 = vadd.f32 %v4453, 1.0
    %v4455 = vrcp.pop %v4454
    %v4456 = vmul.f32 %v4454, %v4455
    %v4457 = vsub.f32 1.0, %v4456
    %v4458 = vmul.f32 %v4455, %v4457
    %v4459 = vadd.f32 %v4455, %v4458
    %vm4460 = vweird.f32 %v4454
    %vm4461 = vweird.f32 %v4455
    %vm4462 = vmor %vm4460, %vm4461
    %v4463 = vsel %vm4462, %v4455, %v4459
    %v4464 = vand.u32 2147483647, %v4454
    %vm4465 = vcmp.eq.f32.partialorder %v4464, 8.507059e+37
    %v4466 = vand.u32 %v4454, 2147483648
    %v4467 = vor.u32 1.1754944e-38, %v4466
    %v4468 = vsel %vm4465, %v4467, %v4463
    %v4469 = vmul.f32 1.0, %v4468
    %vm4470 = vcmask 7168
    %4471 = vst.msk [vmem:[%s9] sm:$0xff] %vm4470, %v4469
    // Predicated region
    $region50: #{tpu_custom_call.1} parent=1 // pred_check
      _
    $region51: #{tpu_custom_call.1} parent=1 // pred_check_branch
      %4473 = sbr.rel (0) target = $region53
    $region52: #{tpu_custom_call.1} parent=1 // pred_region
      _
    $region53: #{tpu_custom_call.1} parent=1 // pred_fallthru
      _
    // Predicated region
    $region54: #{tpu_custom_call.1} parent=1 // pred_check
      _
    $region55: #{tpu_custom_call.1} parent=1 // pred_check_branch
      %4475 = sbr.rel (0) target = $region57
    $region56: #{tpu_custom_call.1} parent=1 // pred_region
      _
    $region57: #{tpu_custom_call.1} parent=1 // pred_fallthru
      _
    %4476 = vsyncpa [#allocation6], 1
    %4477 = vsyncpa [#allocation8], 1

</llo_original>
